<compile_context>
chip_gen: v6e
topology: v6e:2x2x1
jax: 0.10.0
libtpu: 0.0.40
codegen_flags: <defaults>
</compile_context>

<pallas_src>
import functools

import numpy as np
import jax
import jax.numpy as jnp
from jax.experimental import pallas as pl
from jax.experimental.pallas import tpu as pltpu


_STRIDES = (2, 1, 2, 1, 2)
_CIN_PAD = 8   # pad the 3 input channels to 8 (zero weights / zero activations)


def _layer_geometry(img, c_hid, c_in_eff=_CIN_PAD):
    chans = [(c_in_eff, c_hid), (c_hid, c_hid), (c_hid, 2 * c_hid),
             (2 * c_hid, 2 * c_hid), (2 * c_hid, 2 * c_hid)]
    geoms = []
    h = w = img
    for (ci, co), s in zip(chans, _STRIDES):
        geoms.append((h, w, ci, co, s))
        h = (h - 1) // s + 1
        w = (w - 1) // s + 1
    return geoms


def _subsample_matrix(H, W, stride):
    """Exact 0/1 selection matrix (H*W, Ho*Wo) implementing stride-s subsample."""
    ho_n = (H - 1) // stride + 1
    wo_n = (W - 1) // stride + 1
    S = np.zeros((H * W, ho_n * wo_n), np.float32)
    for ho in range(ho_n):
        for wo in range(wo_n):
            S[(stride * ho) * W + stride * wo, ho * wo_n + wo] = 1.0
    return S


# ----------------------------------------------------------------------------
# The single fused encoder kernel (one image per grid step)
# ----------------------------------------------------------------------------
def _encoder_kernel(*refs, geoms):
    refs = list(refs)
    n_layers = len(geoms)

    pos = 0
    x_ref = refs[pos]; pos += 1
    layer_refs = []
    for (_, _, _, _, s) in geoms:
        w_ref, b_ref = refs[pos], refs[pos + 1]; pos += 2
        sub_ref = None
        if s > 1:
            sub_ref = refs[pos]; pos += 1
        layer_refs.append((w_ref, b_ref, sub_ref))
    lin_w_ref, lin_b_ref = refs[pos], refs[pos + 1]; pos += 2
    o_ref = refs[pos]; pos += 1
    scratch = refs[pos:]
    pad_scratch = scratch[:n_layers - 1]    # padded activations for layers 1..4
    slab_scratch = scratch[n_layers - 1:]   # (9*ci, hw) tap slabs, one per layer

    inv_sqrt2 = np.float32(1.0 / np.sqrt(2.0))

    act = None
    for li, ((H, W, ci, co, s), (w_ref, b_ref, sub_ref)) in enumerate(
            zip(geoms, layer_refs)):
        hw = H * W
        halo = W + 1
        slab_ref = slab_scratch[li]

        if li == 0:
            # input arrives already zero-padded: (ci, hw + 2*halo) bf16
            xp = x_ref[0]
        else:
            pad_ref = pad_scratch[li - 1]
            pad_ref[...] = jnp.zeros_like(pad_ref)      # halo lanes <- 0
            pad_ref[:, halo:halo + hw] = act            # data region
            xp = pad_ref[...]

        # Horizontal zero-padding of the 3x3 conv = boundary masks on the
        # kx==0 / kx==2 taps; vertical padding = the zero halo lanes.
        # TODO(synk): on v5e these masks could be tiny resident inputs instead
        # of per-step iota+compare; negligible at these sizes.
        col = jax.lax.broadcasted_iota(jnp.int32, (ci, hw), 1)
        if (W & (W - 1)) == 0:                          # W is a power of two here
            wpos = jnp.bitwise_and(col, W - 1)
        else:
            wpos = col % W
        keep_l = wpos >= 1
        keep_r = wpos <= W - 2

        # Pack the 9 shifted / masked taps into one (9*ci, hw) slab -> a single
        # MXU matmul with contraction depth 9*ci.  All stores are aligned
        # >=8-sublane blocks (ci is 8/32/64).
        for ky in range(3):
            for kx in range(3):
                t = 3 * ky + kx
                start = ky * W + kx
                slab = xp[:, start:start + hw]
                if kx == 0:
                    slab = jnp.where(keep_l, slab, jnp.zeros_like(slab))
                elif kx == 2:
                    slab = jnp.where(keep_r, slab, jnp.zeros_like(slab))
                slab_ref[t * ci:(t + 1) * ci, :] = slab

        acc = jnp.dot(w_ref[...], slab_ref[...],
                      preferred_element_type=jnp.float32)        # (co, hw) f32
        if sub_ref is not None:
            # stride-2: exact 0/1 selection, run as a bf16 MXU pass
            acc = jnp.dot(acc.astype(jnp.bfloat16), sub_ref[...],
                          preferred_element_type=jnp.float32)    # (co, n_out)
        y = acc + b_ref[...]
        # exact (erf) GELU == torch.nn.GELU() default
        y = 0.5 * y * (1.0 + jax.lax.erf(y * inv_sqrt2))
        act = y.astype(jnp.bfloat16)                              # (co, n_out)

    # Fused final Linear.  NCHW flatten index = c*hw_last + p, realized with
    # hw_last tiny matvecs against the prepacked (hw_last, latent, cout) weight
    # (no in-kernel reshape / transpose needed).
    hw_last = act.shape[-1]
    out = lin_b_ref[...]                                          # (latent, 1) f32
    for p in range(hw_last):
        out = out + jnp.dot(lin_w_ref[p], act[:, p:p + 1],
                            preferred_element_type=jnp.float32)
    o_ref[0] = out


# ----------------------------------------------------------------------------
# One-time parameter repacking (PyTorch layout -> kernel-ready layout)
# ----------------------------------------------------------------------------
def prepare_params(params, *, c_hid, img):
    geoms = _layer_geometry(img, c_hid)
    prepped = {}
    for i, (H, W, ci, co, s) in enumerate(geoms):
        w = params[f"conv{i}_w"]                          # (co, ci_raw, 3, 3)
        ci_raw = w.shape[1]
        wt = jnp.transpose(w, (0, 2, 3, 1))               # (co, ky, kx, ci_raw)
        if ci_raw < ci:                                   # layer 0: pad cin 3 -> 8
            wt = jnp.pad(wt, ((0, 0), (0, 0), (0, 0), (0, ci - ci_raw)))
        # merged-tap layout: column index = (3*ky + kx)*ci + c
        prepped[f"conv{i}_w"] = wt.reshape(co, 9 * ci).astype(jnp.bfloat16)
        prepped[f"conv{i}_b"] = params[f"conv{i}_b"].reshape(-1, 1).astype(jnp.float32)
        if s > 1:
            prepped[f"conv{i}_sub"] = jnp.asarray(
                _subsample_matrix(H, W, s), jnp.bfloat16)  # exact 0/1 in bf16
    # final linear: flatten order is NCHW -> in_feature index = c*hw_last + p
    H_l, W_l, _, co_l, s_l = geoms[-1]
    hw_last = ((H_l - 1) // s_l + 1) * ((W_l - 1) // s_l + 1)
    latent = params["lin_w"].shape[0]
    lw = params["lin_w"].reshape(latent, co_l, hw_last)    # [l, c, p]
    prepped["lin_w"] = jnp.transpose(lw, (2, 0, 1)).astype(jnp.bfloat16)  # (p, l, c)
    prepped["lin_b"] = params["lin_b"].reshape(-1, 1).astype(jnp.float32)
    return prepped


# ----------------------------------------------------------------------------
# Forward pass (single pallas_call)
# ----------------------------------------------------------------------------
def encoder_forward(prepped, x_nchw, *, c_hid, img):
    B, c_in = x_nchw.shape[:2]
    geoms = _layer_geometry(img, c_hid)
    hw0 = img * img
    halo0 = img + 1
    hwp0 = hw0 + 2 * halo0

    # NCHW -> (B, C, H*W) (PyTorch flatten order), pad channels to 8, then
    # zero-pad (W+1) flattened pixels each side = the conv zero padding.
    x = x_nchw.reshape(B, c_in, hw0)
    x = jnp.pad(x, ((0, 0), (0, _CIN_PAD - c_in), (0, 0)))
    x = jnp.pad(x, ((0, 0), (0, 0), (halo0, halo0))).astype(jnp.bfloat16)

    hw_last, latent, co_last = prepped["lin_w"].shape

    args = [x]
    in_specs = [pl.BlockSpec((1, _CIN_PAD, hwp0), lambda b: (b, 0, 0))]
    for i, (H, W, ci, co, s) in enumerate(geoms):
        w = prepped[f"conv{i}_w"]
        bia = prepped[f"conv{i}_b"]
        args += [w, bia]
        in_specs += [pl.BlockSpec(w.shape, lambda b: (0, 0)),     # resident weights
                     pl.BlockSpec(bia.shape, lambda b: (0, 0))]   # resident bias
        if s > 1:
            sub = prepped[f"conv{i}_sub"]
            args.append(sub)
            in_specs.append(pl.BlockSpec(sub.shape, lambda b: (0, 0)))
    args += [prepped["lin_w"], prepped["lin_b"]]
    in_specs += [pl.BlockSpec(prepped["lin_w"].shape, lambda b: (0, 0, 0)),
                 pl.BlockSpec(prepped["lin_b"].shape, lambda b: (0, 0))]

    # scratch: padded activations for layers 1..4, tap slabs for layers 0..4
    scratch = []
    for (H, W, ci, co, s) in geoms[1:]:
        scratch.append(pltpu.VMEM((ci, H * W + 2 * (W + 1)), jnp.bfloat16))
    for (H, W, ci, co, s) in geoms:
        scratch.append(pltpu.VMEM((9 * ci, H * W), jnp.bfloat16))

    flops = 0
    trans = 0
    for (H, W, ci, co, s) in geoms:
        hw = H * W
        n_out = ((H - 1) // s + 1) * ((W - 1) // s + 1)
        flops += 2 * 9 * ci * co * hw
        if s > 1:
            flops += 2 * co * hw * n_out
        trans += co * n_out
    flops += 2 * co_last * hw_last * latent
    flops *= B
    trans *= B
    bytes_accessed = int(x.size) * 2 + B * latent * 4 + sum(
        int(a.size) * a.dtype.itemsize for a in args[1:])

    kern = functools.partial(_encoder_kernel, geoms=tuple(geoms))
    out = pl.pallas_call(
        kern,
        out_shape=jax.ShapeDtypeStruct((B, latent, 1), jnp.float32),
        grid=(B,),
        in_specs=in_specs,
        out_specs=pl.BlockSpec((1, latent, 1), lambda b: (b, 0, 0)),
        scratch_shapes=scratch,
        compiler_params=pltpu.CompilerParams(
            dimension_semantics=("parallel",),
            vmem_limit_bytes=32 * 1024 * 1024),
        cost_estimate=pl.CostEstimate(flops=int(flops),
                                      transcendentals=int(trans),
                                      bytes_accessed=int(bytes_accessed)),
    )(*args)
    return out.reshape(B, latent)


# ----------------------------------------------------------------------------
# Deterministic parameter init + pure-JAX reference for verification
# ----------------------------------------------------------------------------
def init_params(key, c_in, c_hid, latent, img):
    params = {}
    chans = [(c_in, c_hid), (c_hid, c_hid), (c_hid, 2 * c_hid),
             (2 * c_hid, 2 * c_hid), (2 * c_hid, 2 * c_hid)]
    for i, (ci, co) in enumerate(chans):
        key, k1, k2 = jax.random.split(key, 3)
        params[f"conv{i}_w"] = (jax.random.normal(k1, (co, ci, 3, 3), jnp.float32)
                                / np.sqrt(ci * 9))
        params[f"conv{i}_b"] = jax.random.normal(k2, (co,), jnp.float32) * 0.01
    key, k1, k2 = jax.random.split(key, 3)
    lin_in = img * img
    params["lin_w"] = (jax.random.normal(k1, (latent, lin_in), jnp.float32)
                       / np.sqrt(lin_in))
    params["lin_b"] = jax.random.normal(k2, (latent,), jnp.float32) * 0.01
    return params


def reference_forward(params, x_nchw):
    x = x_nchw
    for i, s in enumerate(_STRIDES):
        w, b = params[f"conv{i}_w"], params[f"conv{i}_b"]
        x = jax.lax.conv_general_dilated(
            x, w, (s, s), ((1, 1), (1, 1)),
            dimension_numbers=("NCHW", "OIHW", "NCHW"))
        x = x + b.reshape(1, -1, 1, 1)
        x = jax.nn.gelu(x, approximate=False)
    x = x.reshape(x.shape[0], -1)
    return x @ params["lin_w"].T + params["lin_b"]


if __name__ == "__main__":
    B, C_IN, IMG = 2, 3, 16
    C_HID, LATENT = 32, 32   # c_hid=32 required for the module's Linear shapes

    key = jax.random.PRNGKey(0)
    key, pkey, xkey = jax.random.split(key, 3)
    params = init_params(pkey, C_IN, C_HID, LATENT, IMG)
    x = jax.random.normal(xkey, (B, C_IN, IMG, IMG), jnp.float32)

    prepped = prepare_params(params, c_hid=C_HID, img=IMG)
    fwd = jax.jit(functools.partial(encoder_forward, c_hid=C_HID, img=IMG))
    out = jax.block_until_ready(fwd(prepped, x))
    assert out.shape == (B, LATENT)

    ref = reference_forward(params, x)
    # bf16 weights/activations (f32 accumulation) through 6 layers -> ~1%
    # end-to-end deviation from the f32 reference; tolerance set accordingly.
    np.testing.assert_allclose(np.asarray(out), np.asarray(ref),
                               rtol=5e-2, atol=5e-2)
    print("KERNEL_OK")
</pallas_src>

<mosaic_0001>
module attributes {stable_mosaic.version = 11 : i64} {
  func.func @_encoder_kernel(%arg0: i32, %arg1: memref<1x8x290xbf16, #tpu.memory_space<vmem>>, %arg2: memref<32x72xbf16, #tpu.memory_space<vmem>>, %arg3: memref<32x1xf32, #tpu.memory_space<vmem>>, %arg4: memref<256x64xbf16, #tpu.memory_space<vmem>>, %arg5: memref<32x288xbf16, #tpu.memory_space<vmem>>, %arg6: memref<32x1xf32, #tpu.memory_space<vmem>>, %arg7: memref<64x288xbf16, #tpu.memory_space<vmem>>, %arg8: memref<64x1xf32, #tpu.memory_space<vmem>>, %arg9: memref<64x16xbf16, #tpu.memory_space<vmem>>, %arg10: memref<64x576xbf16, #tpu.memory_space<vmem>>, %arg11: memref<64x1xf32, #tpu.memory_space<vmem>>, %arg12: memref<64x576xbf16, #tpu.memory_space<vmem>>, %arg13: memref<64x1xf32, #tpu.memory_space<vmem>>, %arg14: memref<16x4xbf16, #tpu.memory_space<vmem>>, %arg15: memref<4x32x64xbf16, #tpu.memory_space<vmem>>, %arg16: memref<32x1xf32, #tpu.memory_space<vmem>>, %arg17: memref<1x32x1xf32, #tpu.memory_space<vmem>>, %arg18: memref<32x82xbf16, #tpu.memory_space<vmem>>, %arg19: memref<32x82xbf16, #tpu.memory_space<vmem>>, %arg20: memref<64x26xbf16, #tpu.memory_space<vmem>>, %arg21: memref<64x26xbf16, #tpu.memory_space<vmem>>, %arg22: memref<72x256xbf16, #tpu.memory_space<vmem>>, %arg23: memref<288x64xbf16, #tpu.memory_space<vmem>>, %arg24: memref<288x64xbf16, #tpu.memory_space<vmem>>, %arg25: memref<576x16xbf16, #tpu.memory_space<vmem>>, %arg26: memref<576x16xbf16, #tpu.memory_space<vmem>>) attributes {dimension_semantics = [#tpu.dimension_semantics<parallel>], iteration_bounds = array<i64: 2>, scalar_prefetch = 0 : i64, scratch_operands = 9 : i64, tpu.core_type = #tpu.core_type<tc>, window_params = [{transform_indices = @transform_0, window_bounds = array<i64: 1, 8, 290>}, {pipeline_mode = #tpu.pipeline_mode<synchronous>, transform_indices = @transform_1, window_bounds = array<i64: 32, 72>}, {pipeline_mode = #tpu.pipeline_mode<synchronous>, transform_indices = @transform_2, window_bounds = array<i64: 32, 1>}, {pipeline_mode = #tpu.pipeline_mode<synchronous>, transform_indices = @transform_3, window_bounds = array<i64: 256, 64>}, {pipeline_mode = #tpu.pipeline_mode<synchronous>, transform_indices = @transform_4, window_bounds = array<i64: 32, 288>}, {pipeline_mode = #tpu.pipeline_mode<synchronous>, transform_indices = @transform_5, window_bounds = array<i64: 32, 1>}, {pipeline_mode = #tpu.pipeline_mode<synchronous>, transform_indices = @transform_6, window_bounds = array<i64: 64, 288>}, {pipeline_mode = #tpu.pipeline_mode<synchronous>, transform_indices = @transform_7, window_bounds = array<i64: 64, 1>}, {pipeline_mode = #tpu.pipeline_mode<synchronous>, transform_indices = @transform_8, window_bounds = array<i64: 64, 16>}, {pipeline_mode = #tpu.pipeline_mode<synchronous>, transform_indices = @transform_9, window_bounds = array<i64: 64, 576>}, {pipeline_mode = #tpu.pipeline_mode<synchronous>, transform_indices = @transform_10, window_bounds = array<i64: 64, 1>}, {pipeline_mode = #tpu.pipeline_mode<synchronous>, transform_indices = @transform_11, window_bounds = array<i64: 64, 576>}, {pipeline_mode = #tpu.pipeline_mode<synchronous>, transform_indices = @transform_12, window_bounds = array<i64: 64, 1>}, {pipeline_mode = #tpu.pipeline_mode<synchronous>, transform_indices = @transform_13, window_bounds = array<i64: 16, 4>}, {pipeline_mode = #tpu.pipeline_mode<synchronous>, transform_indices = @transform_14, window_bounds = array<i64: 4, 32, 64>}, {pipeline_mode = #tpu.pipeline_mode<synchronous>, transform_indices = @transform_15, window_bounds = array<i64: 32, 1>}, {transform_indices = @transform_16, window_bounds = array<i64: 1, 32, 1>}]} {
    %c0 = arith.constant 0 : index
    %c0_0 = arith.constant 0 : index
    %c0_1 = arith.constant 0 : index
    %0 = vector.load %arg1[%c0, %c0_0, %c0_1] : memref<1x8x290xbf16, #tpu.memory_space<vmem>>, vector<1x8x290xbf16>
    %1 = vector.shape_cast %0 : vector<1x8x290xbf16> to vector<8x290xbf16>
    %2 = tpu.iota {dimensions = array<i32: 1>} : vector<8x256xi32>
    %c15_i32 = arith.constant 15 : i32
    %3 = vector.broadcast %c15_i32 : i32 to vector<8x256xi32>
    %4 = arith.andi %2, %3 : vector<8x256xi32>
    %c1_i32 = arith.constant 1 : i32
    %5 = vector.broadcast %c1_i32 : i32 to vector<8x256xi32>
    %6 = arith.cmpi sge, %4, %5 : vector<8x256xi32>
    %c14_i32 = arith.constant 14 : i32
    %7 = vector.broadcast %c14_i32 : i32 to vector<8x256xi32>
    %8 = arith.cmpi sle, %4, %7 : vector<8x256xi32>
    %9 = vector.extract_strided_slice %1 {offsets = [0, 0], sizes = [8, 256], strides = [1, 1]} : vector<8x290xbf16> to vector<8x256xbf16>
    %cst = arith.constant 0.000000e+00 : bf16
    %10 = vector.broadcast %cst : bf16 to vector<8x256xbf16>
    %11 = arith.select %6, %9, %10 : vector<8x256xi1>, vector<8x256xbf16>
    %c0_2 = arith.constant 0 : index
    %c0_3 = arith.constant 0 : index
    %12 = vector.load %arg22[%c0_2, %c0_3] : memref<72x256xbf16, #tpu.memory_space<vmem>>, vector<8x256xbf16>
    tpu.vector_store %arg22[%c0_2, %c0_3], %11 {strides = array<i32>} : memref<72x256xbf16, #tpu.memory_space<vmem>>, vector<8x256xbf16>,
    %13 = vector.extract_strided_slice %1 {offsets = [0, 1], sizes = [8, 256], strides = [1, 1]} : vector<8x290xbf16> to vector<8x256xbf16>
    %c8 = arith.constant 8 : index
    %c0_4 = arith.constant 0 : index
    %14 = vector.load %arg22[%c8, %c0_4] : memref<72x256xbf16, #tpu.memory_space<vmem>>, vector<8x256xbf16>
    tpu.vector_store %arg22[%c8, %c0_4], %13 {strides = array<i32>} : memref<72x256xbf16, #tpu.memory_space<vmem>>, vector<8x256xbf16>,
    %15 = vector.extract_strided_slice %1 {offsets = [0, 2], sizes = [8, 256], strides = [1, 1]} : vector<8x290xbf16> to vector<8x256xbf16>
    %cst_5 = arith.constant 0.000000e+00 : bf16
    %16 = vector.broadcast %cst_5 : bf16 to vector<8x256xbf16>
    %17 = arith.select %8, %15, %16 : vector<8x256xi1>, vector<8x256xbf16>
    %c16 = arith.constant 16 : index
    %c0_6 = arith.constant 0 : index
    %18 = vector.load %arg22[%c16, %c0_6] : memref<72x256xbf16, #tpu.memory_space<vmem>>, vector<8x256xbf16>
    tpu.vector_store %arg22[%c16, %c0_6], %17 {strides = array<i32>} : memref<72x256xbf16, #tpu.memory_space<vmem>>, vector<8x256xbf16>,
    %19 = vector.extract_strided_slice %1 {offsets = [0, 16], sizes = [8, 256], strides = [1, 1]} : vector<8x290xbf16> to vector<8x256xbf16>
    %cst_7 = arith.constant 0.000000e+00 : bf16
    %20 = vector.broadcast %cst_7 : bf16 to vector<8x256xbf16>
    %21 = arith.select %6, %19, %20 : vector<8x256xi1>, vector<8x256xbf16>
    %c24 = arith.constant 24 : index
    %c0_8 = arith.constant 0 : index
    %22 = vector.load %arg22[%c24, %c0_8] : memref<72x256xbf16, #tpu.memory_space<vmem>>, vector<8x256xbf16>
    tpu.vector_store %arg22[%c24, %c0_8], %21 {strides = array<i32>} : memref<72x256xbf16, #tpu.memory_space<vmem>>, vector<8x256xbf16>,
    %23 = vector.extract_strided_slice %1 {offsets = [0, 17], sizes = [8, 256], strides = [1, 1]} : vector<8x290xbf16> to vector<8x256xbf16>
    %c32 = arith.constant 32 : index
    %c0_9 = arith.constant 0 : index
    %24 = vector.load %arg22[%c32, %c0_9] : memref<72x256xbf16, #tpu.memory_space<vmem>>, vector<8x256xbf16>
    tpu.vector_store %arg22[%c32, %c0_9], %23 {strides = array<i32>} : memref<72x256xbf16, #tpu.memory_space<vmem>>, vector<8x256xbf16>,
    %25 = vector.extract_strided_slice %1 {offsets = [0, 18], sizes = [8, 256], strides = [1, 1]} : vector<8x290xbf16> to vector<8x256xbf16>
    %cst_10 = arith.constant 0.000000e+00 : bf16
    %26 = vector.broadcast %cst_10 : bf16 to vector<8x256xbf16>
    %27 = arith.select %8, %25, %26 : vector<8x256xi1>, vector<8x256xbf16>
    %c40 = arith.constant 40 : index
    %c0_11 = arith.constant 0 : index
    %28 = vector.load %arg22[%c40, %c0_11] : memref<72x256xbf16, #tpu.memory_space<vmem>>, vector<8x256xbf16>
    tpu.vector_store %arg22[%c40, %c0_11], %27 {strides = array<i32>} : memref<72x256xbf16, #tpu.memory_space<vmem>>, vector<8x256xbf16>,
    %29 = vector.extract_strided_slice %1 {offsets = [0, 32], sizes = [8, 256], strides = [1, 1]} : vector<8x290xbf16> to vector<8x256xbf16>
    %cst_12 = arith.constant 0.000000e+00 : bf16
    %30 = vector.broadcast %cst_12 : bf16 to vector<8x256xbf16>
    %31 = arith.select %6, %29, %30 : vector<8x256xi1>, vector<8x256xbf16>
    %c48 = arith.constant 48 : index
    %c0_13 = arith.constant 0 : index
    %32 = vector.load %arg22[%c48, %c0_13] : memref<72x256xbf16, #tpu.memory_space<vmem>>, vector<8x256xbf16>
    tpu.vector_store %arg22[%c48, %c0_13], %31 {strides = array<i32>} : memref<72x256xbf16, #tpu.memory_space<vmem>>, vector<8x256xbf16>,
    %33 = vector.extract_strided_slice %1 {offsets = [0, 33], sizes = [8, 256], strides = [1, 1]} : vector<8x290xbf16> to vector<8x256xbf16>
    %c56 = arith.constant 56 : index
    %c0_14 = arith.constant 0 : index
    %34 = vector.load %arg22[%c56, %c0_14] : memref<72x256xbf16, #tpu.memory_space<vmem>>, vector<8x256xbf16>
    tpu.vector_store %arg22[%c56, %c0_14], %33 {strides = array<i32>} : memref<72x256xbf16, #tpu.memory_space<vmem>>, vector<8x256xbf16>,
    %35 = vector.extract_strided_slice %1 {offsets = [0, 34], sizes = [8, 256], strides = [1, 1]} : vector<8x290xbf16> to vector<8x256xbf16>
    %cst_15 = arith.constant 0.000000e+00 : bf16
    %36 = vector.broadcast %cst_15 : bf16 to vector<8x256xbf16>
    %37 = arith.select %8, %35, %36 : vector<8x256xi1>, vector<8x256xbf16>
    %c64 = arith.constant 64 : index
    %c0_16 = arith.constant 0 : index
    %38 = vector.load %arg22[%c64, %c0_16] : memref<72x256xbf16, #tpu.memory_space<vmem>>, vector<8x256xbf16>
    tpu.vector_store %arg22[%c64, %c0_16], %37 {strides = array<i32>} : memref<72x256xbf16, #tpu.memory_space<vmem>>, vector<8x256xbf16>,
    %c0_17 = arith.constant 0 : index
    %c0_18 = arith.constant 0 : index
    %39 = vector.load %arg2[%c0_17, %c0_18] : memref<32x72xbf16, #tpu.memory_space<vmem>>, vector<32x72xbf16>
    %c0_19 = arith.constant 0 : index
    %c0_20 = arith.constant 0 : index
    %40 = vector.load %arg22[%c0_19, %c0_20] : memref<72x256xbf16, #tpu.memory_space<vmem>>, vector<72x256xbf16>
    %cst_21 = arith.constant dense<0.000000e+00> : vector<32x256xf32>
    %41 = tpu.matmul %39, %40, %cst_21 {dimension_numbers = #tpu.dot_dimension_numbers<[1], [0], [0], [1], [0, 0, 1, 1], [], []>} : vector<32x72xbf16>, vector<72x256xbf16>, vector<32x256xf32> -> vector<32x256xf32>
    %42 = arith.truncf %41 : vector<32x256xf32> to vector<32x256xbf16>
    %c0_22 = arith.constant 0 : index
    %c0_23 = arith.constant 0 : index
    %43 = vector.load %arg4[%c0_22, %c0_23] : memref<256x64xbf16, #tpu.memory_space<vmem>>, vector<256x64xbf16>
    %cst_24 = arith.constant dense<0.000000e+00> : vector<32x64xf32>
    %44 = tpu.matmul %42, %43, %cst_24 {dimension_numbers = #tpu.dot_dimension_numbers<[1], [0], [0], [1], [0, 0, 1, 1], [], []>} : vector<32x256xbf16>, vector<256x64xbf16>, vector<32x64xf32> -> vector<32x64xf32>
    %c0_25 = arith.constant 0 : index
    %c0_26 = arith.constant 0 : index
    %45 = vector.load %arg3[%c0_25, %c0_26] : memref<32x1xf32, #tpu.memory_space<vmem>>, vector<32x1xf32>
    %46 = vector.broadcast %45 : vector<32x1xf32> to vector<32x64xf32>
    %47 = arith.addf %44, %46 : vector<32x64xf32>
    %cst_27 = arith.constant 5.000000e-01 : f32
    %48 = vector.broadcast %cst_27 : f32 to vector<32x64xf32>
    %49 = arith.mulf %48, %47 : vector<32x64xf32>
    %cst_28 = arith.constant 0.707106769 : f32
    %50 = vector.broadcast %cst_28 : f32 to vector<32x64xf32>
    %51 = arith.mulf %47, %50 : vector<32x64xf32>
    %52 = math.erf %51 : vector<32x64xf32>
    %cst_29 = arith.constant 1.000000e+00 : f32
    %53 = vector.broadcast %cst_29 : f32 to vector<32x64xf32>
    %54 = arith.addf %53, %52 : vector<32x64xf32>
    %55 = arith.mulf %49, %54 : vector<32x64xf32>
    %56 = arith.truncf %55 : vector<32x64xf32> to vector<32x64xbf16>
    %cst_30 = arith.constant 0.000000e+00 : bf16
    %57 = vector.broadcast %cst_30 : bf16 to vector<32x82xbf16>
    %c0_31 = arith.constant 0 : index
    %c0_32 = arith.constant 0 : index
    %58 = vector.load %arg18[%c0_31, %c0_32] : memref<32x82xbf16, #tpu.memory_space<vmem>>, vector<32x82xbf16>
    tpu.vector_store %arg18[%c0_31, %c0_32], %57 {strides = array<i32>} : memref<32x82xbf16, #tpu.memory_space<vmem>>, vector<32x82xbf16>,
    %c0_33 = arith.constant 0 : index
    %c9 = arith.constant 9 : index
    %59 = vector.load %arg18[%c0_33, %c9] : memref<32x82xbf16, #tpu.memory_space<vmem>>, vector<32x64xbf16>
    tpu.vector_store %arg18[%c0_33, %c9], %56 {strides = array<i32>} : memref<32x82xbf16, #tpu.memory_space<vmem>>, vector<32x64xbf16>,
    %c0_34 = arith.constant 0 : index
    %c0_35 = arith.constant 0 : index
    %60 = vector.load %arg18[%c0_34, %c0_35] : memref<32x82xbf16, #tpu.memory_space<vmem>>, vector<32x82xbf16>
    %61 = tpu.iota {dimensions = array<i32: 1>} : vector<32x64xi32>
    %c7_i32 = arith.constant 7 : i32
    %62 = vector.broadcast %c7_i32 : i32 to vector<32x64xi32>
    %63 = arith.andi %61, %62 : vector<32x64xi32>
    %c1_i32_36 = arith.constant 1 : i32
    %64 = vector.broadcast %c1_i32_36 : i32 to vector<32x64xi32>
    %65 = arith.cmpi sge, %63, %64 : vector<32x64xi32>
    %c6_i32 = arith.constant 6 : i32
    %66 = vector.broadcast %c6_i32 : i32 to vector<32x64xi32>
    %67 = arith.cmpi sle, %63, %66 : vector<32x64xi32>
    %68 = vector.extract_strided_slice %60 {offsets = [0, 0], sizes = [32, 64], strides = [1, 1]} : vector<32x82xbf16> to vector<32x64xbf16>
    %cst_37 = arith.constant 0.000000e+00 : bf16
    %69 = vector.broadcast %cst_37 : bf16 to vector<32x64xbf16>
    %70 = arith.select %65, %68, %69 : vector<32x64xi1>, vector<32x64xbf16>
    %c0_38 = arith.constant 0 : index
    %c0_39 = arith.constant 0 : index
    %71 = vector.load %arg23[%c0_38, %c0_39] : memref<288x64xbf16, #tpu.memory_space<vmem>>, vector<32x64xbf16>
    tpu.vector_store %arg23[%c0_38, %c0_39], %70 {strides = array<i32>} : memref<288x64xbf16, #tpu.memory_space<vmem>>, vector<32x64xbf16>,
    %72 = vector.extract_strided_slice %60 {offsets = [0, 1], sizes = [32, 64], strides = [1, 1]} : vector<32x82xbf16> to vector<32x64xbf16>
    %c32_40 = arith.constant 32 : index
    %c0_41 = arith.constant 0 : index
    %73 = vector.load %arg23[%c32_40, %c0_41] : memref<288x64xbf16, #tpu.memory_space<vmem>>, vector<32x64xbf16>
    tpu.vector_store %arg23[%c32_40, %c0_41], %72 {strides = array<i32>} : memref<288x64xbf16, #tpu.memory_space<vmem>>, vector<32x64xbf16>,
    %74 = vector.extract_strided_slice %60 {offsets = [0, 2], sizes = [32, 64], strides = [1, 1]} : vector<32x82xbf16> to vector<32x64xbf16>
    %cst_42 = arith.constant 0.000000e+00 : bf16
    %75 = vector.broadcast %cst_42 : bf16 to vector<32x64xbf16>
    %76 = arith.select %67, %74, %75 : vector<32x64xi1>, vector<32x64xbf16>
    %c64_43 = arith.constant 64 : index
    %c0_44 = arith.constant 0 : index
    %77 = vector.load %arg23[%c64_43, %c0_44] : memref<288x64xbf16, #tpu.memory_space<vmem>>, vector<32x64xbf16>
    tpu.vector_store %arg23[%c64_43, %c0_44], %76 {strides = array<i32>} : memref<288x64xbf16, #tpu.memory_space<vmem>>, vector<32x64xbf16>,
    %78 = vector.extract_strided_slice %60 {offsets = [0, 8], sizes = [32, 64], strides = [1, 1]} : vector<32x82xbf16> to vector<32x64xbf16>
    %cst_45 = arith.constant 0.000000e+00 : bf16
    %79 = vector.broadcast %cst_45 : bf16 to vector<32x64xbf16>
    %80 = arith.select %65, %78, %79 : vector<32x64xi1>, vector<32x64xbf16>
    %c96 = arith.constant 96 : index
    %c0_46 = arith.constant 0 : index
    %81 = vector.load %arg23[%c96, %c0_46] : memref<288x64xbf16, #tpu.memory_space<vmem>>, vector<32x64xbf16>
    tpu.vector_store %arg23[%c96, %c0_46], %80 {strides = array<i32>} : memref<288x64xbf16, #tpu.memory_space<vmem>>, vector<32x64xbf16>,
    %82 = vector.extract_strided_slice %60 {offsets = [0, 9], sizes = [32, 64], strides = [1, 1]} : vector<32x82xbf16> to vector<32x64xbf16>
    %c128 = arith.constant 128 : index
    %c0_47 = arith.constant 0 : index
    %83 = vector.load %arg23[%c128, %c0_47] : memref<288x64xbf16, #tpu.memory_space<vmem>>, vector<32x64xbf16>
    tpu.vector_store %arg23[%c128, %c0_47], %82 {strides = array<i32>} : memref<288x64xbf16, #tpu.memory_space<vmem>>, vector<32x64xbf16>,
    %84 = vector.extract_strided_slice %60 {offsets = [0, 10], sizes = [32, 64], strides = [1, 1]} : vector<32x82xbf16> to vector<32x64xbf16>
    %cst_48 = arith.constant 0.000000e+00 : bf16
    %85 = vector.broadcast %cst_48 : bf16 to vector<32x64xbf16>
    %86 = arith.select %67, %84, %85 : vector<32x64xi1>, vector<32x64xbf16>
    %c160 = arith.constant 160 : index
    %c0_49 = arith.constant 0 : index
    %87 = vector.load %arg23[%c160, %c0_49] : memref<288x64xbf16, #tpu.memory_space<vmem>>, vector<32x64xbf16>
    tpu.vector_store %arg23[%c160, %c0_49], %86 {strides = array<i32>} : memref<288x64xbf16, #tpu.memory_space<vmem>>, vector<32x64xbf16>,
    %88 = vector.extract_strided_slice %60 {offsets = [0, 16], sizes = [32, 64], strides = [1, 1]} : vector<32x82xbf16> to vector<32x64xbf16>
    %cst_50 = arith.constant 0.000000e+00 : bf16
    %89 = vector.broadcast %cst_50 : bf16 to vector<32x64xbf16>
    %90 = arith.select %65, %88, %89 : vector<32x64xi1>, vector<32x64xbf16>
    %c192 = arith.constant 192 : index
    %c0_51 = arith.constant 0 : index
    %91 = vector.load %arg23[%c192, %c0_51] : memref<288x64xbf16, #tpu.memory_space<vmem>>, vector<32x64xbf16>
    tpu.vector_store %arg23[%c192, %c0_51], %90 {strides = array<i32>} : memref<288x64xbf16, #tpu.memory_space<vmem>>, vector<32x64xbf16>,
    %92 = vector.extract_strided_slice %60 {offsets = [0, 17], sizes = [32, 64], strides = [1, 1]} : vector<32x82xbf16> to vector<32x64xbf16>
    %c224 = arith.constant 224 : index
    %c0_52 = arith.constant 0 : index
    %93 = vector.load %arg23[%c224, %c0_52] : memref<288x64xbf16, #tpu.memory_space<vmem>>, vector<32x64xbf16>
    tpu.vector_store %arg23[%c224, %c0_52], %92 {strides = array<i32>} : memref<288x64xbf16, #tpu.memory_space<vmem>>, vector<32x64xbf16>,
    %94 = vector.extract_strided_slice %60 {offsets = [0, 18], sizes = [32, 64], strides = [1, 1]} : vector<32x82xbf16> to vector<32x64xbf16>
    %cst_53 = arith.constant 0.000000e+00 : bf16
    %95 = vector.broadcast %cst_53 : bf16 to vector<32x64xbf16>
    %96 = arith.select %67, %94, %95 : vector<32x64xi1>, vector<32x64xbf16>
    %c256 = arith.constant 256 : index
    %c0_54 = arith.constant 0 : index
    %97 = vector.load %arg23[%c256, %c0_54] : memref<288x64xbf16, #tpu.memory_space<vmem>>, vector<32x64xbf16>
    tpu.vector_store %arg23[%c256, %c0_54], %96 {strides = array<i32>} : memref<288x64xbf16, #tpu.memory_space<vmem>>, vector<32x64xbf16>,
    %c0_55 = arith.constant 0 : index
    %c0_56 = arith.constant 0 : index
    %98 = vector.load %arg5[%c0_55, %c0_56] : memref<32x288xbf16, #tpu.memory_space<vmem>>, vector<32x288xbf16>
    %c0_57 = arith.constant 0 : index
    %c0_58 = arith.constant 0 : index
    %99 = vector.load %arg23[%c0_57, %c0_58] : memref<288x64xbf16, #tpu.memory_space<vmem>>, vector<288x64xbf16>
    %cst_59 = arith.constant dense<0.000000e+00> : vector<32x64xf32>
    %100 = tpu.matmul %98, %99, %cst_59 {dimension_numbers = #tpu.dot_dimension_numbers<[1], [0], [0], [1], [0, 0, 1, 1], [], []>} : vector<32x288xbf16>, vector<288x64xbf16>, vector<32x64xf32> -> vector<32x64xf32>
    %c0_60 = arith.constant 0 : index
    %c0_61 = arith.constant 0 : index
    %101 = vector.load %arg6[%c0_60, %c0_61] : memref<32x1xf32, #tpu.memory_space<vmem>>, vector<32x1xf32>
    %102 = vector.broadcast %101 : vector<32x1xf32> to vector<32x64xf32>
    %103 = arith.addf %100, %102 : vector<32x64xf32>
    %cst_62 = arith.constant 5.000000e-01 : f32
    %104 = vector.broadcast %cst_62 : f32 to vector<32x64xf32>
    %105 = arith.mulf %104, %103 : vector<32x64xf32>
    %cst_63 = arith.constant 0.707106769 : f32
    %106 = vector.broadcast %cst_63 : f32 to vector<32x64xf32>
    %107 = arith.mulf %103, %106 : vector<32x64xf32>
    %108 = math.erf %107 : vector<32x64xf32>
    %cst_64 = arith.constant 1.000000e+00 : f32
    %109 = vector.broadcast %cst_64 : f32 to vector<32x64xf32>
    %110 = arith.addf %109, %108 : vector<32x64xf32>
    %111 = arith.mulf %105, %110 : vector<32x64xf32>
    %112 = arith.truncf %111 : vector<32x64xf32> to vector<32x64xbf16>
    %cst_65 = arith.constant 0.000000e+00 : bf16
    %113 = vector.broadcast %cst_65 : bf16 to vector<32x82xbf16>
    %c0_66 = arith.constant 0 : index
    %c0_67 = arith.constant 0 : index
    %114 = vector.load %arg19[%c0_66, %c0_67] : memref<32x82xbf16, #tpu.memory_space<vmem>>, vector<32x82xbf16>
    tpu.vector_store %arg19[%c0_66, %c0_67], %113 {strides = array<i32>} : memref<32x82xbf16, #tpu.memory_space<vmem>>, vector<32x82xbf16>,
    %c0_68 = arith.constant 0 : index
    %c9_69 = arith.constant 9 : index
    %115 = vector.load %arg19[%c0_68, %c9_69] : memref<32x82xbf16, #tpu.memory_space<vmem>>, vector<32x64xbf16>
    tpu.vector_store %arg19[%c0_68, %c9_69], %112 {strides = array<i32>} : memref<32x82xbf16, #tpu.memory_space<vmem>>, vector<32x64xbf16>,
    %c0_70 = arith.constant 0 : index
    %c0_71 = arith.constant 0 : index
    %116 = vector.load %arg19[%c0_70, %c0_71] : memref<32x82xbf16, #tpu.memory_space<vmem>>, vector<32x82xbf16>
    %117 = tpu.iota {dimensions = array<i32: 1>} : vector<32x64xi32>
    %c7_i32_72 = arith.constant 7 : i32
    %118 = vector.broadcast %c7_i32_72 : i32 to vector<32x64xi32>
    %119 = arith.andi %117, %118 : vector<32x64xi32>
    %c1_i32_73 = arith.constant 1 : i32
    %120 = vector.broadcast %c1_i32_73 : i32 to vector<32x64xi32>
    %121 = arith.cmpi sge, %119, %120 : vector<32x64xi32>
    %c6_i32_74 = arith.constant 6 : i32
    %122 = vector.broadcast %c6_i32_74 : i32 to vector<32x64xi32>
    %123 = arith.cmpi sle, %119, %122 : vector<32x64xi32>
    %124 = vector.extract_strided_slice %116 {offsets = [0, 0], sizes = [32, 64], strides = [1, 1]} : vector<32x82xbf16> to vector<32x64xbf16>
    %cst_75 = arith.constant 0.000000e+00 : bf16
    %125 = vector.broadcast %cst_75 : bf16 to vector<32x64xbf16>
    %126 = arith.select %121, %124, %125 : vector<32x64xi1>, vector<32x64xbf16>
    %c0_76 = arith.constant 0 : index
    %c0_77 = arith.constant 0 : index
    %127 = vector.load %arg24[%c0_76, %c0_77] : memref<288x64xbf16, #tpu.memory_space<vmem>>, vector<32x64xbf16>
    tpu.vector_store %arg24[%c0_76, %c0_77], %126 {strides = array<i32>} : memref<288x64xbf16, #tpu.memory_space<vmem>>, vector<32x64xbf16>,
    %128 = vector.extract_strided_slice %116 {offsets = [0, 1], sizes = [32, 64], strides = [1, 1]} : vector<32x82xbf16> to vector<32x64xbf16>
    %c32_78 = arith.constant 32 : index
    %c0_79 = arith.constant 0 : index
    %129 = vector.load %arg24[%c32_78, %c0_79] : memref<288x64xbf16, #tpu.memory_space<vmem>>, vector<32x64xbf16>
    tpu.vector_store %arg24[%c32_78, %c0_79], %128 {strides = array<i32>} : memref<288x64xbf16, #tpu.memory_space<vmem>>, vector<32x64xbf16>,
    %130 = vector.extract_strided_slice %116 {offsets = [0, 2], sizes = [32, 64], strides = [1, 1]} : vector<32x82xbf16> to vector<32x64xbf16>
    %cst_80 = arith.constant 0.000000e+00 : bf16
    %131 = vector.broadcast %cst_80 : bf16 to vector<32x64xbf16>
    %132 = arith.select %123, %130, %131 : vector<32x64xi1>, vector<32x64xbf16>
    %c64_81 = arith.constant 64 : index
    %c0_82 = arith.constant 0 : index
    %133 = vector.load %arg24[%c64_81, %c0_82] : memref<288x64xbf16, #tpu.memory_space<vmem>>, vector<32x64xbf16>
    tpu.vector_store %arg24[%c64_81, %c0_82], %132 {strides = array<i32>} : memref<288x64xbf16, #tpu.memory_space<vmem>>, vector<32x64xbf16>,
    %134 = vector.extract_strided_slice %116 {offsets = [0, 8], sizes = [32, 64], strides = [1, 1]} : vector<32x82xbf16> to vector<32x64xbf16>
    %cst_83 = arith.constant 0.000000e+00 : bf16
    %135 = vector.broadcast %cst_83 : bf16 to vector<32x64xbf16>
    %136 = arith.select %121, %134, %135 : vector<32x64xi1>, vector<32x64xbf16>
    %c96_84 = arith.constant 96 : index
    %c0_85 = arith.constant 0 : index
    %137 = vector.load %arg24[%c96_84, %c0_85] : memref<288x64xbf16, #tpu.memory_space<vmem>>, vector<32x64xbf16>
    tpu.vector_store %arg24[%c96_84, %c0_85], %136 {strides = array<i32>} : memref<288x64xbf16, #tpu.memory_space<vmem>>, vector<32x64xbf16>,
    %138 = vector.extract_strided_slice %116 {offsets = [0, 9], sizes = [32, 64], strides = [1, 1]} : vector<32x82xbf16> to vector<32x64xbf16>
    %c128_86 = arith.constant 128 : index
    %c0_87 = arith.constant 0 : index
    %139 = vector.load %arg24[%c128_86, %c0_87] : memref<288x64xbf16, #tpu.memory_space<vmem>>, vector<32x64xbf16>
    tpu.vector_store %arg24[%c128_86, %c0_87], %138 {strides = array<i32>} : memref<288x64xbf16, #tpu.memory_space<vmem>>, vector<32x64xbf16>,
    %140 = vector.extract_strided_slice %116 {offsets = [0, 10], sizes = [32, 64], strides = [1, 1]} : vector<32x82xbf16> to vector<32x64xbf16>
    %cst_88 = arith.constant 0.000000e+00 : bf16
    %141 = vector.broadcast %cst_88 : bf16 to vector<32x64xbf16>
    %142 = arith.select %123, %140, %141 : vector<32x64xi1>, vector<32x64xbf16>
    %c160_89 = arith.constant 160 : index
    %c0_90 = arith.constant 0 : index
    %143 = vector.load %arg24[%c160_89, %c0_90] : memref<288x64xbf16, #tpu.memory_space<vmem>>, vector<32x64xbf16>
    tpu.vector_store %arg24[%c160_89, %c0_90], %142 {strides = array<i32>} : memref<288x64xbf16, #tpu.memory_space<vmem>>, vector<32x64xbf16>,
    %144 = vector.extract_strided_slice %116 {offsets = [0, 16], sizes = [32, 64], strides = [1, 1]} : vector<32x82xbf16> to vector<32x64xbf16>
    %cst_91 = arith.constant 0.000000e+00 : bf16
    %145 = vector.broadcast %cst_91 : bf16 to vector<32x64xbf16>
    %146 = arith.select %121, %144, %145 : vector<32x64xi1>, vector<32x64xbf16>
    %c192_92 = arith.constant 192 : index
    %c0_93 = arith.constant 0 : index
    %147 = vector.load %arg24[%c192_92, %c0_93] : memref<288x64xbf16, #tpu.memory_space<vmem>>, vector<32x64xbf16>
    tpu.vector_store %arg24[%c192_92, %c0_93], %146 {strides = array<i32>} : memref<288x64xbf16, #tpu.memory_space<vmem>>, vector<32x64xbf16>,
    %148 = vector.extract_strided_slice %116 {offsets = [0, 17], sizes = [32, 64], strides = [1, 1]} : vector<32x82xbf16> to vector<32x64xbf16>
    %c224_94 = arith.constant 224 : index
    %c0_95 = arith.constant 0 : index
    %149 = vector.load %arg24[%c224_94, %c0_95] : memref<288x64xbf16, #tpu.memory_space<vmem>>, vector<32x64xbf16>
    tpu.vector_store %arg24[%c224_94, %c0_95], %148 {strides = array<i32>} : memref<288x64xbf16, #tpu.memory_space<vmem>>, vector<32x64xbf16>,
    %150 = vector.extract_strided_slice %116 {offsets = [0, 18], sizes = [32, 64], strides = [1, 1]} : vector<32x82xbf16> to vector<32x64xbf16>
    %cst_96 = arith.constant 0.000000e+00 : bf16
    %151 = vector.broadcast %cst_96 : bf16 to vector<32x64xbf16>
    %152 = arith.select %123, %150, %151 : vector<32x64xi1>, vector<32x64xbf16>
    %c256_97 = arith.constant 256 : index
    %c0_98 = arith.constant 0 : index
    %153 = vector.load %arg24[%c256_97, %c0_98] : memref<288x64xbf16, #tpu.memory_space<vmem>>, vector<32x64xbf16>
    tpu.vector_store %arg24[%c256_97, %c0_98], %152 {strides = array<i32>} : memref<288x64xbf16, #tpu.memory_space<vmem>>, vector<32x64xbf16>,
    %c0_99 = arith.constant 0 : index
    %c0_100 = arith.constant 0 : index
    %154 = vector.load %arg7[%c0_99, %c0_100] : memref<64x288xbf16, #tpu.memory_space<vmem>>, vector<64x288xbf16>
    %c0_101 = arith.constant 0 : index
    %c0_102 = arith.constant 0 : index
    %155 = vector.load %arg24[%c0_101, %c0_102] : memref<288x64xbf16, #tpu.memory_space<vmem>>, vector<288x64xbf16>
    %cst_103 = arith.constant dense<0.000000e+00> : vector<64x64xf32>
    %156 = tpu.matmul %154, %155, %cst_103 {dimension_numbers = #tpu.dot_dimension_numbers<[1], [0], [0], [1], [0, 0, 1, 1], [], []>} : vector<64x288xbf16>, vector<288x64xbf16>, vector<64x64xf32> -> vector<64x64xf32>
    %157 = arith.truncf %156 : vector<64x64xf32> to vector<64x64xbf16>
    %c0_104 = arith.constant 0 : index
    %c0_105 = arith.constant 0 : index
    %158 = vector.load %arg9[%c0_104, %c0_105] : memref<64x16xbf16, #tpu.memory_space<vmem>>, vector<64x16xbf16>
    %cst_106 = arith.constant dense<0.000000e+00> : vector<64x16xf32>
    %159 = tpu.matmul %157, %158, %cst_106 {dimension_numbers = #tpu.dot_dimension_numbers<[1], [0], [0], [1], [0, 0, 1, 1], [], []>} : vector<64x64xbf16>, vector<64x16xbf16>, vector<64x16xf32> -> vector<64x16xf32>
    %c0_107 = arith.constant 0 : index
    %c0_108 = arith.constant 0 : index
    %160 = vector.load %arg8[%c0_107, %c0_108] : memref<64x1xf32, #tpu.memory_space<vmem>>, vector<64x1xf32>
    %161 = vector.broadcast %160 : vector<64x1xf32> to vector<64x16xf32>
    %162 = arith.addf %159, %161 : vector<64x16xf32>
    %cst_109 = arith.constant 5.000000e-01 : f32
    %163 = vector.broadcast %cst_109 : f32 to vector<64x16xf32>
    %164 = arith.mulf %163, %162 : vector<64x16xf32>
    %cst_110 = arith.constant 0.707106769 : f32
    %165 = vector.broadcast %cst_110 : f32 to vector<64x16xf32>
    %166 = arith.mulf %162, %165 : vector<64x16xf32>
    %167 = math.erf %166 : vector<64x16xf32>
    %cst_111 = arith.constant 1.000000e+00 : f32
    %168 = vector.broadcast %cst_111 : f32 to vector<64x16xf32>
    %169 = arith.addf %168, %167 : vector<64x16xf32>
    %170 = arith.mulf %164, %169 : vector<64x16xf32>
    %171 = arith.truncf %170 : vector<64x16xf32> to vector<64x16xbf16>
    %cst_112 = arith.constant 0.000000e+00 : bf16
    %172 = vector.broadcast %cst_112 : bf16 to vector<64x26xbf16>
    %c0_113 = arith.constant 0 : index
    %c0_114 = arith.constant 0 : index
    %173 = vector.load %arg20[%c0_113, %c0_114] : memref<64x26xbf16, #tpu.memory_space<vmem>>, vector<64x26xbf16>
    tpu.vector_store %arg20[%c0_113, %c0_114], %172 {strides = array<i32>} : memref<64x26xbf16, #tpu.memory_space<vmem>>, vector<64x26xbf16>,
    %c0_115 = arith.constant 0 : index
    %c5 = arith.constant 5 : index
    %174 = vector.load %arg20[%c0_115, %c5] : memref<64x26xbf16, #tpu.memory_space<vmem>>, vector<64x16xbf16>
    tpu.vector_store %arg20[%c0_115, %c5], %171 {strides = array<i32>} : memref<64x26xbf16, #tpu.memory_space<vmem>>, vector<64x16xbf16>,
    %c0_116 = arith.constant 0 : index
    %c0_117 = arith.constant 0 : index
    %175 = vector.load %arg20[%c0_116, %c0_117] : memref<64x26xbf16, #tpu.memory_space<vmem>>, vector<64x26xbf16>
    %176 = tpu.iota {dimensions = array<i32: 1>} : vector<64x16xi32>
    %c3_i32 = arith.constant 3 : i32
    %177 = vector.broadcast %c3_i32 : i32 to vector<64x16xi32>
    %178 = arith.andi %176, %177 : vector<64x16xi32>
    %c1_i32_118 = arith.constant 1 : i32
    %179 = vector.broadcast %c1_i32_118 : i32 to vector<64x16xi32>
    %180 = arith.cmpi sge, %178, %179 : vector<64x16xi32>
    %c2_i32 = arith.constant 2 : i32
    %181 = vector.broadcast %c2_i32 : i32 to vector<64x16xi32>
    %182 = arith.cmpi sle, %178, %181 : vector<64x16xi32>
    %183 = vector.extract_strided_slice %175 {offsets = [0, 0], sizes = [64, 16], strides = [1, 1]} : vector<64x26xbf16> to vector<64x16xbf16>
    %cst_119 = arith.constant 0.000000e+00 : bf16
    %184 = vector.broadcast %cst_119 : bf16 to vector<64x16xbf16>
    %185 = arith.select %180, %183, %184 : vector<64x16xi1>, vector<64x16xbf16>
    %c0_120 = arith.constant 0 : index
    %c0_121 = arith.constant 0 : index
    %186 = vector.load %arg25[%c0_120, %c0_121] : memref<576x16xbf16, #tpu.memory_space<vmem>>, vector<64x16xbf16>
    tpu.vector_store %arg25[%c0_120, %c0_121], %185 {strides = array<i32>} : memref<576x16xbf16, #tpu.memory_space<vmem>>, vector<64x16xbf16>,
    %187 = vector.extract_strided_slice %175 {offsets = [0, 1], sizes = [64, 16], strides = [1, 1]} : vector<64x26xbf16> to vector<64x16xbf16>
    %c64_122 = arith.constant 64 : index
    %c0_123 = arith.constant 0 : index
    %188 = vector.load %arg25[%c64_122, %c0_123] : memref<576x16xbf16, #tpu.memory_space<vmem>>, vector<64x16xbf16>
    tpu.vector_store %arg25[%c64_122, %c0_123], %187 {strides = array<i32>} : memref<576x16xbf16, #tpu.memory_space<vmem>>, vector<64x16xbf16>,
    %189 = vector.extract_strided_slice %175 {offsets = [0, 2], sizes = [64, 16], strides = [1, 1]} : vector<64x26xbf16> to vector<64x16xbf16>
    %cst_124 = arith.constant 0.000000e+00 : bf16
    %190 = vector.broadcast %cst_124 : bf16 to vector<64x16xbf16>
    %191 = arith.select %182, %189, %190 : vector<64x16xi1>, vector<64x16xbf16>
    %c128_125 = arith.constant 128 : index
    %c0_126 = arith.constant 0 : index
    %192 = vector.load %arg25[%c128_125, %c0_126] : memref<576x16xbf16, #tpu.memory_space<vmem>>, vector<64x16xbf16>
    tpu.vector_store %arg25[%c128_125, %c0_126], %191 {strides = array<i32>} : memref<576x16xbf16, #tpu.memory_space<vmem>>, vector<64x16xbf16>,
    %193 = vector.extract_strided_slice %175 {offsets = [0, 4], sizes = [64, 16], strides = [1, 1]} : vector<64x26xbf16> to vector<64x16xbf16>
    %cst_127 = arith.constant 0.000000e+00 : bf16
    %194 = vector.broadcast %cst_127 : bf16 to vector<64x16xbf16>
    %195 = arith.select %180, %193, %194 : vector<64x16xi1>, vector<64x16xbf16>
    %c192_128 = arith.constant 192 : index
    %c0_129 = arith.constant 0 : index
    %196 = vector.load %arg25[%c192_128, %c0_129] : memref<576x16xbf16, #tpu.memory_space<vmem>>, vector<64x16xbf16>
    tpu.vector_store %arg25[%c192_128, %c0_129], %195 {strides = array<i32>} : memref<576x16xbf16, #tpu.memory_space<vmem>>, vector<64x16xbf16>,
    %197 = vector.extract_strided_slice %175 {offsets = [0, 5], sizes = [64, 16], strides = [1, 1]} : vector<64x26xbf16> to vector<64x16xbf16>
    %c256_130 = arith.constant 256 : index
    %c0_131 = arith.constant 0 : index
    %198 = vector.load %arg25[%c256_130, %c0_131] : memref<576x16xbf16, #tpu.memory_space<vmem>>, vector<64x16xbf16>
    tpu.vector_store %arg25[%c256_130, %c0_131], %197 {strides = array<i32>} : memref<576x16xbf16, #tpu.memory_space<vmem>>, vector<64x16xbf16>,
    %199 = vector.extract_strided_slice %175 {offsets = [0, 6], sizes = [64, 16], strides = [1, 1]} : vector<64x26xbf16> to vector<64x16xbf16>
    %cst_132 = arith.constant 0.000000e+00 : bf16
    %200 = vector.broadcast %cst_132 : bf16 to vector<64x16xbf16>
    %201 = arith.select %182, %199, %200 : vector<64x16xi1>, vector<64x16xbf16>
    %c320 = arith.constant 320 : index
    %c0_133 = arith.constant 0 : index
    %202 = vector.load %arg25[%c320, %c0_133] : memref<576x16xbf16, #tpu.memory_space<vmem>>, vector<64x16xbf16>
    tpu.vector_store %arg25[%c320, %c0_133], %201 {strides = array<i32>} : memref<576x16xbf16, #tpu.memory_space<vmem>>, vector<64x16xbf16>,
    %203 = vector.extract_strided_slice %175 {offsets = [0, 8], sizes = [64, 16], strides = [1, 1]} : vector<64x26xbf16> to vector<64x16xbf16>
    %cst_134 = arith.constant 0.000000e+00 : bf16
    %204 = vector.broadcast %cst_134 : bf16 to vector<64x16xbf16>
    %205 = arith.select %180, %203, %204 : vector<64x16xi1>, vector<64x16xbf16>
    %c384 = arith.constant 384 : index
    %c0_135 = arith.constant 0 : index
    %206 = vector.load %arg25[%c384, %c0_135] : memref<576x16xbf16, #tpu.memory_space<vmem>>, vector<64x16xbf16>
    tpu.vector_store %arg25[%c384, %c0_135], %205 {strides = array<i32>} : memref<576x16xbf16, #tpu.memory_space<vmem>>, vector<64x16xbf16>,
    %207 = vector.extract_strided_slice %175 {offsets = [0, 9], sizes = [64, 16], strides = [1, 1]} : vector<64x26xbf16> to vector<64x16xbf16>
    %c448 = arith.constant 448 : index
    %c0_136 = arith.constant 0 : index
    %208 = vector.load %arg25[%c448, %c0_136] : memref<576x16xbf16, #tpu.memory_space<vmem>>, vector<64x16xbf16>
    tpu.vector_store %arg25[%c448, %c0_136], %207 {strides = array<i32>} : memref<576x16xbf16, #tpu.memory_space<vmem>>, vector<64x16xbf16>,
    %209 = vector.extract_strided_slice %175 {offsets = [0, 10], sizes = [64, 16], strides = [1, 1]} : vector<64x26xbf16> to vector<64x16xbf16>
    %cst_137 = arith.constant 0.000000e+00 : bf16
    %210 = vector.broadcast %cst_137 : bf16 to vector<64x16xbf16>
    %211 = arith.select %182, %209, %210 : vector<64x16xi1>, vector<64x16xbf16>
    %c512 = arith.constant 512 : index
    %c0_138 = arith.constant 0 : index
    %212 = vector.load %arg25[%c512, %c0_138] : memref<576x16xbf16, #tpu.memory_space<vmem>>, vector<64x16xbf16>
    tpu.vector_store %arg25[%c512, %c0_138], %211 {strides = array<i32>} : memref<576x16xbf16, #tpu.memory_space<vmem>>, vector<64x16xbf16>,
    %c0_139 = arith.constant 0 : index
    %c0_140 = arith.constant 0 : index
    %213 = vector.load %arg10[%c0_139, %c0_140] : memref<64x576xbf16, #tpu.memory_space<vmem>>, vector<64x576xbf16>
    %c0_141 = arith.constant 0 : index
    %c0_142 = arith.constant 0 : index
    %214 = vector.load %arg25[%c0_141, %c0_142] : memref<576x16xbf16, #tpu.memory_space<vmem>>, vector<576x16xbf16>
    %cst_143 = arith.constant dense<0.000000e+00> : vector<64x16xf32>
    %215 = tpu.matmul %213, %214, %cst_143 {dimension_numbers = #tpu.dot_dimension_numbers<[1], [0], [0], [1], [0, 0, 1, 1], [], []>} : vector<64x576xbf16>, vector<576x16xbf16>, vector<64x16xf32> -> vector<64x16xf32>
    %c0_144 = arith.constant 0 : index
    %c0_145 = arith.constant 0 : index
    %216 = vector.load %arg11[%c0_144, %c0_145] : memref<64x1xf32, #tpu.memory_space<vmem>>, vector<64x1xf32>
    %217 = vector.broadcast %216 : vector<64x1xf32> to vector<64x16xf32>
    %218 = arith.addf %215, %217 : vector<64x16xf32>
    %cst_146 = arith.constant 5.000000e-01 : f32
    %219 = vector.broadcast %cst_146 : f32 to vector<64x16xf32>
    %220 = arith.mulf %219, %218 : vector<64x16xf32>
    %cst_147 = arith.constant 0.707106769 : f32
    %221 = vector.broadcast %cst_147 : f32 to vector<64x16xf32>
    %222 = arith.mulf %218, %221 : vector<64x16xf32>
    %223 = math.erf %222 : vector<64x16xf32>
    %cst_148 = arith.constant 1.000000e+00 : f32
    %224 = vector.broadcast %cst_148 : f32 to vector<64x16xf32>
    %225 = arith.addf %224, %223 : vector<64x16xf32>
    %226 = arith.mulf %220, %225 : vector<64x16xf32>
    %227 = arith.truncf %226 : vector<64x16xf32> to vector<64x16xbf16>
    %cst_149 = arith.constant 0.000000e+00 : bf16
    %228 = vector.broadcast %cst_149 : bf16 to vector<64x26xbf16>
    %c0_150 = arith.constant 0 : index
    %c0_151 = arith.constant 0 : index
    %229 = vector.load %arg21[%c0_150, %c0_151] : memref<64x26xbf16, #tpu.memory_space<vmem>>, vector<64x26xbf16>
    tpu.vector_store %arg21[%c0_150, %c0_151], %228 {strides = array<i32>} : memref<64x26xbf16, #tpu.memory_space<vmem>>, vector<64x26xbf16>,
    %c0_152 = arith.constant 0 : index
    %c5_153 = arith.constant 5 : index
    %230 = vector.load %arg21[%c0_152, %c5_153] : memref<64x26xbf16, #tpu.memory_space<vmem>>, vector<64x16xbf16>
    tpu.vector_store %arg21[%c0_152, %c5_153], %227 {strides = array<i32>} : memref<64x26xbf16, #tpu.memory_space<vmem>>, vector<64x16xbf16>,
    %c0_154 = arith.constant 0 : index
    %c0_155 = arith.constant 0 : index
    %231 = vector.load %arg21[%c0_154, %c0_155] : memref<64x26xbf16, #tpu.memory_space<vmem>>, vector<64x26xbf16>
    %232 = tpu.iota {dimensions = array<i32: 1>} : vector<64x16xi32>
    %c3_i32_156 = arith.constant 3 : i32
    %233 = vector.broadcast %c3_i32_156 : i32 to vector<64x16xi32>
    %234 = arith.andi %232, %233 : vector<64x16xi32>
    %c1_i32_157 = arith.constant 1 : i32
    %235 = vector.broadcast %c1_i32_157 : i32 to vector<64x16xi32>
    %236 = arith.cmpi sge, %234, %235 : vector<64x16xi32>
    %c2_i32_158 = arith.constant 2 : i32
    %237 = vector.broadcast %c2_i32_158 : i32 to vector<64x16xi32>
    %238 = arith.cmpi sle, %234, %237 : vector<64x16xi32>
    %239 = vector.extract_strided_slice %231 {offsets = [0, 0], sizes = [64, 16], strides = [1, 1]} : vector<64x26xbf16> to vector<64x16xbf16>
    %cst_159 = arith.constant 0.000000e+00 : bf16
    %240 = vector.broadcast %cst_159 : bf16 to vector<64x16xbf16>
    %241 = arith.select %236, %239, %240 : vector<64x16xi1>, vector<64x16xbf16>
    %c0_160 = arith.constant 0 : index
    %c0_161 = arith.constant 0 : index
    %242 = vector.load %arg26[%c0_160, %c0_161] : memref<576x16xbf16, #tpu.memory_space<vmem>>, vector<64x16xbf16>
    tpu.vector_store %arg26[%c0_160, %c0_161], %241 {strides = array<i32>} : memref<576x16xbf16, #tpu.memory_space<vmem>>, vector<64x16xbf16>,
    %243 = vector.extract_strided_slice %231 {offsets = [0, 1], sizes = [64, 16], strides = [1, 1]} : vector<64x26xbf16> to vector<64x16xbf16>
    %c64_162 = arith.constant 64 : index
    %c0_163 = arith.constant 0 : index
    %244 = vector.load %arg26[%c64_162, %c0_163] : memref<576x16xbf16, #tpu.memory_space<vmem>>, vector<64x16xbf16>
    tpu.vector_store %arg26[%c64_162, %c0_163], %243 {strides = array<i32>} : memref<576x16xbf16, #tpu.memory_space<vmem>>, vector<64x16xbf16>,
    %245 = vector.extract_strided_slice %231 {offsets = [0, 2], sizes = [64, 16], strides = [1, 1]} : vector<64x26xbf16> to vector<64x16xbf16>
    %cst_164 = arith.constant 0.000000e+00 : bf16
    %246 = vector.broadcast %cst_164 : bf16 to vector<64x16xbf16>
    %247 = arith.select %238, %245, %246 : vector<64x16xi1>, vector<64x16xbf16>
    %c128_165 = arith.constant 128 : index
    %c0_166 = arith.constant 0 : index
    %248 = vector.load %arg26[%c128_165, %c0_166] : memref<576x16xbf16, #tpu.memory_space<vmem>>, vector<64x16xbf16>
    tpu.vector_store %arg26[%c128_165, %c0_166], %247 {strides = array<i32>} : memref<576x16xbf16, #tpu.memory_space<vmem>>, vector<64x16xbf16>,
    %249 = vector.extract_strided_slice %231 {offsets = [0, 4], sizes = [64, 16], strides = [1, 1]} : vector<64x26xbf16> to vector<64x16xbf16>
    %cst_167 = arith.constant 0.000000e+00 : bf16
    %250 = vector.broadcast %cst_167 : bf16 to vector<64x16xbf16>
    %251 = arith.select %236, %249, %250 : vector<64x16xi1>, vector<64x16xbf16>
    %c192_168 = arith.constant 192 : index
    %c0_169 = arith.constant 0 : index
    %252 = vector.load %arg26[%c192_168, %c0_169] : memref<576x16xbf16, #tpu.memory_space<vmem>>, vector<64x16xbf16>
    tpu.vector_store %arg26[%c192_168, %c0_169], %251 {strides = array<i32>} : memref<576x16xbf16, #tpu.memory_space<vmem>>, vector<64x16xbf16>,
    %253 = vector.extract_strided_slice %231 {offsets = [0, 5], sizes = [64, 16], strides = [1, 1]} : vector<64x26xbf16> to vector<64x16xbf16>
    %c256_170 = arith.constant 256 : index
    %c0_171 = arith.constant 0 : index
    %254 = vector.load %arg26[%c256_170, %c0_171] : memref<576x16xbf16, #tpu.memory_space<vmem>>, vector<64x16xbf16>
    tpu.vector_store %arg26[%c256_170, %c0_171], %253 {strides = array<i32>} : memref<576x16xbf16, #tpu.memory_space<vmem>>, vector<64x16xbf16>,
    %255 = vector.extract_strided_slice %231 {offsets = [0, 6], sizes = [64, 16], strides = [1, 1]} : vector<64x26xbf16> to vector<64x16xbf16>
    %cst_172 = arith.constant 0.000000e+00 : bf16
    %256 = vector.broadcast %cst_172 : bf16 to vector<64x16xbf16>
    %257 = arith.select %238, %255, %256 : vector<64x16xi1>, vector<64x16xbf16>
    %c320_173 = arith.constant 320 : index
    %c0_174 = arith.constant 0 : index
    %258 = vector.load %arg26[%c320_173, %c0_174] : memref<576x16xbf16, #tpu.memory_space<vmem>>, vector<64x16xbf16>
    tpu.vector_store %arg26[%c320_173, %c0_174], %257 {strides = array<i32>} : memref<576x16xbf16, #tpu.memory_space<vmem>>, vector<64x16xbf16>,
    %259 = vector.extract_strided_slice %231 {offsets = [0, 8], sizes = [64, 16], strides = [1, 1]} : vector<64x26xbf16> to vector<64x16xbf16>
    %cst_175 = arith.constant 0.000000e+00 : bf16
    %260 = vector.broadcast %cst_175 : bf16 to vector<64x16xbf16>
    %261 = arith.select %236, %259, %260 : vector<64x16xi1>, vector<64x16xbf16>
    %c384_176 = arith.constant 384 : index
    %c0_177 = arith.constant 0 : index
    %262 = vector.load %arg26[%c384_176, %c0_177] : memref<576x16xbf16, #tpu.memory_space<vmem>>, vector<64x16xbf16>
    tpu.vector_store %arg26[%c384_176, %c0_177], %261 {strides = array<i32>} : memref<576x16xbf16, #tpu.memory_space<vmem>>, vector<64x16xbf16>,
    %263 = vector.extract_strided_slice %231 {offsets = [0, 9], sizes = [64, 16], strides = [1, 1]} : vector<64x26xbf16> to vector<64x16xbf16>
    %c448_178 = arith.constant 448 : index
    %c0_179 = arith.constant 0 : index
    %264 = vector.load %arg26[%c448_178, %c0_179] : memref<576x16xbf16, #tpu.memory_space<vmem>>, vector<64x16xbf16>
    tpu.vector_store %arg26[%c448_178, %c0_179], %263 {strides = array<i32>} : memref<576x16xbf16, #tpu.memory_space<vmem>>, vector<64x16xbf16>,
    %265 = vector.extract_strided_slice %231 {offsets = [0, 10], sizes = [64, 16], strides = [1, 1]} : vector<64x26xbf16> to vector<64x16xbf16>
    %cst_180 = arith.constant 0.000000e+00 : bf16
    %266 = vector.broadcast %cst_180 : bf16 to vector<64x16xbf16>
    %267 = arith.select %238, %265, %266 : vector<64x16xi1>, vector<64x16xbf16>
    %c512_181 = arith.constant 512 : index
    %c0_182 = arith.constant 0 : index
    %268 = vector.load %arg26[%c512_181, %c0_182] : memref<576x16xbf16, #tpu.memory_space<vmem>>, vector<64x16xbf16>
    tpu.vector_store %arg26[%c512_181, %c0_182], %267 {strides = array<i32>} : memref<576x16xbf16, #tpu.memory_space<vmem>>, vector<64x16xbf16>,
    %c0_183 = arith.constant 0 : index
    %c0_184 = arith.constant 0 : index
    %269 = vector.load %arg12[%c0_183, %c0_184] : memref<64x576xbf16, #tpu.memory_space<vmem>>, vector<64x576xbf16>
    %c0_185 = arith.constant 0 : index
    %c0_186 = arith.constant 0 : index
    %270 = vector.load %arg26[%c0_185, %c0_186] : memref<576x16xbf16, #tpu.memory_space<vmem>>, vector<576x16xbf16>
    %cst_187 = arith.constant dense<0.000000e+00> : vector<64x16xf32>
    %271 = tpu.matmul %269, %270, %cst_187 {dimension_numbers = #tpu.dot_dimension_numbers<[1], [0], [0], [1], [0, 0, 1, 1], [], []>} : vector<64x576xbf16>, vector<576x16xbf16>, vector<64x16xf32> -> vector<64x16xf32>
    %272 = arith.truncf %271 : vector<64x16xf32> to vector<64x16xbf16>
    %c0_188 = arith.constant 0 : index
    %c0_189 = arith.constant 0 : index
    %273 = vector.load %arg14[%c0_188, %c0_189] : memref<16x4xbf16, #tpu.memory_space<vmem>>, vector<16x4xbf16>
    %cst_190 = arith.constant dense<0.000000e+00> : vector<64x4xf32>
    %274 = tpu.matmul %272, %273, %cst_190 {dimension_numbers = #tpu.dot_dimension_numbers<[1], [0], [0], [1], [0, 0, 1, 1], [], []>} : vector<64x16xbf16>, vector<16x4xbf16>, vector<64x4xf32> -> vector<64x4xf32>
    %c0_191 = arith.constant 0 : index
    %c0_192 = arith.constant 0 : index
    %275 = vector.load %arg13[%c0_191, %c0_192] : memref<64x1xf32, #tpu.memory_space<vmem>>, vector<64x1xf32>
    %276 = vector.broadcast %275 : vector<64x1xf32> to vector<64x4xf32>
    %277 = arith.addf %274, %276 : vector<64x4xf32>
    %cst_193 = arith.constant 5.000000e-01 : f32
    %278 = vector.broadcast %cst_193 : f32 to vector<64x4xf32>
    %279 = arith.mulf %278, %277 : vector<64x4xf32>
    %cst_194 = arith.constant 0.707106769 : f32
    %280 = vector.broadcast %cst_194 : f32 to vector<64x4xf32>
    %281 = arith.mulf %277, %280 : vector<64x4xf32>
    %282 = math.erf %281 : vector<64x4xf32>
    %cst_195 = arith.constant 1.000000e+00 : f32
    %283 = vector.broadcast %cst_195 : f32 to vector<64x4xf32>
    %284 = arith.addf %283, %282 : vector<64x4xf32>
    %285 = arith.mulf %279, %284 : vector<64x4xf32>
    %286 = arith.truncf %285 : vector<64x4xf32> to vector<64x4xbf16>
    %c0_196 = arith.constant 0 : index
    %c0_197 = arith.constant 0 : index
    %287 = vector.load %arg16[%c0_196, %c0_197] : memref<32x1xf32, #tpu.memory_space<vmem>>, vector<32x1xf32>
    %c0_198 = arith.constant 0 : index
    %c0_199 = arith.constant 0 : index
    %c0_200 = arith.constant 0 : index
    %288 = vector.load %arg15[%c0_198, %c0_199, %c0_200] : memref<4x32x64xbf16, #tpu.memory_space<vmem>>, vector<1x32x64xbf16>
    %289 = vector.shape_cast %288 : vector<1x32x64xbf16> to vector<32x64xbf16>
    %290 = vector.extract_strided_slice %286 {offsets = [0, 0], sizes = [64, 1], strides = [1, 1]} : vector<64x4xbf16> to vector<64x1xbf16>
    %cst_201 = arith.constant dense<0.000000e+00> : vector<32x1xf32>
    %291 = tpu.matmul %289, %290, %cst_201 {dimension_numbers = #tpu.dot_dimension_numbers<[1], [0], [0], [1], [0, 0, 1, 1], [], []>} : vector<32x64xbf16>, vector<64x1xbf16>, vector<32x1xf32> -> vector<32x1xf32>
    %292 = arith.addf %287, %291 : vector<32x1xf32>
    %c1 = arith.constant 1 : index
    %c0_202 = arith.constant 0 : index
    %c0_203 = arith.constant 0 : index
    %293 = vector.load %arg15[%c1, %c0_202, %c0_203] : memref<4x32x64xbf16, #tpu.memory_space<vmem>>, vector<1x32x64xbf16>
    %294 = vector.shape_cast %293 : vector<1x32x64xbf16> to vector<32x64xbf16>
    %295 = vector.extract_strided_slice %286 {offsets = [0, 1], sizes = [64, 1], strides = [1, 1]} : vector<64x4xbf16> to vector<64x1xbf16>
    %cst_204 = arith.constant dense<0.000000e+00> : vector<32x1xf32>
    %296 = tpu.matmul %294, %295, %cst_204 {dimension_numbers = #tpu.dot_dimension_numbers<[1], [0], [0], [1], [0, 0, 1, 1], [], []>} : vector<32x64xbf16>, vector<64x1xbf16>, vector<32x1xf32> -> vector<32x1xf32>
    %297 = arith.addf %292, %296 : vector<32x1xf32>
    %c2 = arith.constant 2 : index
    %c0_205 = arith.constant 0 : index
    %c0_206 = arith.constant 0 : index
    %298 = vector.load %arg15[%c2, %c0_205, %c0_206] : memref<4x32x64xbf16, #tpu.memory_space<vmem>>, vector<1x32x64xbf16>
    %299 = vector.shape_cast %298 : vector<1x32x64xbf16> to vector<32x64xbf16>
    %300 = vector.extract_strided_slice %286 {offsets = [0, 2], sizes = [64, 1], strides = [1, 1]} : vector<64x4xbf16> to vector<64x1xbf16>
    %cst_207 = arith.constant dense<0.000000e+00> : vector<32x1xf32>
    %301 = tpu.matmul %299, %300, %cst_207 {dimension_numbers = #tpu.dot_dimension_numbers<[1], [0], [0], [1], [0, 0, 1, 1], [], []>} : vector<32x64xbf16>, vector<64x1xbf16>, vector<32x1xf32> -> vector<32x1xf32>
    %302 = arith.addf %297, %301 : vector<32x1xf32>
    %c3 = arith.constant 3 : index
    %c0_208 = arith.constant 0 : index
    %c0_209 = arith.constant 0 : index
    %303 = vector.load %arg15[%c3, %c0_208, %c0_209] : memref<4x32x64xbf16, #tpu.memory_space<vmem>>, vector<1x32x64xbf16>
    %304 = vector.shape_cast %303 : vector<1x32x64xbf16> to vector<32x64xbf16>
    %305 = vector.extract_strided_slice %286 {offsets = [0, 3], sizes = [64, 1], strides = [1, 1]} : vector<64x4xbf16> to vector<64x1xbf16>
    %cst_210 = arith.constant dense<0.000000e+00> : vector<32x1xf32>
    %306 = tpu.matmul %304, %305, %cst_210 {dimension_numbers = #tpu.dot_dimension_numbers<[1], [0], [0], [1], [0, 0, 1, 1], [], []>} : vector<32x64xbf16>, vector<64x1xbf16>, vector<32x1xf32> -> vector<32x1xf32>
    %307 = arith.addf %302, %306 : vector<32x1xf32>
    %c0_211 = arith.constant 0 : index
    %c0_212 = arith.constant 0 : index
    %c0_213 = arith.constant 0 : index
    %308 = vector.load %arg17[%c0_211, %c0_212, %c0_213] : memref<1x32x1xf32, #tpu.memory_space<vmem>>, vector<1x32x1xf32>
    %309 = vector.shape_cast %308 : vector<1x32x1xf32> to vector<32x1xf32>
    %310 = vector.shape_cast %307 : vector<32x1xf32> to vector<1x32x1xf32>
    tpu.vector_store %arg17[%c0_211, %c0_212, %c0_213], %310 {strides = array<i32>} : memref<1x32x1xf32, #tpu.memory_space<vmem>>, vector<1x32x1xf32>,
    return
  }
  func.func @transform_0(%arg0: i32) -> (i32, i32, i32) {
    %c0_i32 = arith.constant 0 : i32
    %c0_i32_0 = arith.constant 0 : i32
    %c0_i32_1 = arith.constant 0 : i32
    return %arg0, %c0_i32, %c0_i32_0 : i32, i32, i32
  }
  func.func @transform_1(%arg0: i32) -> (i32, i32) {
    %c0_i32 = arith.constant 0 : i32
    %c0_i32_0 = arith.constant 0 : i32
    %c0_i32_1 = arith.constant 0 : i32
    return %c0_i32, %c0_i32_0 : i32, i32
  }
  func.func @transform_2(%arg0: i32) -> (i32, i32) {
    %c0_i32 = arith.constant 0 : i32
    %c0_i32_0 = arith.constant 0 : i32
    %c0_i32_1 = arith.constant 0 : i32
    return %c0_i32, %c0_i32_0 : i32, i32
  }
  func.func @transform_3(%arg0: i32) -> (i32, i32) {
    %c0_i32 = arith.constant 0 : i32
    %c0_i32_0 = arith.constant 0 : i32
    %c0_i32_1 = arith.constant 0 : i32
    return %c0_i32, %c0_i32_0 : i32, i32
  }
  func.func @transform_4(%arg0: i32) -> (i32, i32) {
    %c0_i32 = arith.constant 0 : i32
    %c0_i32_0 = arith.constant 0 : i32
    %c0_i32_1 = arith.constant 0 : i32
    return %c0_i32, %c0_i32_0 : i32, i32
  }
  func.func @transform_5(%arg0: i32) -> (i32, i32) {
    %c0_i32 = arith.constant 0 : i32
    %c0_i32_0 = arith.constant 0 : i32
    %c0_i32_1 = arith.constant 0 : i32
    return %c0_i32, %c0_i32_0 : i32, i32
  }
  func.func @transform_6(%arg0: i32) -> (i32, i32) {
    %c0_i32 = arith.constant 0 : i32
    %c0_i32_0 = arith.constant 0 : i32
    %c0_i32_1 = arith.constant 0 : i32
    return %c0_i32, %c0_i32_0 : i32, i32
  }
  func.func @transform_7(%arg0: i32) -> (i32, i32) {
    %c0_i32 = arith.constant 0 : i32
    %c0_i32_0 = arith.constant 0 : i32
    %c0_i32_1 = arith.constant 0 : i32
    return %c0_i32, %c0_i32_0 : i32, i32
  }
  func.func @transform_8(%arg0: i32) -> (i32, i32) {
    %c0_i32 = arith.constant 0 : i32
    %c0_i32_0 = arith.constant 0 : i32
    %c0_i32_1 = arith.constant 0 : i32
    return %c0_i32, %c0_i32_0 : i32, i32
  }
  func.func @transform_9(%arg0: i32) -> (i32, i32) {
    %c0_i32 = arith.constant 0 : i32
    %c0_i32_0 = arith.constant 0 : i32
    %c0_i32_1 = arith.constant 0 : i32
    return %c0_i32, %c0_i32_0 : i32, i32
  }
  func.func @transform_10(%arg0: i32) -> (i32, i32) {
    %c0_i32 = arith.constant 0 : i32
    %c0_i32_0 = arith.constant 0 : i32
    %c0_i32_1 = arith.constant 0 : i32
    return %c0_i32, %c0_i32_0 : i32, i32
  }
  func.func @transform_11(%arg0: i32) -> (i32, i32) {
    %c0_i32 = arith.constant 0 : i32
    %c0_i32_0 = arith.constant 0 : i32
    %c0_i32_1 = arith.constant 0 : i32
    return %c0_i32, %c0_i32_0 : i32, i32
  }
  func.func @transform_12(%arg0: i32) -> (i32, i32) {
    %c0_i32 = arith.constant 0 : i32
    %c0_i32_0 = arith.constant 0 : i32
    %c0_i32_1 = arith.constant 0 : i32
    return %c0_i32, %c0_i32_0 : i32, i32
  }
  func.func @transform_13(%arg0: i32) -> (i32, i32) {
    %c0_i32 = arith.constant 0 : i32
    %c0_i32_0 = arith.constant 0 : i32
    %c0_i32_1 = arith.constant 0 : i32
    return %c0_i32, %c0_i32_0 : i32, i32
  }
  func.func @transform_14(%arg0: i32) -> (i32, i32, i32) {
    %c0_i32 = arith.constant 0 : i32
    %c0_i32_0 = arith.constant 0 : i32
    %c0_i32_1 = arith.constant 0 : i32
    %c0_i32_2 = arith.constant 0 : i32
    return %c0_i32, %c0_i32_0, %c0_i32_1 : i32, i32, i32
  }
  func.func @transform_15(%arg0: i32) -> (i32, i32) {
    %c0_i32 = arith.constant 0 : i32
    %c0_i32_0 = arith.constant 0 : i32
    %c0_i32_1 = arith.constant 0 : i32
    return %c0_i32, %c0_i32_0 : i32, i32
  }
  func.func @transform_16(%arg0: i32) -> (i32, i32, i32) {
    %c0_i32 = arith.constant 0 : i32
    %c0_i32_0 = arith.constant 0 : i32
    %c0_i32_1 = arith.constant 0 : i32
    return %arg0, %c0_i32, %c0_i32_0 : i32, i32, i32
  }
}

</mosaic_0001>

<llo_original>
// kernel: encoder_forward.1
$region0: #{encoder_forward.1}
  #allocation0 [shape = 'u32[]', space=smem, size = 0x4, offset = 0x4, fixed_abs, tag = 'smem constant byte address 0x4 - core index']
  #allocation1 [shape = 'u32[144,128]{1,0:T(1,128)}', space=vmem, size = 0x12000, scoped, tag = 'internal scratch']
  #allocation2 [shape = 'bf16[32,82]{1,0:T(8,128)(2,1)}', space=vmem, size = 0x2000, scoped, tag = 'scratch operand']
  #allocation3 [shape = 'bf16[32,82]{1,0:T(8,128)(2,1)}', space=vmem, size = 0x2000, scoped, tag = 'scratch operand']
  #allocation4 [shape = 'bf16[64,26]{1,0:T(8,128)(2,1)}', space=vmem, size = 0x4000, scoped, tag = 'scratch operand']
  #allocation5 [shape = 'bf16[64,26]{1,0:T(8,128)(2,1)}', space=vmem, size = 0x4000, scoped, tag = 'scratch operand']
  #allocation6 [shape = 'bf16[72,256]{1,0:T(8,128)(2,1)}', space=vmem, size = 0x9000, scoped, tag = 'scratch operand']
  #allocation7 [shape = 'bf16[288,64]{1,0:T(8,128)(2,1)}', space=vmem, size = 0x12000, scoped, tag = 'scratch operand']
  #allocation8 [shape = 'bf16[288,64]{1,0:T(8,128)(2,1)}', space=vmem, size = 0x12000, scoped, tag = 'scratch operand']
  #allocation9 [shape = 'bf16[576,16]{1,0:T(8,128)(2,1)}', space=vmem, size = 0x24000, scoped, tag = 'scratch operand']
  #allocation10 [shape = 'bf16[576,16]{1,0:T(8,128)(2,1)}', space=vmem, size = 0x24000, scoped, tag = 'scratch operand']
  %s0 = inlined_call_operand.vmem [shape: bf16[2,8,290], index: 0, kind: input, shape index: {}]
  %s1 = inlined_call_operand.vmem [shape: bf16[32,72], index: 1, kind: input, shape index: {}]
  %s2 = inlined_call_operand.vmem [shape: f32[32,1], index: 2, kind: input, shape index: {}]
  %s3 = inlined_call_operand.vmem [shape: bf16[256,64], index: 3, kind: input, shape index: {}]
  %s4 = inlined_call_operand.vmem [shape: bf16[32,288], index: 4, kind: input, shape index: {}]
  %s5 = inlined_call_operand.vmem [shape: f32[32,1], index: 5, kind: input, shape index: {}]
  %s6 = inlined_call_operand.vmem [shape: bf16[64,288], index: 6, kind: input, shape index: {}]
  %s7 = inlined_call_operand.vmem [shape: f32[64,1], index: 7, kind: input, shape index: {}]
  %s8 = inlined_call_operand.vmem [shape: bf16[64,16], index: 8, kind: input, shape index: {}]
  %s9 = inlined_call_operand.vmem [shape: bf16[64,576], index: 9, kind: input, shape index: {}]
  %s10 = inlined_call_operand.vmem [shape: f32[64,1], index: 10, kind: input, shape index: {}]
  %s11 = inlined_call_operand.vmem [shape: bf16[64,576], index: 11, kind: input, shape index: {}]
  %s12 = inlined_call_operand.vmem [shape: f32[64,1], index: 12, kind: input, shape index: {}]
  %s13 = inlined_call_operand.vmem [shape: bf16[16,4], index: 13, kind: input, shape index: {}]
  %s14 = inlined_call_operand.vmem [shape: bf16[4,32,64], index: 14, kind: input, shape index: {}]
  %s15 = inlined_call_operand.vmem [shape: f32[32,1], index: 15, kind: input, shape index: {}]
  %s16 = inlined_call_operand.vmem [shape: f32[2,32,1], index: 16, kind: output, shape index: {}]
  %s17 = sld [smem:[#allocation0]]
  $region97: #{encoder_forward.1} parent=0
    _
  %s19 = ssub.s32 1, %s17
  %s20 = scalar_select 0, %s19, %s17
  loop: start=0, step=1, limit=4
  $region2: #{encoder_forward.1} parent=0 // loop_pre_header
    _
  $region3: #{encoder_forward.1} parent=0 // loop_header
    %s22 = sphi 0, %s26
    %p23 = scmp.ge.s32.totalorder %s22, 4
    %s32 = sphi 0, %s34
    %s35 = sphi 0, %s32
    %s36 = sphi 0, %s35
    %s52 = sphi 0, %s36
    %s56 = sphi 0, %s56
    %s58 = sphi 0, %s56
    %s59 = sphi 0, %s58
    %s73 = sphi 0, %s59
    %s77 = sphi 0, %s77
    %s79 = sphi 0, %s77
    %s80 = sphi 0, %s79
    %s94 = sphi 0, %s80
    %s98 = sphi 0, %s98
    %s100 = sphi 0, %s98
    %s101 = sphi 0, %s100
    %s115 = sphi 0, %s101
    %s119 = sphi 0, %s119
    %s121 = sphi 0, %s119
    %s122 = sphi 0, %s121
    %s136 = sphi 0, %s122
    %s140 = sphi 0, %s140
    %s142 = sphi 0, %s140
    %s143 = sphi 0, %s142
    %s157 = sphi 0, %s143
    %s161 = sphi 0, %s161
    %s163 = sphi 0, %s161
    %s164 = sphi 0, %s163
    %s178 = sphi 0, %s164
    %s182 = sphi 0, %s182
    %s184 = sphi 0, %s182
    %s185 = sphi 0, %s184
    %s199 = sphi 0, %s185
    %s203 = sphi 0, %s203
    %s205 = sphi 0, %s203
    %s206 = sphi 0, %s205
    %s220 = sphi 0, %s206
    %s224 = sphi 0, %s224
    %s226 = sphi 0, %s224
    %s227 = sphi 0, %s226
    %s241 = sphi 0, %s227
    %s245 = sphi 0, %s245
    %s247 = sphi 0, %s245
    %s248 = sphi 0, %s247
    %s262 = sphi 0, %s248
    %s266 = sphi 0, %s266
    %s268 = sphi 0, %s266
    %s269 = sphi 0, %s268
    %s283 = sphi 0, %s269
    %s287 = sphi 0, %s287
    %s289 = sphi 0, %s287
    %s290 = sphi 0, %s289
    %s304 = sphi 0, %s290
    %s308 = sphi 0, %s308
    %s310 = sphi 0, %s308
    %s311 = sphi 0, %s310
    %s325 = sphi 0, %s311
    %s329 = sphi 0, %s329
    %s331 = sphi 0, %s329
    %s332 = sphi 0, %s331
    %s346 = sphi 0, %s332
    %s350 = sphi 0, %s350
    %s352 = sphi 0, %s350
    %s353 = sphi 0, %s352
    %s367 = sphi 0, %s353
    %s373 = sphi 0, %s375
    %s376 = sphi 0, %s373
    %s377 = sphi 0, %s376
    %s393 = sphi 0, %s377
  $region4: #{encoder_forward.1} parent=0 // loop_header_branch
    %25 = sbr.rel (%p23) target = $region8
  $region5: #{encoder_forward.1} parent=0 // loop_body
    %s27 = ssub.s32 %s22, 1
    %s28 = ssub.s32 %s22, 2
    %s29 = sadd.s32 %s22, 1
    %s30 = ssub.s32 %s22, %s29
    %p31 = scmp.eq.s32.totalorder %s30, 0
    %s33 = sadd.s32 %s32, 1
    %s34 = scalar_select %p31, %s32, %s33
    %p37 = pneg %p31
    %p38 = scmp.eq.s32.totalorder %s22, 1
    %p39 = por %p37, %p38
    %p40 = scmp.ne.s32.totalorder %s32, %s35
    %p41 = scmp.eq.s32.totalorder %s22, 0
    %p42 = por %p40, %p41
    %p43 = scmp.ne.s32.totalorder %s32, %s35
    %p44 = scmp.eq.s32.totalorder %s27, 1
    %p45 = por %p43, %p44
    %p46 = scmp.ne.s32.totalorder %s35, %s36
    %p47 = scmp.eq.s32.totalorder %s27, 0
    %p48 = por %p46, %p47
    %p49 = scmp.ne.s32.totalorder %s35, %s36
    %p50 = scmp.eq.s32.totalorder %s28, 1
    %p51 = por %p49, %p50
    %p53 = scmp.ne.s32.totalorder %s36, %s52
    %p54 = scmp.eq.s32.totalorder %s28, 0
    %p55 = por %p53, %p54
    %s57 = sadd.s32 %s56, 1
    %p60 = scmp.eq.s32.totalorder %s22, 1
    %p61 = scmp.ne.s32.totalorder %s56, %s58
    %p62 = scmp.eq.s32.totalorder %s22, 0
    %p63 = por %p61, %p62
    %p64 = scmp.ne.s32.totalorder %s56, %s58
    %p65 = scmp.eq.s32.totalorder %s27, 1
    %p66 = por %p64, %p65
    %p67 = scmp.ne.s32.totalorder %s58, %s59
    %p68 = scmp.eq.s32.totalorder %s27, 0
    %p69 = por %p67, %p68
    %p70 = scmp.ne.s32.totalorder %s58, %s59
    %p71 = scmp.eq.s32.totalorder %s28, 1
    %p72 = por %p70, %p71
    %p74 = scmp.ne.s32.totalorder %s59, %s73
    %p75 = scmp.eq.s32.totalorder %s28, 0
    %p76 = por %p74, %p75
    %s78 = sadd.s32 %s77, 1
    %p81 = scmp.eq.s32.totalorder %s22, 1
    %p82 = scmp.ne.s32.totalorder %s77, %s79
    %p83 = scmp.eq.s32.totalorder %s22, 0
    %p84 = por %p82, %p83
    %p85 = scmp.ne.s32.totalorder %s77, %s79
    %p86 = scmp.eq.s32.totalorder %s27, 1
    %p87 = por %p85, %p86
    %p88 = scmp.ne.s32.totalorder %s79, %s80
    %p89 = scmp.eq.s32.totalorder %s27, 0
    %p90 = por %p88, %p89
    %p91 = scmp.ne.s32.totalorder %s79, %s80
    %p92 = scmp.eq.s32.totalorder %s28, 1
    %p93 = por %p91, %p92
    %p95 = scmp.ne.s32.totalorder %s80, %s94
    %p96 = scmp.eq.s32.totalorder %s28, 0
    %p97 = por %p95, %p96
    %s99 = sadd.s32 %s98, 1
    %p102 = scmp.eq.s32.totalorder %s22, 1
    %p103 = scmp.ne.s32.totalorder %s98, %s100
    %p104 = scmp.eq.s32.totalorder %s22, 0
    %p105 = por %p103, %p104
    %p106 = scmp.ne.s32.totalorder %s98, %s100
    %p107 = scmp.eq.s32.totalorder %s27, 1
    %p108 = por %p106, %p107
    %p109 = scmp.ne.s32.totalorder %s100, %s101
    %p110 = scmp.eq.s32.totalorder %s27, 0
    %p111 = por %p109, %p110
    %p112 = scmp.ne.s32.totalorder %s100, %s101
    %p113 = scmp.eq.s32.totalorder %s28, 1
    %p114 = por %p112, %p113
    %p116 = scmp.ne.s32.totalorder %s101, %s115
    %p117 = scmp.eq.s32.totalorder %s28, 0
    %p118 = por %p116, %p117
    %s120 = sadd.s32 %s119, 1
    %p123 = scmp.eq.s32.totalorder %s22, 1
    %p124 = scmp.ne.s32.totalorder %s119, %s121
    %p125 = scmp.eq.s32.totalorder %s22, 0
    %p126 = por %p124, %p125
    %p127 = scmp.ne.s32.totalorder %s119, %s121
    %p128 = scmp.eq.s32.totalorder %s27, 1
    %p129 = por %p127, %p128
    %p130 = scmp.ne.s32.totalorder %s121, %s122
    %p131 = scmp.eq.s32.totalorder %s27, 0
    %p132 = por %p130, %p131
    %p133 = scmp.ne.s32.totalorder %s121, %s122
    %p134 = scmp.eq.s32.totalorder %s28, 1
    %p135 = por %p133, %p134
    %p137 = scmp.ne.s32.totalorder %s122, %s136
    %p138 = scmp.eq.s32.totalorder %s28, 0
    %p139 = por %p137, %p138
    %s141 = sadd.s32 %s140, 1
    %p144 = scmp.eq.s32.totalorder %s22, 1
    %p145 = scmp.ne.s32.totalorder %s140, %s142
    %p146 = scmp.eq.s32.totalorder %s22, 0
    %p147 = por %p145, %p146
    %p148 = scmp.ne.s32.totalorder %s140, %s142
    %p149 = scmp.eq.s32.totalorder %s27, 1
    %p150 = por %p148, %p149
    %p151 = scmp.ne.s32.totalorder %s142, %s143
    %p152 = scmp.eq.s32.totalorder %s27, 0
    %p153 = por %p151, %p152
    %p154 = scmp.ne.s32.totalorder %s142, %s143
    %p155 = scmp.eq.s32.totalorder %s28, 1
    %p156 = por %p154, %p155
    %p158 = scmp.ne.s32.totalorder %s143, %s157
    %p159 = scmp.eq.s32.totalorder %s28, 0
    %p160 = por %p158, %p159
    %s162 = sadd.s32 %s161, 1
    %p165 = scmp.eq.s32.totalorder %s22, 1
    %p166 = scmp.ne.s32.totalorder %s161, %s163
    %p167 = scmp.eq.s32.totalorder %s22, 0
    %p168 = por %p166, %p167
    %p169 = scmp.ne.s32.totalorder %s161, %s163
    %p170 = scmp.eq.s32.totalorder %s27, 1
    %p171 = por %p169, %p170
    %p172 = scmp.ne.s32.totalorder %s163, %s164
    %p173 = scmp.eq.s32.totalorder %s27, 0
    %p174 = por %p172, %p173
    %p175 = scmp.ne.s32.totalorder %s163, %s164
    %p176 = scmp.eq.s32.totalorder %s28, 1
    %p177 = por %p175, %p176
    %p179 = scmp.ne.s32.totalorder %s164, %s178
    %p180 = scmp.eq.s32.totalorder %s28, 0
    %p181 = por %p179, %p180
    %s183 = sadd.s32 %s182, 1
    %p186 = scmp.eq.s32.totalorder %s22, 1
    %p187 = scmp.ne.s32.totalorder %s182, %s184
    %p188 = scmp.eq.s32.totalorder %s22, 0
    %p189 = por %p187, %p188
    %p190 = scmp.ne.s32.totalorder %s182, %s184
    %p191 = scmp.eq.s32.totalorder %s27, 1
    %p192 = por %p190, %p191
    %p193 = scmp.ne.s32.totalorder %s184, %s185
    %p194 = scmp.eq.s32.totalorder %s27, 0
    %p195 = por %p193, %p194
    %p196 = scmp.ne.s32.totalorder %s184, %s185
    %p197 = scmp.eq.s32.totalorder %s28, 1
    %p198 = por %p196, %p197
    %p200 = scmp.ne.s32.totalorder %s185, %s199
    %p201 = scmp.eq.s32.totalorder %s28, 0
    %p202 = por %p200, %p201
    %s204 = sadd.s32 %s203, 1
    %p207 = scmp.eq.s32.totalorder %s22, 1
    %p208 = scmp.ne.s32.totalorder %s203, %s205
    %p209 = scmp.eq.s32.totalorder %s22, 0
    %p210 = por %p208, %p209
    %p211 = scmp.ne.s32.totalorder %s203, %s205
    %p212 = scmp.eq.s32.totalorder %s27, 1
    %p213 = por %p211, %p212
    %p214 = scmp.ne.s32.totalorder %s205, %s206
    %p215 = scmp.eq.s32.totalorder %s27, 0
    %p216 = por %p214, %p215
    %p217 = scmp.ne.s32.totalorder %s205, %s206
    %p218 = scmp.eq.s32.totalorder %s28, 1
    %p219 = por %p217, %p218
    %p221 = scmp.ne.s32.totalorder %s206, %s220
    %p222 = scmp.eq.s32.totalorder %s28, 0
    %p223 = por %p221, %p222
    %s225 = sadd.s32 %s224, 1
    %p228 = scmp.eq.s32.totalorder %s22, 1
    %p229 = scmp.ne.s32.totalorder %s224, %s226
    %p230 = scmp.eq.s32.totalorder %s22, 0
    %p231 = por %p229, %p230
    %p232 = scmp.ne.s32.totalorder %s224, %s226
    %p233 = scmp.eq.s32.totalorder %s27, 1
    %p234 = por %p232, %p233
    %p235 = scmp.ne.s32.totalorder %s226, %s227
    %p236 = scmp.eq.s32.totalorder %s27, 0
    %p237 = por %p235, %p236
    %p238 = scmp.ne.s32.totalorder %s226, %s227
    %p239 = scmp.eq.s32.totalorder %s28, 1
    %p240 = por %p238, %p239
    %p242 = scmp.ne.s32.totalorder %s227, %s241
    %p243 = scmp.eq.s32.totalorder %s28, 0
    %p244 = por %p242, %p243
    %s246 = sadd.s32 %s245, 1
    %p249 = scmp.eq.s32.totalorder %s22, 1
    %p250 = scmp.ne.s32.totalorder %s245, %s247
    %p251 = scmp.eq.s32.totalorder %s22, 0
    %p252 = por %p250, %p251
    %p253 = scmp.ne.s32.totalorder %s245, %s247
    %p254 = scmp.eq.s32.totalorder %s27, 1
    %p255 = por %p253, %p254
    %p256 = scmp.ne.s32.totalorder %s247, %s248
    %p257 = scmp.eq.s32.totalorder %s27, 0
    %p258 = por %p256, %p257
    %p259 = scmp.ne.s32.totalorder %s247, %s248
    %p260 = scmp.eq.s32.totalorder %s28, 1
    %p261 = por %p259, %p260
    %p263 = scmp.ne.s32.totalorder %s248, %s262
    %p264 = scmp.eq.s32.totalorder %s28, 0
    %p265 = por %p263, %p264
    %s267 = sadd.s32 %s266, 1
    %p270 = scmp.eq.s32.totalorder %s22, 1
    %p271 = scmp.ne.s32.totalorder %s266, %s268
    %p272 = scmp.eq.s32.totalorder %s22, 0
    %p273 = por %p271, %p272
    %p274 = scmp.ne.s32.totalorder %s266, %s268
    %p275 = scmp.eq.s32.totalorder %s27, 1
    %p276 = por %p274, %p275
    %p277 = scmp.ne.s32.totalorder %s268, %s269
    %p278 = scmp.eq.s32.totalorder %s27, 0
    %p279 = por %p277, %p278
    %p280 = scmp.ne.s32.totalorder %s268, %s269
    %p281 = scmp.eq.s32.totalorder %s28, 1
    %p282 = por %p280, %p281
    %p284 = scmp.ne.s32.totalorder %s269, %s283
    %p285 = scmp.eq.s32.totalorder %s28, 0
    %p286 = por %p284, %p285
    %s288 = sadd.s32 %s287, 1
    %p291 = scmp.eq.s32.totalorder %s22, 1
    %p292 = scmp.ne.s32.totalorder %s287, %s289
    %p293 = scmp.eq.s32.totalorder %s22, 0
    %p294 = por %p292, %p293
    %p295 = scmp.ne.s32.totalorder %s287, %s289
    %p296 = scmp.eq.s32.totalorder %s27, 1
    %p297 = por %p295, %p296
    %p298 = scmp.ne.s32.totalorder %s289, %s290
    %p299 = scmp.eq.s32.totalorder %s27, 0
    %p300 = por %p298, %p299
    %p301 = scmp.ne.s32.totalorder %s289, %s290
    %p302 = scmp.eq.s32.totalorder %s28, 1
    %p303 = por %p301, %p302
    %p305 = scmp.ne.s32.totalorder %s290, %s304
    %p306 = scmp.eq.s32.totalorder %s28, 0
    %p307 = por %p305, %p306
    %s309 = sadd.s32 %s308, 1
    %p312 = scmp.eq.s32.totalorder %s22, 1
    %p313 = scmp.ne.s32.totalorder %s308, %s310
    %p314 = scmp.eq.s32.totalorder %s22, 0
    %p315 = por %p313, %p314
    %p316 = scmp.ne.s32.totalorder %s308, %s310
    %p317 = scmp.eq.s32.totalorder %s27, 1
    %p318 = por %p316, %p317
    %p319 = scmp.ne.s32.totalorder %s310, %s311
    %p320 = scmp.eq.s32.totalorder %s27, 0
    %p321 = por %p319, %p320
    %p322 = scmp.ne.s32.totalorder %s310, %s311
    %p323 = scmp.eq.s32.totalorder %s28, 1
    %p324 = por %p322, %p323
    %p326 = scmp.ne.s32.totalorder %s311, %s325
    %p327 = scmp.eq.s32.totalorder %s28, 0
    %p328 = por %p326, %p327
    %s330 = sadd.s32 %s329, 1
    %p333 = scmp.eq.s32.totalorder %s22, 1
    %p334 = scmp.ne.s32.totalorder %s329, %s331
    %p335 = scmp.eq.s32.totalorder %s22, 0
    %p336 = por %p334, %p335
    %p337 = scmp.ne.s32.totalorder %s329, %s331
    %p338 = scmp.eq.s32.totalorder %s27, 1
    %p339 = por %p337, %p338
    %p340 = scmp.ne.s32.totalorder %s331, %s332
    %p341 = scmp.eq.s32.totalorder %s27, 0
    %p342 = por %p340, %p341
    %p343 = scmp.ne.s32.totalorder %s331, %s332
    %p344 = scmp.eq.s32.totalorder %s28, 1
    %p345 = por %p343, %p344
    %p347 = scmp.ne.s32.totalorder %s332, %s346
    %p348 = scmp.eq.s32.totalorder %s28, 0
    %p349 = por %p347, %p348
    %s351 = sadd.s32 %s350, 1
    %p354 = scmp.eq.s32.totalorder %s22, 1
    %p355 = scmp.ne.s32.totalorder %s350, %s352
    %p356 = scmp.eq.s32.totalorder %s22, 0
    %p357 = por %p355, %p356
    %p358 = scmp.ne.s32.totalorder %s350, %s352
    %p359 = scmp.eq.s32.totalorder %s27, 1
    %p360 = por %p358, %p359
    %p361 = scmp.ne.s32.totalorder %s352, %s353
    %p362 = scmp.eq.s32.totalorder %s27, 0
    %p363 = por %p361, %p362
    %p364 = scmp.ne.s32.totalorder %s352, %s353
    %p365 = scmp.eq.s32.totalorder %s28, 1
    %p366 = por %p364, %p365
    %p368 = scmp.ne.s32.totalorder %s353, %s367
    %p369 = scmp.eq.s32.totalorder %s28, 0
    %p370 = por %p368, %p369
    %s371 = ssub.s32 %s22, %s29
    %p372 = scmp.eq.s32.totalorder %s371, 0
    %s374 = sadd.s32 %s373, 1
    %s375 = scalar_select %p372, %s373, %s374
    %p378 = pneg %p372
    %p379 = scmp.eq.s32.totalorder %s22, 1
    %p380 = por %p378, %p379
    %p381 = scmp.ne.s32.totalorder %s373, %s376
    %p382 = scmp.eq.s32.totalorder %s22, 0
    %p383 = por %p381, %p382
    %p384 = scmp.ne.s32.totalorder %s373, %s376
    %p385 = scmp.eq.s32.totalorder %s27, 1
    %p386 = por %p384, %p385
    %p387 = scmp.ne.s32.totalorder %s376, %s377
    %p388 = scmp.eq.s32.totalorder %s27, 0
    %p389 = por %p387, %p388
    %p390 = scmp.ne.s32.totalorder %s376, %s377
    %p391 = scmp.eq.s32.totalorder %s28, 1
    %p392 = por %p390, %p391
    %p394 = scmp.ne.s32.totalorder %s377, %s393
    %p395 = scmp.eq.s32.totalorder %s28, 0
    %p396 = por %p394, %p395
    %p397 = scmp.le.s32.totalorder 1, %s22
    %p398 = scmp.lt.s32.totalorder %s22, 3
    %p399 = pnand %p397, %p398
    %p400 = pneg %p399
    // Predicated region
    $region9: #{encoder_forward.1} parent=5 // pred_check
      _
    $region10: #{encoder_forward.1} parent=5 // pred_check_branch
      %402 = sbr.rel (%p399) target = $region12
    $region11: #{encoder_forward.1} parent=5 // pred_region
      %s403 = ssub.s32 %s22, 1
      // Predicated region
      $region13: #{encoder_forward.1} parent=11 // pred_check
        %p404 = pneg %p69
      $region14: #{encoder_forward.1} parent=11 // pred_check_branch
        %406 = sbr.rel (%p404) target = $region16
      $region15: #{encoder_forward.1} parent=11 // pred_region
        _
      $region16: #{encoder_forward.1} parent=11 // pred_fallthru
        _
      // Predicated region
      $region17: #{encoder_forward.1} parent=11 // pred_check
        %p407 = pneg %p90
      $region18: #{encoder_forward.1} parent=11 // pred_check_branch
        %409 = sbr.rel (%p407) target = $region20
      $region19: #{encoder_forward.1} parent=11 // pred_region
        _
      $region20: #{encoder_forward.1} parent=11 // pred_fallthru
        _
      // Predicated region
      $region21: #{encoder_forward.1} parent=11 // pred_check
        %p410 = pneg %p111
      $region22: #{encoder_forward.1} parent=11 // pred_check_branch
        %412 = sbr.rel (%p410) target = $region24
      $region23: #{encoder_forward.1} parent=11 // pred_region
        _
      $region24: #{encoder_forward.1} parent=11 // pred_fallthru
        _
      // Predicated region
      $region25: #{encoder_forward.1} parent=11 // pred_check
        %p413 = pneg %p132
      $region26: #{encoder_forward.1} parent=11 // pred_check_branch
        %415 = sbr.rel (%p413) target = $region28
      $region27: #{encoder_forward.1} parent=11 // pred_region
        _
      $region28: #{encoder_forward.1} parent=11 // pred_fallthru
        _
      // Predicated region
      $region29: #{encoder_forward.1} parent=11 // pred_check
        %p416 = pneg %p153
      $region30: #{encoder_forward.1} parent=11 // pred_check_branch
        %418 = sbr.rel (%p416) target = $region32
      $region31: #{encoder_forward.1} parent=11 // pred_region
        _
      $region32: #{encoder_forward.1} parent=11 // pred_fallthru
        _
      // Predicated region
      $region33: #{encoder_forward.1} parent=11 // pred_check
        %p419 = pneg %p174
      $region34: #{encoder_forward.1} parent=11 // pred_check_branch
        %421 = sbr.rel (%p419) target = $region36
      $region35: #{encoder_forward.1} parent=11 // pred_region
        _
      $region36: #{encoder_forward.1} parent=11 // pred_fallthru
        _
      // Predicated region
      $region37: #{encoder_forward.1} parent=11 // pred_check
        %p422 = pneg %p195
      $region38: #{encoder_forward.1} parent=11 // pred_check_branch
        %424 = sbr.rel (%p422) target = $region40
      $region39: #{encoder_forward.1} parent=11 // pred_region
        _
      $region40: #{encoder_forward.1} parent=11 // pred_fallthru
        _
      // Predicated region
      $region41: #{encoder_forward.1} parent=11 // pred_check
        %p425 = pneg %p216
      $region42: #{encoder_forward.1} parent=11 // pred_check_branch
        %427 = sbr.rel (%p425) target = $region44
      $region43: #{encoder_forward.1} parent=11 // pred_region
        _
      $region44: #{encoder_forward.1} parent=11 // pred_fallthru
        _
      // Predicated region
      $region45: #{encoder_forward.1} parent=11 // pred_check
        %p428 = pneg %p237
      $region46: #{encoder_forward.1} parent=11 // pred_check_branch
        %430 = sbr.rel (%p428) target = $region48
      $region47: #{encoder_forward.1} parent=11 // pred_region
        _
      $region48: #{encoder_forward.1} parent=11 // pred_fallthru
        _
      // Predicated region
      $region49: #{encoder_forward.1} parent=11 // pred_check
        %p431 = pneg %p258
      $region50: #{encoder_forward.1} parent=11 // pred_check_branch
        %433 = sbr.rel (%p431) target = $region52
      $region51: #{encoder_forward.1} parent=11 // pred_region
        _
      $region52: #{encoder_forward.1} parent=11 // pred_fallthru
        _
      // Predicated region
      $region53: #{encoder_forward.1} parent=11 // pred_check
        %p434 = pneg %p279
      $region54: #{encoder_forward.1} parent=11 // pred_check_branch
        %436 = sbr.rel (%p434) target = $region56
      $region55: #{encoder_forward.1} parent=11 // pred_region
        _
      $region56: #{encoder_forward.1} parent=11 // pred_fallthru
        _
      // Predicated region
      $region57: #{encoder_forward.1} parent=11 // pred_check
        %p437 = pneg %p300
      $region58: #{encoder_forward.1} parent=11 // pred_check_branch
        %439 = sbr.rel (%p437) target = $region60
      $region59: #{encoder_forward.1} parent=11 // pred_region
        _
      $region60: #{encoder_forward.1} parent=11 // pred_fallthru
        _
      // Predicated region
      $region61: #{encoder_forward.1} parent=11 // pred_check
        %p440 = pneg %p321
      $region62: #{encoder_forward.1} parent=11 // pred_check_branch
        %442 = sbr.rel (%p440) target = $region64
      $region63: #{encoder_forward.1} parent=11 // pred_region
        _
      $region64: #{encoder_forward.1} parent=11 // pred_fallthru
        _
      // Predicated region
      $region65: #{encoder_forward.1} parent=11 // pred_check
        %p443 = pneg %p342
      $region66: #{encoder_forward.1} parent=11 // pred_check_branch
        %445 = sbr.rel (%p443) target = $region68
      $region67: #{encoder_forward.1} parent=11 // pred_region
        _
      $region68: #{encoder_forward.1} parent=11 // pred_fallthru
        _
      // Predicated region
      $region69: #{encoder_forward.1} parent=11 // pred_check
        %p446 = pneg %p363
      $region70: #{encoder_forward.1} parent=11 // pred_check_branch
        %448 = sbr.rel (%p446) target = $region72
      $region71: #{encoder_forward.1} parent=11 // pred_region
        _
      $region72: #{encoder_forward.1} parent=11 // pred_fallthru
        _
    $region12: #{encoder_forward.1} parent=5 // pred_fallthru
      _
    %p449 = scmp.lt.s32.totalorder %s22, 2
    // Predicated region
    $region73: #{encoder_forward.1} parent=5 // pred_check
      %p450 = pneg %p449
    $region74: #{encoder_forward.1} parent=5 // pred_check_branch
      %452 = sbr.rel (%p450) target = $region76
    $region75: #{encoder_forward.1} parent=5 // pred_region
      // Predicated region
      $region77: #{encoder_forward.1} parent=75 // pred_check
        %p453 = pneg %p42
      $region78: #{encoder_forward.1} parent=75 // pred_check_branch
        %455 = sbr.rel (%p453) target = $region80
      $region79: #{encoder_forward.1} parent=75 // pred_region
        %p456 = scmp.lt.s32.totalorder %s22, 1
        %s457 = scalar_select %p456, %s22, 1
        %s458 = smul.addr %s457, 3
        %s459 = smul.addr %s458, 4
        %s460 = scalar_lea.vmem %s0, %s459
      $region80: #{encoder_forward.1} parent=75 // pred_fallthru
        _
    $region76: #{encoder_forward.1} parent=5 // pred_fallthru
      _
    %p461 = scmp.le.s32.totalorder 1, %s22
    %p462 = scmp.lt.s32.totalorder %s22, 3
    %p463 = pnand %p461, %p462
    %p464 = pneg %p463
    // Predicated region
    $region81: #{encoder_forward.1} parent=5 // pred_check
      _
    $region82: #{encoder_forward.1} parent=5 // pred_check_branch
      %466 = sbr.rel (%p463) target = $region84
    $region83: #{encoder_forward.1} parent=5 // pred_region
      %s467 = ssub.s32 %s22, 1
      %p468 = scmp.lt.s32.totalorder %s27, 1
      %s469 = scalar_select %p468, %s27, 1
      %s470 = smul.addr %s469, 3
      %s471 = smul.addr %s470, 4
      %s472 = scalar_lea.vmem %s0, %s471
      %p473 = pneg %p48
      %p474 = pneg %p45
      %p475 = pneg %p69
      %p476 = pneg %p66
      %p477 = pneg %p90
      %p478 = pneg %p87
      %p479 = pneg %p111
      %p480 = pneg %p108
      %p481 = pneg %p132
      %p482 = pneg %p129
      %p483 = pneg %p153
      %p484 = pneg %p150
      %p485 = pneg %p174
      %p486 = pneg %p171
      %p487 = pneg %p195
      %p488 = pneg %p192
      %p489 = pneg %p216
      %p490 = pneg %p213
      %p491 = pneg %p237
      %p492 = pneg %p234
      %p493 = pneg %p258
      %p494 = pneg %p255
      %p495 = pneg %p279
      %p496 = pneg %p276
      %p497 = pneg %p300
      %p498 = pneg %p297
      %p499 = pneg %p321
      %p500 = pneg %p318
      %p501 = pneg %p342
      %p502 = pneg %p339
      %p503 = pneg %p363
      %p504 = pneg %p360
      %p505 = pneg %p389
      %p506 = pneg %p386
      %p507 = scmp.lt.s32.totalorder %s27, 1
      %s508 = scalar_select %p507, %s27, 1
      %s509 = smul.addr %s508, 4
      %s510 = smul.addr %s509, 8
      %s511 = scalar_lea.vmem %s16, %s510
      %p512 = scmp.lt.s32.totalorder %s27, 1
      %s513 = scalar_select %p512, %s27, 1
      %s514 = smul.addr %s513, 3
      %s515 = smul.addr %s514, 4
      %s516 = scalar_lea.vmem %s0, %s515
      %p517 = scmp.lt.s32.totalorder %s27, 1
      %s518 = scalar_select %p517, %s27, 1
      %s519 = smul.addr %s518, 4
      %s520 = smul.addr %s519, 8
      %s521 = scalar_lea.vmem %s16, %s520
      %v525 = vld [vmem:[%s516] sm:$0xff]
      %v526 = vld [vmem:[%s516 + $0x8] sm:$0xf]
      %v527 = vlaneseq
      %v528 = vand.u32 %v527, 127
      %v529 = vadd.s32 %v528, 128
      %v530 = vand.u32 %v528, 15
      %v531 = vand.u32 %v529, 15
      %vm532 = vcmp.ge.s32.totalorder %v530, 1
      %vm533 = vcmp.ge.s32.totalorder %v531, 1
      %vm534 = vcmp.le.s32.totalorder %v530, 14
      %vm535 = vcmp.le.s32.totalorder %v531, 14
      %vm536 = vmpackc.low %vm533, %vm532
      %v537 = vsel %vm536, %v525, 0
      %538 = vst [vmem:[#allocation6] sm:$0xff] %v537
      %541 = vrot.lane.b32.xlu0 %v525, 127
      %v542 = vpop.permute.xlu0 %541
      %543 = vrot.lane.b32.xlu0 %v526, 127
      %v544 = vpop.permute.xlu0 %543
      %v545 = vrot.slane %v542, 4
      %v546 = vrot.slane %v544, 4
      %vm547 = vcmask 1043456
      %v548 = vsel %vm547, %v545, %v546
      %vm549 = vcmask 1039360
      %v550 = vsel %vm549, %v542, %v548
      %552 = vst [vmem:[#allocation6 + $0x8] sm:$0xff] %v550
      %vm553 = vmpackc.low %vm535, %vm534
      %v554 = vsel %vm553, 65537, 0
      %555 = vrot.lane.b32.xlu0 %v554, 2
      %v556 = vpop.permute.xlu0 %555
      %v557 = vrot.slane %v556, 4
      %vm558 = vcmask 15360
      %v559 = vsel %vm558, %v557, %v556
      %vm560 = vcmp.ne.s16.totalorder %v559, 0
      %vm561 = vcmp.ne.s16.totalorder %v557, 0
      %v562 = vsel %vm560, %v525, 0
      %v563 = vsel %vm561, %v526, 0
      %566 = vrot.lane.b32.xlu0 %v562, 126
      %v567 = vpop.permute.xlu0 %566
      %568 = vrot.lane.b32.xlu0 %v563, 126
      %v569 = vpop.permute.xlu0 %568
      %v570 = vrot.slane %v567, 4
      %v571 = vrot.slane %v569, 4
      %v572 = vsel %vm547, %v570, %v571
      %vm573 = vcmask 1031168
      %v574 = vsel %vm573, %v567, %v572
      %576 = vst [vmem:[#allocation6 + $0x10] sm:$0xff] %v574
      %v577 = vsel %vm536, 65537, 0
      %578 = vrot.lane.b32.xlu0 %v577, 16
      %v579 = vpop.permute.xlu0 %578
      %v580 = vrot.slane %v579, 4
      %vm581 = vcmask 130048
      %v582 = vsel %vm581, %v580, %v579
      %vm583 = vcmp.ne.s16.totalorder %v582, 0
      %vm584 = vcmp.ne.s16.totalorder %v580, 0
      %v585 = vsel %vm583, %v525, 0
      %v586 = vsel %vm584, %v526, 0
      %589 = vrot.lane.b32.xlu0 %v585, 112
      %v590 = vpop.permute.xlu0 %589
      %591 = vrot.lane.b32.xlu0 %v586, 112
      %v592 = vpop.permute.xlu0 %591
      %v593 = vrot.slane %v590, 4
      %v594 = vrot.slane %v592, 4
      %v595 = vsel %vm547, %v593, %v594
      %vm596 = vcmask 916480
      %v597 = vsel %vm596, %v590, %v595
      %599 = vst [vmem:[#allocation6 + $0x18] sm:$0xff] %v597
      %600 = vrot.lane.b32.xlu0 %v525, 111
      %v601 = vpop.permute.xlu0 %600
      %602 = vrot.lane.b32.xlu0 %v526, 111
      %v603 = vpop.permute.xlu0 %602
      %v604 = vrot.slane %v601, 4
      %v605 = vrot.slane %v603, 4
      %v606 = vsel %vm547, %v604, %v605
      %vm607 = vcmask 908288
      %v608 = vsel %vm607, %v601, %v606
      %610 = vst [vmem:[#allocation6 + $0x20] sm:$0xff] %v608
      %611 = vrot.lane.b32.xlu0 %v554, 18
      %v612 = vpop.permute.xlu0 %611
      %v613 = vrot.slane %v612, 4
      %vm614 = vcmask 146432
      %v615 = vsel %vm614, %v613, %v612
      %vm616 = vcmp.ne.s16.totalorder %v615, 0
      %vm617 = vcmp.ne.s16.totalorder %v613, 0
      %v618 = vsel %vm616, %v525, 0
      %v619 = vsel %vm617, %v526, 0
      %622 = vrot.lane.b32.xlu0 %v618, 110
      %v623 = vpop.permute.xlu0 %622
      %624 = vrot.lane.b32.xlu0 %v619, 110
      %v625 = vpop.permute.xlu0 %624
      %v626 = vrot.slane %v623, 4
      %v627 = vrot.slane %v625, 4
      %v628 = vsel %vm547, %v626, %v627
      %vm629 = vcmask 900096
      %v630 = vsel %vm629, %v623, %v628
      %632 = vst [vmem:[#allocation6 + $0x28] sm:$0xff] %v630
      %633 = vrot.lane.b32.xlu0 %v577, 32
      %v634 = vpop.permute.xlu0 %633
      %v635 = vrot.slane %v634, 4
      %vm636 = vcmask 261120
      %v637 = vsel %vm636, %v635, %v634
      %vm638 = vcmp.ne.s16.totalorder %v637, 0
      %vm639 = vcmp.ne.s16.totalorder %v635, 0
      %v640 = vsel %vm638, %v525, 0
      %v641 = vsel %vm639, %v526, 0
      %644 = vrot.lane.b32.xlu0 %v640, 96
      %v645 = vpop.permute.xlu0 %644
      %646 = vrot.lane.b32.xlu0 %v641, 96
      %v647 = vpop.permute.xlu0 %646
      %v648 = vrot.slane %v645, 4
      %v649 = vrot.slane %v647, 4
      %v650 = vsel %vm547, %v648, %v649
      %vm651 = vcmask 785408
      %v652 = vsel %vm651, %v645, %v650
      %654 = vst [vmem:[#allocation6 + $0x30] sm:$0xff] %v652
      %655 = vrot.lane.b32.xlu0 %v525, 95
      %v656 = vpop.permute.xlu0 %655
      %657 = vrot.lane.b32.xlu0 %v526, 95
      %v658 = vpop.permute.xlu0 %657
      %v659 = vrot.slane %v656, 4
      %v660 = vrot.slane %v658, 4
      %v661 = vsel %vm547, %v659, %v660
      %vm662 = vcmask 777216
      %v663 = vsel %vm662, %v656, %v661
      %665 = vst [vmem:[#allocation6 + $0x38] sm:$0xff] %v663
      %666 = vrot.lane.b32.xlu0 %v554, 34
      %v667 = vpop.permute.xlu0 %666
      %v668 = vrot.slane %v667, 4
      %vm669 = vcmask 277504
      %v670 = vsel %vm669, %v668, %v667
      %vm671 = vcmp.ne.s16.totalorder %v670, 0
      %vm672 = vcmp.ne.s16.totalorder %v668, 0
      %v673 = vsel %vm671, %v525, 0
      %v674 = vsel %vm672, %v526, 0
      %677 = vrot.lane.b32.xlu0 %v673, 94
      %v678 = vpop.permute.xlu0 %677
      %679 = vrot.lane.b32.xlu0 %v674, 94
      %v680 = vpop.permute.xlu0 %679
      %v681 = vrot.slane %v678, 4
      %v682 = vrot.slane %v680, 4
      %v683 = vsel %vm547, %v681, %v682
      %vm684 = vcmask 769024
      %v685 = vsel %vm684, %v678, %v683
      %687 = vst [vmem:[#allocation6 + $0x40] sm:$0xff] %v685
      %v688 = vld [vmem:[%s1] sm:$0xf]
      %v689 = vld [vmem:[%s1 + $0x4] sm:$0xf]
      %v690 = vld [vmem:[%s1 + $0x8] sm:$0xf]
      %v691 = vld [vmem:[%s1 + $0xc] sm:$0xf]
      %v692 = vld [vmem:[#allocation6] sm:$0xff]
      %v693 = vld [vmem:[#allocation6 + $0x8] sm:$0xff]
      %v694 = vld [vmem:[#allocation6 + $0x10] sm:$0xff]
      %v695 = vld [vmem:[#allocation6 + $0x18] sm:$0xff]
      %v696 = vld [vmem:[#allocation6 + $0x20] sm:$0xff]
      %v697 = vld [vmem:[#allocation6 + $0x28] sm:$0xff]
      %v698 = vld [vmem:[#allocation6 + $0x30] sm:$0xff]
      %v699 = vld [vmem:[#allocation6 + $0x38] sm:$0xff]
      %v700 = vld [vmem:[#allocation6 + $0x40] sm:$0xff]
      %v705 = vunpack.c.l.b16 %v688
      %v706 = vunpack.c.l.b16 %v689
      %v707 = vunpack.c.l.b16 %v690
      %v708 = vunpack.c.l.b16 %v691
      %v709 = vpack.c.b16 %v706, %v705
      %v710 = vpack.c.b16 %v708, %v707
      %v720 = vunpack.c.l.b16 %v692
      %v721 = vunpack.c.h.b16 %v692
      %v722 = vunpack.c.l.b16 %v693
      %v723 = vunpack.c.h.b16 %v693
      %v724 = vunpack.c.l.b16 %v694
      %v725 = vunpack.c.h.b16 %v694
      %v726 = vunpack.c.l.b16 %v695
      %v727 = vunpack.c.h.b16 %v695
      %v728 = vunpack.c.l.b16 %v696
      %v729 = vunpack.c.h.b16 %v696
      %v730 = vunpack.c.l.b16 %v697
      %v731 = vunpack.c.h.b16 %v697
      %v732 = vunpack.c.l.b16 %v698
      %v733 = vunpack.c.h.b16 %v698
      %v734 = vunpack.c.l.b16 %v699
      %v735 = vunpack.c.h.b16 %v699
      %v736 = vunpack.c.l.b16 %v700
      %v737 = vunpack.c.h.b16 %v700
      %v738 = vpack.c.b16 %v722, %v720
      %v739 = vpack.c.b16 %v723, %v721
      %v740 = vpack.c.b16 %v726, %v724
      %v741 = vpack.c.b16 %v727, %v725
      %v742 = vpack.c.b16 %v730, %v728
      %v743 = vpack.c.b16 %v731, %v729
      %v744 = vpack.c.b16 %v734, %v732
      %v745 = vpack.c.b16 %v735, %v733
      %v746 = vpack.c.b16 %v736, %v736
      %v747 = vpack.c.b16 %v737, %v737
      %vm756 = vcmask 588800
      %v758 = vsel %vm756, %v709, 0
      %v761 = vsel %vm756, %v710, 0
      %vm763 = vcmask 1043456
      %v765 = vsel %vm763, %v746, 0
      %v768 = vsel %vm763, %v747, 0
      %770 = vmatprep.subr.bf16.mxu0 0
      %771 = vmatpush1.bf16.msra.mxu0 0
      %772 = vmatprep.subr.bf16.mxu0 0
      %773 = vmatpush1.bf16.msra.mxu0 0
      %774 = vmatprep.subr.bf16.mxu0 0
      %775 = vmatpush1.bf16.msra.mxu0 0
      %776 = vmatprep.subr.bf16.mxu0 %v768
      %777 = vmatpush1.bf16.msra.mxu0 %v765
      %778 = vmatprep.subr.bf16.mxu0 %v745
      %779 = vmatpush1.bf16.msra.mxu0 %v744
      %780 = vmatprep.subr.bf16.mxu0 %v743
      %781 = vmatpush1.bf16.msra.mxu0 %v742
      %782 = vmatprep.subr.bf16.mxu0 %v741
      %783 = vmatpush1.bf16.msra.mxu0 %v740
      %784 = vmatprep.subr.bf16.mxu0 %v739
      %785 = vmatpush1.bf16.msra.mxu0 %v738
      %786 = vmatprep.subr.bf16.mxu0 0
      %787 = vmatpush2.bf16.msra.mxu0 0
      %788 = vmatprep.subr.bf16.mxu0 0
      %789 = vmatpush2.bf16.msra.mxu0 0
      %790 = vmatprep.subr.bf16.mxu0 0
      %791 = vmatpush2.bf16.msra.mxu0 0
      %792 = vmatprep.subr.bf16.mxu0 0
      %793 = vmatpush2.bf16.msra.mxu0 0
      %794 = vmatprep.subr.bf16.mxu0 0
      %795 = vmatpush2.bf16.msra.mxu0 0
      %796 = vmatprep.subr.bf16.mxu0 0
      %797 = vmatpush2.bf16.msra.mxu0 0
      %798 = vmatprep.subr.bf16.mxu0 0
      %799 = vmatpush2.bf16.msra.mxu0 0
      %800 = vmatprep.subr.bf16.mxu0 0
      %801 = vmatpush2.bf16.msra.mxu0 0
      %802 = vmatprep.mubr.bf16.mxu0 0
      %803 = vmatmul.mubr.bf16.gmra.mxu0 %v758
      %v804 = vpop.f32.mrf.mxu0
      %v805 = vadd.f32 0.0, %v804
      %v806 = vpop.f32.mrf.mxu0
      %v807 = vadd.f32 0.0, %v806
      %v808 = vpop.f32.mrf.mxu0
      %v809 = vadd.f32 0.0, %v808
      %v810 = vpop.f32.mrf.mxu0
      %v811 = vadd.f32 0.0, %v810
      %812 = vmatprep.mubr.bf16.mxu0 0
      %813 = vmatmul.mubr.bf16.gmra.mxu0 %v761
      %v814 = vpop.f32.mrf.mxu0
      %v815 = vadd.f32 0.0, %v814
      %v816 = vpop.f32.mrf.mxu0
      %v817 = vadd.f32 0.0, %v816
      %v818 = vpop.f32.mrf.mxu0
      %v819 = vadd.f32 0.0, %v818
      %v820 = vpop.f32.mrf.mxu0
      %v821 = vadd.f32 0.0, %v820
      %822 = vdwg.mxu0
      %v823 = vpack.c.bf16 %v809, %v805
      %v824 = vpack.c.bf16 %v811, %v807
      %v825 = vpack.c.bf16 %v819, %v815
      %v826 = vpack.c.bf16 %v821, %v817
      %v827 = vld [vmem:[%s3] sm:$0xf]
      %v828 = vld [vmem:[%s3 + $0x4] sm:$0xf]
      %v829 = vld [vmem:[%s3 + $0x8] sm:$0xf]
      %v830 = vld [vmem:[%s3 + $0xc] sm:$0xf]
      %v831 = vld [vmem:[%s3 + $0x10] sm:$0xf]
      %v832 = vld [vmem:[%s3 + $0x14] sm:$0xf]
      %v833 = vld [vmem:[%s3 + $0x18] sm:$0xf]
      %v834 = vld [vmem:[%s3 + $0x1c] sm:$0xf]
      %v835 = vld [vmem:[%s3 + $0x20] sm:$0xf]
      %v836 = vld [vmem:[%s3 + $0x24] sm:$0xf]
      %v837 = vld [vmem:[%s3 + $0x28] sm:$0xf]
      %v838 = vld [vmem:[%s3 + $0x2c] sm:$0xf]
      %v839 = vld [vmem:[%s3 + $0x30] sm:$0xf]
      %v840 = vld [vmem:[%s3 + $0x34] sm:$0xf]
      %v841 = vld [vmem:[%s3 + $0x38] sm:$0xf]
      %v842 = vld [vmem:[%s3 + $0x3c] sm:$0xf]
      %v843 = vld [vmem:[%s3 + $0x40] sm:$0xf]
      %v844 = vld [vmem:[%s3 + $0x44] sm:$0xf]
      %v845 = vld [vmem:[%s3 + $0x48] sm:$0xf]
      %v846 = vld [vmem:[%s3 + $0x4c] sm:$0xf]
      %v847 = vld [vmem:[%s3 + $0x50] sm:$0xf]
      %v848 = vld [vmem:[%s3 + $0x54] sm:$0xf]
      %v849 = vld [vmem:[%s3 + $0x58] sm:$0xf]
      %v850 = vld [vmem:[%s3 + $0x5c] sm:$0xf]
      %v851 = vld [vmem:[%s3 + $0x60] sm:$0xf]
      %v852 = vld [vmem:[%s3 + $0x64] sm:$0xf]
      %v853 = vld [vmem:[%s3 + $0x68] sm:$0xf]
      %v854 = vld [vmem:[%s3 + $0x6c] sm:$0xf]
      %v855 = vld [vmem:[%s3 + $0x70] sm:$0xf]
      %v856 = vld [vmem:[%s3 + $0x74] sm:$0xf]
      %v857 = vld [vmem:[%s3 + $0x78] sm:$0xf]
      %v858 = vld [vmem:[%s3 + $0x7c] sm:$0xf]
      %v859 = vld [vmem:[%s2] sm:$0xff]
      %v860 = vld [vmem:[%s2 + $0x8] sm:$0xff]
      %v861 = vld [vmem:[%s2 + $0x10] sm:$0xff]
      %v862 = vld [vmem:[%s2 + $0x18] sm:$0xff]
      %864 = vset.pattern.permute.xlu0 0
      %865 = vperm.xlu0 %864, %v859
      %v866 = vpop.permute.xlu0 %865
      %869 = vset.pattern.permute.xlu0 0
      %870 = vperm.xlu0 %869, %v860
      %v871 = vpop.permute.xlu0 %870
      %874 = vset.pattern.permute.xlu0 0
      %875 = vperm.xlu0 %874, %v861
      %v876 = vpop.permute.xlu0 %875
      %879 = vset.pattern.permute.xlu0 0
      %880 = vperm.xlu0 %879, %v862
      %v881 = vpop.permute.xlu0 %880
      %v915 = vunpack.c.l.b16 %v827
      %v916 = vunpack.c.l.b16 %v828
      %v917 = vunpack.c.l.b16 %v829
      %v918 = vunpack.c.l.b16 %v830
      %v919 = vunpack.c.l.b16 %v831
      %v920 = vunpack.c.l.b16 %v832
      %v921 = vunpack.c.l.b16 %v833
      %v922 = vunpack.c.l.b16 %v834
      %v923 = vunpack.c.l.b16 %v835
      %v924 = vunpack.c.l.b16 %v836
      %v925 = vunpack.c.l.b16 %v837
      %v926 = vunpack.c.l.b16 %v838
      %v927 = vunpack.c.l.b16 %v839
      %v928 = vunpack.c.l.b16 %v840
      %v929 = vunpack.c.l.b16 %v841
      %v930 = vunpack.c.l.b16 %v842
      %v931 = vunpack.c.l.b16 %v843
      %v932 = vunpack.c.l.b16 %v844
      %v933 = vunpack.c.l.b16 %v845
      %v934 = vunpack.c.l.b16 %v846
      %v935 = vunpack.c.l.b16 %v847
      %v936 = vunpack.c.l.b16 %v848
      %v937 = vunpack.c.l.b16 %v849
      %v938 = vunpack.c.l.b16 %v850
      %v939 = vunpack.c.l.b16 %v851
      %v940 = vunpack.c.l.b16 %v852
      %v941 = vunpack.c.l.b16 %v853
      %v942 = vunpack.c.l.b16 %v854
      %v943 = vunpack.c.l.b16 %v855
      %v944 = vunpack.c.l.b16 %v856
      %v945 = vunpack.c.l.b16 %v857
      %v946 = vunpack.c.l.b16 %v858
      %v947 = vpack.c.b16 %v916, %v915
      %v948 = vpack.c.b16 %v918, %v917
      %v949 = vpack.c.b16 %v920, %v919
      %v950 = vpack.c.b16 %v922, %v921
      %v951 = vpack.c.b16 %v924, %v923
      %v952 = vpack.c.b16 %v926, %v925
      %v953 = vpack.c.b16 %v928, %v927
      %v954 = vpack.c.b16 %v930, %v929
      %v955 = vpack.c.b16 %v932, %v931
      %v956 = vpack.c.b16 %v934, %v933
      %v957 = vpack.c.b16 %v936, %v935
      %v958 = vpack.c.b16 %v938, %v937
      %v959 = vpack.c.b16 %v940, %v939
      %v960 = vpack.c.b16 %v942, %v941
      %v961 = vpack.c.b16 %v944, %v943
      %v962 = vpack.c.b16 %v946, %v945
      %979 = vmatprep.subr.bf16.mxu0 0
      %980 = vmatpush1.bf16.msra.mxu0 %v954
      %981 = vmatprep.subr.bf16.mxu0 0
      %982 = vmatpush1.bf16.msra.mxu0 %v953
      %983 = vmatprep.subr.bf16.mxu0 0
      %984 = vmatpush1.bf16.msra.mxu0 %v952
      %985 = vmatprep.subr.bf16.mxu0 0
      %986 = vmatpush1.bf16.msra.mxu0 %v951
      %987 = vmatprep.subr.bf16.mxu0 0
      %988 = vmatpush1.bf16.msra.mxu0 %v950
      %989 = vmatprep.subr.bf16.mxu0 0
      %990 = vmatpush1.bf16.msra.mxu0 %v949
      %991 = vmatprep.subr.bf16.mxu0 0
      %992 = vmatpush1.bf16.msra.mxu0 %v948
      %993 = vmatprep.subr.bf16.mxu0 0
      %994 = vmatpush1.bf16.msra.mxu0 %v947
      %995 = vmatprep.subr.bf16.mxu0 0
      %996 = vmatpush2.bf16.msra.mxu0 %v962
      %997 = vmatprep.subr.bf16.mxu0 0
      %998 = vmatpush2.bf16.msra.mxu0 %v961
      %999 = vmatprep.subr.bf16.mxu0 0
      %1000 = vmatpush2.bf16.msra.mxu0 %v960
      %1001 = vmatprep.subr.bf16.mxu0 0
      %1002 = vmatpush2.bf16.msra.mxu0 %v959
      %1003 = vmatprep.subr.bf16.mxu0 0
      %1004 = vmatpush2.bf16.msra.mxu0 %v958
      %1005 = vmatprep.subr.bf16.mxu0 0
      %1006 = vmatpush2.bf16.msra.mxu0 %v957
      %1007 = vmatprep.subr.bf16.mxu0 0
      %1008 = vmatpush2.bf16.msra.mxu0 %v956
      %1009 = vmatprep.subr.bf16.mxu0 0
      %1010 = vmatpush2.bf16.msra.mxu0 %v955
      %1011 = vmatprep.mubr.bf16.mxu0 %v824
      %1012 = vmatmul.mubr.bf16.gmra.mxu0 %v823
      %v1013 = vpop.f32.mrf.mxu0
      %v1014 = vadd.f32 %v866, %v1013
      %v1015 = vpop.f32.mrf.mxu0
      %v1016 = vpop.f32.mrf.mxu0
      %v1017 = vadd.f32 %v871, %v1016
      %v1018 = vpop.f32.mrf.mxu0
      %1019 = vmatprep.mubr.bf16.mxu0 %v826
      %1020 = vmatmul.mubr.bf16.gmra.mxu0 %v825
      %v1021 = vpop.f32.mrf.mxu0
      %v1022 = vadd.f32 %v876, %v1021
      %v1023 = vpop.f32.mrf.mxu0
      %v1024 = vpop.f32.mrf.mxu0
      %v1025 = vadd.f32 %v881, %v1024
      %v1026 = vpop.f32.mrf.mxu0
      %1027 = vdwg.mxu0
      %v1028 = vmul.f32 %v1014, 0.5
      %v1029 = vmul.f32 %v1017, 0.5
      %v1030 = vmul.f32 %v1022, 0.5
      %v1031 = vmul.f32 %v1025, 0.5
      %v1032 = vmul.f32 %v1014, 0.70710677
      %v1033 = vmul.f32 %v1017, 0.70710677
      %v1034 = vmul.f32 %v1022, 0.70710677
      %v1035 = vmul.f32 %v1025, 0.70710677
      %v1036 = verf.f32.pop %v1032
      %v1037 = verf.f32.pop %v1033
      %v1038 = verf.f32.pop %v1034
      %v1039 = verf.f32.pop %v1035
      %v1040 = vadd.f32 %v1036, 1.0
      %v1041 = vadd.f32 %v1037, 1.0
      %v1042 = vadd.f32 %v1038, 1.0
      %v1043 = vadd.f32 %v1039, 1.0
      %v1044 = vmul.f32 %v1028, %v1040
      %v1045 = vmul.f32 %v1029, %v1041
      %v1046 = vmul.f32 %v1030, %v1042
      %v1047 = vmul.f32 %v1031, %v1043
      %v1048 = vpack.c.bf16 %v1045, %v1044
      %v1049 = vpack.c.bf16 %v1047, %v1046
      %vm1050 = vcmask 666624
      %1051 = vst.msk [vmem:[#allocation2] sm:$0xf] %vm1050, 0
      %1052 = vst.msk [vmem:[#allocation2 + $0x4] sm:$0xf] %vm1050, 0
      %1053 = vst.msk [vmem:[#allocation2 + $0x8] sm:$0xf] %vm1050, 0
      %1054 = vst.msk [vmem:[#allocation2 + $0xc] sm:$0xf] %vm1050, 0
      %v1057 = vunpack.c.l.b16 %v1048
      %v1058 = vunpack.c.h.b16 %v1048
      %v1059 = vunpack.c.l.b16 %v1049
      %v1060 = vunpack.c.h.b16 %v1049
      %v1061 = vpack.c.b16 %v1057, %v1057
      %v1062 = vpack.c.b16 %v1058, %v1058
      %v1063 = vpack.c.b16 %v1059, %v1059
      %v1064 = vpack.c.b16 %v1060, %v1060
      %1065 = vrot.lane.b32.xlu0 %v1061, 9
      %v1066 = vpop.permute.xlu0 %1065
      %1067 = vrot.lane.b32.xlu0 %v1062, 9
      %v1068 = vpop.permute.xlu0 %1067
      %1069 = vrot.lane.b32.xlu0 %v1063, 9
      %v1070 = vpop.permute.xlu0 %1069
      %1071 = vrot.lane.b32.xlu0 %v1064, 9
      %v1072 = vpop.permute.xlu0 %1071
      %vm1077 = vcmask 592968
      %1078 = vst.msk [vmem:[#allocation2] sm:$0xf] %vm1077, %v1066
      %1079 = vst.msk [vmem:[#allocation2 + $0x4] sm:$0xf] %vm1077, %v1068
      %1080 = vst.msk [vmem:[#allocation2 + $0x8] sm:$0xf] %vm1077, %v1070
      %1081 = vst.msk [vmem:[#allocation2 + $0xc] sm:$0xf] %vm1077, %v1072
      %v1082 = vld [vmem:[#allocation2] sm:$0xf]
      %v1083 = vld [vmem:[#allocation2 + $0x4] sm:$0xf]
      %v1084 = vld [vmem:[#allocation2 + $0x8] sm:$0xf]
      %v1085 = vld [vmem:[#allocation2 + $0xc] sm:$0xf]
      %v1086 = vand.u32 %v528, 7
      %vm1087 = vcmp.ge.s32.totalorder %v1086, 1
      %vm1088 = vcmp.le.s32.totalorder %v1086, 6
      %vm1089 = vmpackc.low %vm1087, %vm1087
      %v1090 = vsel %vm1089, %v1082, 0
      %v1091 = vsel %vm1089, %v1083, 0
      %v1092 = vsel %vm1089, %v1084, 0
      %v1093 = vsel %vm1089, %v1085, 0
      %vm1094 = vcmask 519168
      %1095 = vst.msk [vmem:[#allocation7] sm:$0xf] %vm1094, %v1090
      %1096 = vst.msk [vmem:[#allocation7 + $0x4] sm:$0xf] %vm1094, %v1091
      %1097 = vst.msk [vmem:[#allocation7 + $0x8] sm:$0xf] %vm1094, %v1092
      %1098 = vst.msk [vmem:[#allocation7 + $0xc] sm:$0xf] %vm1094, %v1093
      %1103 = vrot.lane.b32.xlu0 %v1082, 127
      %v1104 = vpop.permute.xlu0 %1103
      %1105 = vrot.lane.b32.xlu0 %v1083, 127
      %v1106 = vpop.permute.xlu0 %1105
      %1107 = vrot.lane.b32.xlu0 %v1084, 127
      %v1108 = vpop.permute.xlu0 %1107
      %1109 = vrot.lane.b32.xlu0 %v1085, 127
      %v1110 = vpop.permute.xlu0 %1109
      %1115 = vst.msk [vmem:[#allocation7 + $0x10] sm:$0xf] %vm1094, %v1104
      %1116 = vst.msk [vmem:[#allocation7 + $0x14] sm:$0xf] %vm1094, %v1106
      %1117 = vst.msk [vmem:[#allocation7 + $0x18] sm:$0xf] %vm1094, %v1108
      %1118 = vst.msk [vmem:[#allocation7 + $0x1c] sm:$0xf] %vm1094, %v1110
      %vm1119 = vmpackc.low %vm1088, %vm1088
      %v1120 = vsel %vm1119, 65537, 0
      %1121 = vrot.lane.b32.xlu0 %v1120, 2
      %v1122 = vpop.permute.xlu0 %1121
      %vm1123 = vcmp.ne.s16.totalorder %v1122, 0
      %v1124 = vsel %vm1123, %v1082, 0
      %v1125 = vsel %vm1123, %v1083, 0
      %v1126 = vsel %vm1123, %v1084, 0
      %v1127 = vsel %vm1123, %v1085, 0
      %1132 = vrot.lane.b32.xlu0 %v1124, 126
      %v1133 = vpop.permute.xlu0 %1132
      %1134 = vrot.lane.b32.xlu0 %v1125, 126
      %v1135 = vpop.permute.xlu0 %1134
      %1136 = vrot.lane.b32.xlu0 %v1126, 126
      %v1137 = vpop.permute.xlu0 %1136
      %1138 = vrot.lane.b32.xlu0 %v1127, 126
      %v1139 = vpop.permute.xlu0 %1138
      %1144 = vst.msk [vmem:[#allocation7 + $0x20] sm:$0xf] %vm1094, %v1133
      %1145 = vst.msk [vmem:[#allocation7 + $0x24] sm:$0xf] %vm1094, %v1135
      %1146 = vst.msk [vmem:[#allocation7 + $0x28] sm:$0xf] %vm1094, %v1137
      %1147 = vst.msk [vmem:[#allocation7 + $0x2c] sm:$0xf] %vm1094, %v1139
      %v1148 = vsel %vm1089, 65537, 0
      %1149 = vrot.lane.b32.xlu0 %v1148, 8
      %v1150 = vpop.permute.xlu0 %1149
      %vm1151 = vcmp.ne.s16.totalorder %v1150, 0
      %v1152 = vsel %vm1151, %v1082, 0
      %v1153 = vsel %vm1151, %v1083, 0
      %v1154 = vsel %vm1151, %v1084, 0
      %v1155 = vsel %vm1151, %v1085, 0
      %1160 = vrot.lane.b32.xlu0 %v1152, 120
      %v1161 = vpop.permute.xlu0 %1160
      %1162 = vrot.lane.b32.xlu0 %v1153, 120
      %v1163 = vpop.permute.xlu0 %1162
      %1164 = vrot.lane.b32.xlu0 %v1154, 120
      %v1165 = vpop.permute.xlu0 %1164
      %1166 = vrot.lane.b32.xlu0 %v1155, 120
      %v1167 = vpop.permute.xlu0 %1166
      %1172 = vst.msk [vmem:[#allocation7 + $0x30] sm:$0xf] %vm1094, %v1161
      %1173 = vst.msk [vmem:[#allocation7 + $0x34] sm:$0xf] %vm1094, %v1163
      %1174 = vst.msk [vmem:[#allocation7 + $0x38] sm:$0xf] %vm1094, %v1165
      %1175 = vst.msk [vmem:[#allocation7 + $0x3c] sm:$0xf] %vm1094, %v1167
      %1176 = vrot.lane.b32.xlu0 %v1082, 119
      %v1177 = vpop.permute.xlu0 %1176
      %1178 = vrot.lane.b32.xlu0 %v1083, 119
      %v1179 = vpop.permute.xlu0 %1178
      %1180 = vrot.lane.b32.xlu0 %v1084, 119
      %v1181 = vpop.permute.xlu0 %1180
      %1182 = vrot.lane.b32.xlu0 %v1085, 119
      %v1183 = vpop.permute.xlu0 %1182
      %1188 = vst.msk [vmem:[#allocation7 + $0x40] sm:$0xf] %vm1094, %v1177
      %1189 = vst.msk [vmem:[#allocation7 + $0x44] sm:$0xf] %vm1094, %v1179
      %1190 = vst.msk [vmem:[#allocation7 + $0x48] sm:$0xf] %vm1094, %v1181
      %1191 = vst.msk [vmem:[#allocation7 + $0x4c] sm:$0xf] %vm1094, %v1183
      %1192 = vrot.lane.b32.xlu0 %v1120, 10
      %v1193 = vpop.permute.xlu0 %1192
      %vm1194 = vcmp.ne.s16.totalorder %v1193, 0
      %v1195 = vsel %vm1194, %v1082, 0
      %v1196 = vsel %vm1194, %v1083, 0
      %v1197 = vsel %vm1194, %v1084, 0
      %v1198 = vsel %vm1194, %v1085, 0
      %1203 = vrot.lane.b32.xlu0 %v1195, 118
      %v1204 = vpop.permute.xlu0 %1203
      %1205 = vrot.lane.b32.xlu0 %v1196, 118
      %v1206 = vpop.permute.xlu0 %1205
      %1207 = vrot.lane.b32.xlu0 %v1197, 118
      %v1208 = vpop.permute.xlu0 %1207
      %1209 = vrot.lane.b32.xlu0 %v1198, 118
      %v1210 = vpop.permute.xlu0 %1209
      %1215 = vst.msk [vmem:[#allocation7 + $0x50] sm:$0xf] %vm1094, %v1204
      %1216 = vst.msk [vmem:[#allocation7 + $0x54] sm:$0xf] %vm1094, %v1206
      %1217 = vst.msk [vmem:[#allocation7 + $0x58] sm:$0xf] %vm1094, %v1208
      %1218 = vst.msk [vmem:[#allocation7 + $0x5c] sm:$0xf] %vm1094, %v1210
      %1219 = vrot.lane.b32.xlu0 %v1148, 16
      %v1220 = vpop.permute.xlu0 %1219
      %vm1221 = vcmp.ne.s16.totalorder %v1220, 0
      %v1222 = vsel %vm1221, %v1082, 0
      %v1223 = vsel %vm1221, %v1083, 0
      %v1224 = vsel %vm1221, %v1084, 0
      %v1225 = vsel %vm1221, %v1085, 0
      %1230 = vrot.lane.b32.xlu0 %v1222, 112
      %v1231 = vpop.permute.xlu0 %1230
      %1232 = vrot.lane.b32.xlu0 %v1223, 112
      %v1233 = vpop.permute.xlu0 %1232
      %1234 = vrot.lane.b32.xlu0 %v1224, 112
      %v1235 = vpop.permute.xlu0 %1234
      %1236 = vrot.lane.b32.xlu0 %v1225, 112
      %v1237 = vpop.permute.xlu0 %1236
      %1242 = vst.msk [vmem:[#allocation7 + $0x60] sm:$0xf] %vm1094, %v1231
      %1243 = vst.msk [vmem:[#allocation7 + $0x64] sm:$0xf] %vm1094, %v1233
      %1244 = vst.msk [vmem:[#allocation7 + $0x68] sm:$0xf] %vm1094, %v1235
      %1245 = vst.msk [vmem:[#allocation7 + $0x6c] sm:$0xf] %vm1094, %v1237
      %1246 = vrot.lane.b32.xlu0 %v1082, 111
      %v1247 = vpop.permute.xlu0 %1246
      %1248 = vrot.lane.b32.xlu0 %v1083, 111
      %v1249 = vpop.permute.xlu0 %1248
      %1250 = vrot.lane.b32.xlu0 %v1084, 111
      %v1251 = vpop.permute.xlu0 %1250
      %1252 = vrot.lane.b32.xlu0 %v1085, 111
      %v1253 = vpop.permute.xlu0 %1252
      %1258 = vst.msk [vmem:[#allocation7 + $0x70] sm:$0xf] %vm1094, %v1247
      %1259 = vst.msk [vmem:[#allocation7 + $0x74] sm:$0xf] %vm1094, %v1249
      %1260 = vst.msk [vmem:[#allocation7 + $0x78] sm:$0xf] %vm1094, %v1251
      %1261 = vst.msk [vmem:[#allocation7 + $0x7c] sm:$0xf] %vm1094, %v1253
      %1262 = vrot.lane.b32.xlu0 %v1120, 18
      %v1263 = vpop.permute.xlu0 %1262
      %vm1264 = vcmp.ne.s16.totalorder %v1263, 0
      %v1265 = vsel %vm1264, %v1082, 0
      %v1266 = vsel %vm1264, %v1083, 0
      %v1267 = vsel %vm1264, %v1084, 0
      %v1268 = vsel %vm1264, %v1085, 0
      %1273 = vrot.lane.b32.xlu0 %v1265, 110
      %v1274 = vpop.permute.xlu0 %1273
      %1275 = vrot.lane.b32.xlu0 %v1266, 110
      %v1276 = vpop.permute.xlu0 %1275
      %1277 = vrot.lane.b32.xlu0 %v1267, 110
      %v1278 = vpop.permute.xlu0 %1277
      %1279 = vrot.lane.b32.xlu0 %v1268, 110
      %v1280 = vpop.permute.xlu0 %1279
      %1285 = vst.msk [vmem:[#allocation7 + $0x80] sm:$0xf] %vm1094, %v1274
      %1286 = vst.msk [vmem:[#allocation7 + $0x84] sm:$0xf] %vm1094, %v1276
      %1287 = vst.msk [vmem:[#allocation7 + $0x88] sm:$0xf] %vm1094, %v1278
      %1288 = vst.msk [vmem:[#allocation7 + $0x8c] sm:$0xf] %vm1094, %v1280
      %v1289 = vld [vmem:[%s4] sm:$0xff]
      %v1290 = vld [vmem:[%s4 + $0x8] sm:$0xf]
      %v1291 = vld [vmem:[%s4 + $0xc] sm:$0xff]
      %v1292 = vld [vmem:[%s4 + $0x14] sm:$0xf]
      %v1293 = vld [vmem:[%s4 + $0x18] sm:$0xff]
      %v1294 = vld [vmem:[%s4 + $0x20] sm:$0xf]
      %v1295 = vld [vmem:[%s4 + $0x24] sm:$0xff]
      %v1296 = vld [vmem:[%s4 + $0x2c] sm:$0xf]
      %v1297 = vld [vmem:[#allocation7] sm:$0xf]
      %v1298 = vld [vmem:[#allocation7 + $0x4] sm:$0xf]
      %v1299 = vld [vmem:[#allocation7 + $0x8] sm:$0xf]
      %v1300 = vld [vmem:[#allocation7 + $0xc] sm:$0xf]
      %v1301 = vld [vmem:[#allocation7 + $0x10] sm:$0xf]
      %v1302 = vld [vmem:[#allocation7 + $0x14] sm:$0xf]
      %v1303 = vld [vmem:[#allocation7 + $0x18] sm:$0xf]
      %v1304 = vld [vmem:[#allocation7 + $0x1c] sm:$0xf]
      %v1305 = vld [vmem:[#allocation7 + $0x20] sm:$0xf]
      %v1306 = vld [vmem:[#allocation7 + $0x24] sm:$0xf]
      %v1307 = vld [vmem:[#allocation7 + $0x28] sm:$0xf]
      %v1308 = vld [vmem:[#allocation7 + $0x2c] sm:$0xf]
      %v1309 = vld [vmem:[#allocation7 + $0x30] sm:$0xf]
      %v1310 = vld [vmem:[#allocation7 + $0x34] sm:$0xf]
      %v1311 = vld [vmem:[#allocation7 + $0x38] sm:$0xf]
      %v1312 = vld [vmem:[#allocation7 + $0x3c] sm:$0xf]
      %v1313 = vld [vmem:[#allocation7 + $0x40] sm:$0xf]
      %v1314 = vld [vmem:[#allocation7 + $0x44] sm:$0xf]
      %v1315 = vld [vmem:[#allocation7 + $0x48] sm:$0xf]
      %v1316 = vld [vmem:[#allocation7 + $0x4c] sm:$0xf]
      %v1317 = vld [vmem:[#allocation7 + $0x50] sm:$0xf]
      %v1318 = vld [vmem:[#allocation7 + $0x54] sm:$0xf]
      %v1319 = vld [vmem:[#allocation7 + $0x58] sm:$0xf]
      %v1320 = vld [vmem:[#allocation7 + $0x5c] sm:$0xf]
      %v1321 = vld [vmem:[#allocation7 + $0x60] sm:$0xf]
      %v1322 = vld [vmem:[#allocation7 + $0x64] sm:$0xf]
      %v1323 = vld [vmem:[#allocation7 + $0x68] sm:$0xf]
      %v1324 = vld [vmem:[#allocation7 + $0x6c] sm:$0xf]
      %v1325 = vld [vmem:[#allocation7 + $0x70] sm:$0xf]
      %v1326 = vld [vmem:[#allocation7 + $0x74] sm:$0xf]
      %v1327 = vld [vmem:[#allocation7 + $0x78] sm:$0xf]
      %v1328 = vld [vmem:[#allocation7 + $0x7c] sm:$0xf]
      %v1329 = vld [vmem:[#allocation7 + $0x80] sm:$0xf]
      %v1330 = vld [vmem:[#allocation7 + $0x84] sm:$0xf]
      %v1331 = vld [vmem:[#allocation7 + $0x88] sm:$0xf]
      %v1332 = vld [vmem:[#allocation7 + $0x8c] sm:$0xf]
      %v1333 = vld [vmem:[%s5] sm:$0xff]
      %v1334 = vld [vmem:[%s5 + $0x8] sm:$0xff]
      %v1335 = vld [vmem:[%s5 + $0x10] sm:$0xff]
      %v1336 = vld [vmem:[%s5 + $0x18] sm:$0xff]
      %1338 = vset.pattern.permute.xlu0 0
      %1339 = vperm.xlu0 %1338, %v1333
      %v1340 = vpop.permute.xlu0 %1339
      %1343 = vset.pattern.permute.xlu0 0
      %1344 = vperm.xlu0 %1343, %v1334
      %v1345 = vpop.permute.xlu0 %1344
      %1348 = vset.pattern.permute.xlu0 0
      %1349 = vperm.xlu0 %1348, %v1335
      %v1350 = vpop.permute.xlu0 %1349
      %1353 = vset.pattern.permute.xlu0 0
      %1354 = vperm.xlu0 %1353, %v1336
      %v1355 = vpop.permute.xlu0 %1354
      %v1365 = vunpack.c.l.b16 %v1289
      %v1366 = vunpack.c.h.b16 %v1289
      %v1367 = vunpack.c.l.b16 %v1290
      %v1368 = vunpack.c.l.b16 %v1291
      %v1369 = vunpack.c.h.b16 %v1291
      %v1370 = vunpack.c.l.b16 %v1292
      %v1371 = vunpack.c.l.b16 %v1293
      %v1372 = vunpack.c.h.b16 %v1293
      %v1373 = vunpack.c.l.b16 %v1294
      %v1374 = vunpack.c.l.b16 %v1295
      %v1375 = vunpack.c.h.b16 %v1295
      %v1376 = vunpack.c.l.b16 %v1296
      %v1377 = vpack.c.b16 %v1368, %v1365
      %v1378 = vpack.c.b16 %v1369, %v1366
      %v1379 = vpack.c.b16 %v1370, %v1367
      %v1380 = vpack.c.b16 %v1374, %v1371
      %v1381 = vpack.c.b16 %v1375, %v1372
      %v1382 = vpack.c.b16 %v1376, %v1373
      %v1423 = vunpack.c.l.b16 %v1297
      %v1424 = vunpack.c.l.b16 %v1298
      %v1425 = vunpack.c.l.b16 %v1299
      %v1426 = vunpack.c.l.b16 %v1300
      %v1427 = vunpack.c.l.b16 %v1301
      %v1428 = vunpack.c.l.b16 %v1302
      %v1429 = vunpack.c.l.b16 %v1303
      %v1430 = vunpack.c.l.b16 %v1304
      %v1431 = vunpack.c.l.b16 %v1305
      %v1432 = vunpack.c.l.b16 %v1306
      %v1433 = vunpack.c.l.b16 %v1307
      %v1434 = vunpack.c.l.b16 %v1308
      %v1435 = vunpack.c.l.b16 %v1309
      %v1436 = vunpack.c.l.b16 %v1310
      %v1437 = vunpack.c.l.b16 %v1311
      %v1438 = vunpack.c.l.b16 %v1312
      %v1439 = vunpack.c.l.b16 %v1313
      %v1440 = vunpack.c.l.b16 %v1314
      %v1441 = vunpack.c.l.b16 %v1315
      %v1442 = vunpack.c.l.b16 %v1316
      %v1443 = vunpack.c.l.b16 %v1317
      %v1444 = vunpack.c.l.b16 %v1318
      %v1445 = vunpack.c.l.b16 %v1319
      %v1446 = vunpack.c.l.b16 %v1320
      %v1447 = vunpack.c.l.b16 %v1321
      %v1448 = vunpack.c.l.b16 %v1322
      %v1449 = vunpack.c.l.b16 %v1323
      %v1450 = vunpack.c.l.b16 %v1324
      %v1451 = vunpack.c.l.b16 %v1325
      %v1452 = vunpack.c.l.b16 %v1326
      %v1453 = vunpack.c.l.b16 %v1327
      %v1454 = vunpack.c.l.b16 %v1328
      %v1455 = vunpack.c.l.b16 %v1329
      %v1456 = vunpack.c.l.b16 %v1330
      %v1457 = vunpack.c.l.b16 %v1331
      %v1458 = vunpack.c.l.b16 %v1332
      %v1459 = vpack.c.b16 %v1424, %v1423
      %v1460 = vpack.c.b16 %v1426, %v1425
      %v1461 = vpack.c.b16 %v1428, %v1427
      %v1462 = vpack.c.b16 %v1430, %v1429
      %v1463 = vpack.c.b16 %v1432, %v1431
      %v1464 = vpack.c.b16 %v1434, %v1433
      %v1465 = vpack.c.b16 %v1436, %v1435
      %v1466 = vpack.c.b16 %v1438, %v1437
      %v1467 = vpack.c.b16 %v1440, %v1439
      %v1468 = vpack.c.b16 %v1442, %v1441
      %v1469 = vpack.c.b16 %v1444, %v1443
      %v1470 = vpack.c.b16 %v1446, %v1445
      %v1471 = vpack.c.b16 %v1448, %v1447
      %v1472 = vpack.c.b16 %v1450, %v1449
      %v1473 = vpack.c.b16 %v1452, %v1451
      %v1474 = vpack.c.b16 %v1454, %v1453
      %v1475 = vpack.c.b16 %v1456, %v1455
      %v1476 = vpack.c.b16 %v1458, %v1457
      %vm1495 = vcmask 261120
      %v1497 = vsel %vm1495, %v1379, 0
      %v1500 = vsel %vm1495, %v1382, 0
      %1502 = vmatprep.subr.bf16.mxu0 0
      %1503 = vmatpush1.bf16.msra.mxu0 %v1466
      %1504 = vmatprep.subr.bf16.mxu0 0
      %1505 = vmatpush1.bf16.msra.mxu0 %v1465
      %1506 = vmatprep.subr.bf16.mxu0 0
      %1507 = vmatpush1.bf16.msra.mxu0 %v1464
      %1508 = vmatprep.subr.bf16.mxu0 0
      %1509 = vmatpush1.bf16.msra.mxu0 %v1463
      %1510 = vmatprep.subr.bf16.mxu0 0
      %1511 = vmatpush1.bf16.msra.mxu0 %v1462
      %1512 = vmatprep.subr.bf16.mxu0 0
      %1513 = vmatpush1.bf16.msra.mxu0 %v1461
      %1514 = vmatprep.subr.bf16.mxu0 0
      %1515 = vmatpush1.bf16.msra.mxu0 %v1460
      %1516 = vmatprep.subr.bf16.mxu0 0
      %1517 = vmatpush1.bf16.msra.mxu0 %v1459
      %1518 = vmatprep.subr.bf16.mxu0 0
      %1519 = vmatpush2.bf16.msra.mxu0 %v1474
      %1520 = vmatprep.subr.bf16.mxu0 0
      %1521 = vmatpush2.bf16.msra.mxu0 %v1473
      %1522 = vmatprep.subr.bf16.mxu0 0
      %1523 = vmatpush2.bf16.msra.mxu0 %v1472
      %1524 = vmatprep.subr.bf16.mxu0 0
      %1525 = vmatpush2.bf16.msra.mxu0 %v1471
      %1526 = vmatprep.subr.bf16.mxu0 0
      %1527 = vmatpush2.bf16.msra.mxu0 %v1470
      %1528 = vmatprep.subr.bf16.mxu0 0
      %1529 = vmatpush2.bf16.msra.mxu0 %v1469
      %1530 = vmatprep.subr.bf16.mxu0 0
      %1531 = vmatpush2.bf16.msra.mxu0 %v1468
      %1532 = vmatprep.subr.bf16.mxu0 0
      %1533 = vmatpush2.bf16.msra.mxu0 %v1467
      %1534 = vmatprep.mubr.bf16.mxu0 %v1378
      %1535 = vmatmul.mubr.bf16.gmra.mxu0 %v1377
      %v1536 = vpop.f32.mrf.mxu0
      %v1537 = vadd.f32 %v1340, %v1536
      %v1538 = vpop.f32.mrf.mxu0
      %v1539 = vpop.f32.mrf.mxu0
      %v1540 = vadd.f32 %v1345, %v1539
      %v1541 = vpop.f32.mrf.mxu0
      %1542 = vmatprep.mubr.bf16.mxu0 %v1381
      %1543 = vmatmul.mubr.bf16.gmra.mxu0 %v1380
      %v1544 = vpop.f32.mrf.mxu0
      %v1545 = vadd.f32 %v1350, %v1544
      %v1546 = vpop.f32.mrf.mxu0
      %v1547 = vpop.f32.mrf.mxu0
      %v1548 = vadd.f32 %v1355, %v1547
      %v1549 = vpop.f32.mrf.mxu0
      %1550 = vdwg.mxu0
      %1551 = vmatprep.subr.bf16.mxu0 0
      %1552 = vmatpush1.bf16.msra.mxu0 0
      %1553 = vmatprep.subr.bf16.mxu0 0
      %1554 = vmatpush1.bf16.msra.mxu0 0
      %1555 = vmatprep.subr.bf16.mxu0 0
      %1556 = vmatpush1.bf16.msra.mxu0 0
      %1557 = vmatprep.subr.bf16.mxu0 0
      %1558 = vmatpush1.bf16.msra.mxu0 0
      %1559 = vmatprep.subr.bf16.mxu0 0
      %1560 = vmatpush1.bf16.msra.mxu0 0
      %1561 = vmatprep.subr.bf16.mxu0 0
      %1562 = vmatpush1.bf16.msra.mxu0 0
      %1563 = vmatprep.subr.bf16.mxu0 0
      %1564 = vmatpush1.bf16.msra.mxu0 %v1476
      %1565 = vmatprep.subr.bf16.mxu0 0
      %1566 = vmatpush1.bf16.msra.mxu0 %v1475
      %1567 = vmatprep.subr.bf16.mxu0 0
      %1568 = vmatpush2.bf16.msra.mxu0 0
      %1569 = vmatprep.subr.bf16.mxu0 0
      %1570 = vmatpush2.bf16.msra.mxu0 0
      %1571 = vmatprep.subr.bf16.mxu0 0
      %1572 = vmatpush2.bf16.msra.mxu0 0
      %1573 = vmatprep.subr.bf16.mxu0 0
      %1574 = vmatpush2.bf16.msra.mxu0 0
      %1575 = vmatprep.subr.bf16.mxu0 0
      %1576 = vmatpush2.bf16.msra.mxu0 0
      %1577 = vmatprep.subr.bf16.mxu0 0
      %1578 = vmatpush2.bf16.msra.mxu0 0
      %1579 = vmatprep.subr.bf16.mxu0 0
      %1580 = vmatpush2.bf16.msra.mxu0 0
      %1581 = vmatprep.subr.bf16.mxu0 0
      %1582 = vmatpush2.bf16.msra.mxu0 0
      %1583 = vmatprep.mubr.bf16.mxu0 0
      %1584 = vmatmul.mubr.bf16.gmra.mxu0 %v1497
      %v1585 = vpop.f32.mrf.mxu0
      %v1586 = vadd.f32 %v1537, %v1585
      %v1587 = vpop.f32.mrf.mxu0
      %v1588 = vpop.f32.mrf.mxu0
      %v1589 = vadd.f32 %v1540, %v1588
      %v1590 = vpop.f32.mrf.mxu0
      %1591 = vmatprep.mubr.bf16.mxu0 0
      %1592 = vmatmul.mubr.bf16.gmra.mxu0 %v1500
      %v1593 = vpop.f32.mrf.mxu0
      %v1594 = vadd.f32 %v1545, %v1593
      %v1595 = vpop.f32.mrf.mxu0
      %v1596 = vpop.f32.mrf.mxu0
      %v1597 = vadd.f32 %v1548, %v1596
      %v1598 = vpop.f32.mrf.mxu0
      %1599 = vdwg.mxu0
      %v1600 = vmul.f32 %v1586, 0.5
      %v1601 = vmul.f32 %v1589, 0.5
      %v1602 = vmul.f32 %v1594, 0.5
      %v1603 = vmul.f32 %v1597, 0.5
      %v1604 = vmul.f32 %v1586, 0.70710677
      %v1605 = vmul.f32 %v1589, 0.70710677
      %v1606 = vmul.f32 %v1594, 0.70710677
      %v1607 = vmul.f32 %v1597, 0.70710677
      %v1608 = verf.f32.pop %v1604
      %v1609 = verf.f32.pop %v1605
      %v1610 = verf.f32.pop %v1606
      %v1611 = verf.f32.pop %v1607
      %v1612 = vadd.f32 %v1608, 1.0
      %v1613 = vadd.f32 %v1609, 1.0
      %v1614 = vadd.f32 %v1610, 1.0
      %v1615 = vadd.f32 %v1611, 1.0
      %v1616 = vmul.f32 %v1600, %v1612
      %v1617 = vmul.f32 %v1601, %v1613
      %v1618 = vmul.f32 %v1602, %v1614
      %v1619 = vmul.f32 %v1603, %v1615
      %v1620 = vpack.c.bf16 %v1617, %v1616
      %v1621 = vpack.c.bf16 %v1619, %v1618
      %1622 = vst.msk [vmem:[#allocation3] sm:$0xf] %vm1050, 0
      %1623 = vst.msk [vmem:[#allocation3 + $0x4] sm:$0xf] %vm1050, 0
      %1624 = vst.msk [vmem:[#allocation3 + $0x8] sm:$0xf] %vm1050, 0
      %1625 = vst.msk [vmem:[#allocation3 + $0xc] sm:$0xf] %vm1050, 0
      %v1628 = vunpack.c.l.b16 %v1620
      %v1629 = vunpack.c.h.b16 %v1620
      %v1630 = vunpack.c.l.b16 %v1621
      %v1631 = vunpack.c.h.b16 %v1621
      %v1632 = vpack.c.b16 %v1628, %v1628
      %v1633 = vpack.c.b16 %v1629, %v1629
      %v1634 = vpack.c.b16 %v1630, %v1630
      %v1635 = vpack.c.b16 %v1631, %v1631
      %1636 = vrot.lane.b32.xlu0 %v1632, 9
      %v1637 = vpop.permute.xlu0 %1636
      %1638 = vrot.lane.b32.xlu0 %v1633, 9
      %v1639 = vpop.permute.xlu0 %1638
      %1640 = vrot.lane.b32.xlu0 %v1634, 9
      %v1641 = vpop.permute.xlu0 %1640
      %1642 = vrot.lane.b32.xlu0 %v1635, 9
      %v1643 = vpop.permute.xlu0 %1642
      %1648 = vst.msk [vmem:[#allocation3] sm:$0xf] %vm1077, %v1637
      %1649 = vst.msk [vmem:[#allocation3 + $0x4] sm:$0xf] %vm1077, %v1639
      %1650 = vst.msk [vmem:[#allocation3 + $0x8] sm:$0xf] %vm1077, %v1641
      %1651 = vst.msk [vmem:[#allocation3 + $0xc] sm:$0xf] %vm1077, %v1643
      %v1652 = vld [vmem:[#allocation3] sm:$0xf]
      %v1653 = vld [vmem:[#allocation3 + $0x4] sm:$0xf]
      %v1654 = vld [vmem:[#allocation3 + $0x8] sm:$0xf]
      %v1655 = vld [vmem:[#allocation3 + $0xc] sm:$0xf]
      %v1656 = vsel %vm1089, %v1652, 0
      %v1657 = vsel %vm1089, %v1653, 0
      %v1658 = vsel %vm1089, %v1654, 0
      %v1659 = vsel %vm1089, %v1655, 0
      %1660 = vst.msk [vmem:[#allocation8] sm:$0xf] %vm1094, %v1656
      %1661 = vst.msk [vmem:[#allocation8 + $0x4] sm:$0xf] %vm1094, %v1657
      %1662 = vst.msk [vmem:[#allocation8 + $0x8] sm:$0xf] %vm1094, %v1658
      %1663 = vst.msk [vmem:[#allocation8 + $0xc] sm:$0xf] %vm1094, %v1659
      %1668 = vrot.lane.b32.xlu0 %v1652, 127
      %v1669 = vpop.permute.xlu0 %1668
      %1670 = vrot.lane.b32.xlu0 %v1653, 127
      %v1671 = vpop.permute.xlu0 %1670
      %1672 = vrot.lane.b32.xlu0 %v1654, 127
      %v1673 = vpop.permute.xlu0 %1672
      %1674 = vrot.lane.b32.xlu0 %v1655, 127
      %v1675 = vpop.permute.xlu0 %1674
      %1680 = vst.msk [vmem:[#allocation8 + $0x10] sm:$0xf] %vm1094, %v1669
      %1681 = vst.msk [vmem:[#allocation8 + $0x14] sm:$0xf] %vm1094, %v1671
      %1682 = vst.msk [vmem:[#allocation8 + $0x18] sm:$0xf] %vm1094, %v1673
      %1683 = vst.msk [vmem:[#allocation8 + $0x1c] sm:$0xf] %vm1094, %v1675
      %v1684 = vsel %vm1123, %v1652, 0
      %v1685 = vsel %vm1123, %v1653, 0
      %v1686 = vsel %vm1123, %v1654, 0
      %v1687 = vsel %vm1123, %v1655, 0
      %1692 = vrot.lane.b32.xlu0 %v1684, 126
      %v1693 = vpop.permute.xlu0 %1692
      %1694 = vrot.lane.b32.xlu0 %v1685, 126
      %v1695 = vpop.permute.xlu0 %1694
      %1696 = vrot.lane.b32.xlu0 %v1686, 126
      %v1697 = vpop.permute.xlu0 %1696
      %1698 = vrot.lane.b32.xlu0 %v1687, 126
      %v1699 = vpop.permute.xlu0 %1698
      %1704 = vst.msk [vmem:[#allocation8 + $0x20] sm:$0xf] %vm1094, %v1693
      %1705 = vst.msk [vmem:[#allocation8 + $0x24] sm:$0xf] %vm1094, %v1695
      %1706 = vst.msk [vmem:[#allocation8 + $0x28] sm:$0xf] %vm1094, %v1697
      %1707 = vst.msk [vmem:[#allocation8 + $0x2c] sm:$0xf] %vm1094, %v1699
      %v1708 = vsel %vm1151, %v1652, 0
      %v1709 = vsel %vm1151, %v1653, 0
      %v1710 = vsel %vm1151, %v1654, 0
      %v1711 = vsel %vm1151, %v1655, 0
      %1716 = vrot.lane.b32.xlu0 %v1708, 120
      %v1717 = vpop.permute.xlu0 %1716
      %1718 = vrot.lane.b32.xlu0 %v1709, 120
      %v1719 = vpop.permute.xlu0 %1718
      %1720 = vrot.lane.b32.xlu0 %v1710, 120
      %v1721 = vpop.permute.xlu0 %1720
      %1722 = vrot.lane.b32.xlu0 %v1711, 120
      %v1723 = vpop.permute.xlu0 %1722
      %1728 = vst.msk [vmem:[#allocation8 + $0x30] sm:$0xf] %vm1094, %v1717
      %1729 = vst.msk [vmem:[#allocation8 + $0x34] sm:$0xf] %vm1094, %v1719
      %1730 = vst.msk [vmem:[#allocation8 + $0x38] sm:$0xf] %vm1094, %v1721
      %1731 = vst.msk [vmem:[#allocation8 + $0x3c] sm:$0xf] %vm1094, %v1723
      %1732 = vrot.lane.b32.xlu0 %v1652, 119
      %v1733 = vpop.permute.xlu0 %1732
      %1734 = vrot.lane.b32.xlu0 %v1653, 119
      %v1735 = vpop.permute.xlu0 %1734
      %1736 = vrot.lane.b32.xlu0 %v1654, 119
      %v1737 = vpop.permute.xlu0 %1736
      %1738 = vrot.lane.b32.xlu0 %v1655, 119
      %v1739 = vpop.permute.xlu0 %1738
      %1744 = vst.msk [vmem:[#allocation8 + $0x40] sm:$0xf] %vm1094, %v1733
      %1745 = vst.msk [vmem:[#allocation8 + $0x44] sm:$0xf] %vm1094, %v1735
      %1746 = vst.msk [vmem:[#allocation8 + $0x48] sm:$0xf] %vm1094, %v1737
      %1747 = vst.msk [vmem:[#allocation8 + $0x4c] sm:$0xf] %vm1094, %v1739
      %v1748 = vsel %vm1194, %v1652, 0
      %v1749 = vsel %vm1194, %v1653, 0
      %v1750 = vsel %vm1194, %v1654, 0
      %v1751 = vsel %vm1194, %v1655, 0
      %1756 = vrot.lane.b32.xlu0 %v1748, 118
      %v1757 = vpop.permute.xlu0 %1756
      %1758 = vrot.lane.b32.xlu0 %v1749, 118
      %v1759 = vpop.permute.xlu0 %1758
      %1760 = vrot.lane.b32.xlu0 %v1750, 118
      %v1761 = vpop.permute.xlu0 %1760
      %1762 = vrot.lane.b32.xlu0 %v1751, 118
      %v1763 = vpop.permute.xlu0 %1762
      %1768 = vst.msk [vmem:[#allocation8 + $0x50] sm:$0xf] %vm1094, %v1757
      %1769 = vst.msk [vmem:[#allocation8 + $0x54] sm:$0xf] %vm1094, %v1759
      %1770 = vst.msk [vmem:[#allocation8 + $0x58] sm:$0xf] %vm1094, %v1761
      %1771 = vst.msk [vmem:[#allocation8 + $0x5c] sm:$0xf] %vm1094, %v1763
      %v1772 = vsel %vm1221, %v1652, 0
      %v1773 = vsel %vm1221, %v1653, 0
      %v1774 = vsel %vm1221, %v1654, 0
      %v1775 = vsel %vm1221, %v1655, 0
      %1780 = vrot.lane.b32.xlu0 %v1772, 112
      %v1781 = vpop.permute.xlu0 %1780
      %1782 = vrot.lane.b32.xlu0 %v1773, 112
      %v1783 = vpop.permute.xlu0 %1782
      %1784 = vrot.lane.b32.xlu0 %v1774, 112
      %v1785 = vpop.permute.xlu0 %1784
      %1786 = vrot.lane.b32.xlu0 %v1775, 112
      %v1787 = vpop.permute.xlu0 %1786
      %1792 = vst.msk [vmem:[#allocation8 + $0x60] sm:$0xf] %vm1094, %v1781
      %1793 = vst.msk [vmem:[#allocation8 + $0x64] sm:$0xf] %vm1094, %v1783
      %1794 = vst.msk [vmem:[#allocation8 + $0x68] sm:$0xf] %vm1094, %v1785
      %1795 = vst.msk [vmem:[#allocation8 + $0x6c] sm:$0xf] %vm1094, %v1787
      %1796 = vrot.lane.b32.xlu0 %v1652, 111
      %v1797 = vpop.permute.xlu0 %1796
      %1798 = vrot.lane.b32.xlu0 %v1653, 111
      %v1799 = vpop.permute.xlu0 %1798
      %1800 = vrot.lane.b32.xlu0 %v1654, 111
      %v1801 = vpop.permute.xlu0 %1800
      %1802 = vrot.lane.b32.xlu0 %v1655, 111
      %v1803 = vpop.permute.xlu0 %1802
      %1808 = vst.msk [vmem:[#allocation8 + $0x70] sm:$0xf] %vm1094, %v1797
      %1809 = vst.msk [vmem:[#allocation8 + $0x74] sm:$0xf] %vm1094, %v1799
      %1810 = vst.msk [vmem:[#allocation8 + $0x78] sm:$0xf] %vm1094, %v1801
      %1811 = vst.msk [vmem:[#allocation8 + $0x7c] sm:$0xf] %vm1094, %v1803
      %v1812 = vsel %vm1264, %v1652, 0
      %v1813 = vsel %vm1264, %v1653, 0
      %v1814 = vsel %vm1264, %v1654, 0
      %v1815 = vsel %vm1264, %v1655, 0
      %1820 = vrot.lane.b32.xlu0 %v1812, 110
      %v1821 = vpop.permute.xlu0 %1820
      %1822 = vrot.lane.b32.xlu0 %v1813, 110
      %v1823 = vpop.permute.xlu0 %1822
      %1824 = vrot.lane.b32.xlu0 %v1814, 110
      %v1825 = vpop.permute.xlu0 %1824
      %1826 = vrot.lane.b32.xlu0 %v1815, 110
      %v1827 = vpop.permute.xlu0 %1826
      %1832 = vst.msk [vmem:[#allocation8 + $0x80] sm:$0xf] %vm1094, %v1821
      %1833 = vst.msk [vmem:[#allocation8 + $0x84] sm:$0xf] %vm1094, %v1823
      %1834 = vst.msk [vmem:[#allocation8 + $0x88] sm:$0xf] %vm1094, %v1825
      %1835 = vst.msk [vmem:[#allocation8 + $0x8c] sm:$0xf] %vm1094, %v1827
      %v1836 = vld [vmem:[%s6] sm:$0xff]
      %v1837 = vld [vmem:[%s6 + $0x8] sm:$0xf]
      %v1838 = vld [vmem:[%s6 + $0xc] sm:$0xff]
      %v1839 = vld [vmem:[%s6 + $0x14] sm:$0xf]
      %v1840 = vld [vmem:[%s6 + $0x18] sm:$0xff]
      %v1841 = vld [vmem:[%s6 + $0x20] sm:$0xf]
      %v1842 = vld [vmem:[%s6 + $0x24] sm:$0xff]
      %v1843 = vld [vmem:[%s6 + $0x2c] sm:$0xf]
      %v1844 = vld [vmem:[%s6 + $0x30] sm:$0xff]
      %v1845 = vld [vmem:[%s6 + $0x38] sm:$0xf]
      %v1846 = vld [vmem:[%s6 + $0x3c] sm:$0xff]
      %v1847 = vld [vmem:[%s6 + $0x44] sm:$0xf]
      %v1848 = vld [vmem:[%s6 + $0x48] sm:$0xff]
      %v1849 = vld [vmem:[%s6 + $0x50] sm:$0xf]
      %v1850 = vld [vmem:[%s6 + $0x54] sm:$0xff]
      %v1851 = vld [vmem:[%s6 + $0x5c] sm:$0xf]
      %v1852 = vld [vmem:[#allocation8] sm:$0xf]
      %v1853 = vld [vmem:[#allocation8 + $0x4] sm:$0xf]
      %v1854 = vld [vmem:[#allocation8 + $0x8] sm:$0xf]
      %v1855 = vld [vmem:[#allocation8 + $0xc] sm:$0xf]
      %v1856 = vld [vmem:[#allocation8 + $0x10] sm:$0xf]
      %v1857 = vld [vmem:[#allocation8 + $0x14] sm:$0xf]
      %v1858 = vld [vmem:[#allocation8 + $0x18] sm:$0xf]
      %v1859 = vld [vmem:[#allocation8 + $0x1c] sm:$0xf]
      %v1860 = vld [vmem:[#allocation8 + $0x20] sm:$0xf]
      %v1861 = vld [vmem:[#allocation8 + $0x24] sm:$0xf]
      %v1862 = vld [vmem:[#allocation8 + $0x28] sm:$0xf]
      %v1863 = vld [vmem:[#allocation8 + $0x2c] sm:$0xf]
      %v1864 = vld [vmem:[#allocation8 + $0x30] sm:$0xf]
      %v1865 = vld [vmem:[#allocation8 + $0x34] sm:$0xf]
      %v1866 = vld [vmem:[#allocation8 + $0x38] sm:$0xf]
      %v1867 = vld [vmem:[#allocation8 + $0x3c] sm:$0xf]
      %v1868 = vld [vmem:[#allocation8 + $0x40] sm:$0xf]
      %v1869 = vld [vmem:[#allocation8 + $0x44] sm:$0xf]
      %v1870 = vld [vmem:[#allocation8 + $0x48] sm:$0xf]
      %v1871 = vld [vmem:[#allocation8 + $0x4c] sm:$0xf]
      %v1872 = vld [vmem:[#allocation8 + $0x50] sm:$0xf]
      %v1873 = vld [vmem:[#allocation8 + $0x54] sm:$0xf]
      %v1874 = vld [vmem:[#allocation8 + $0x58] sm:$0xf]
      %v1875 = vld [vmem:[#allocation8 + $0x5c] sm:$0xf]
      %v1876 = vld [vmem:[#allocation8 + $0x60] sm:$0xf]
      %v1877 = vld [vmem:[#allocation8 + $0x64] sm:$0xf]
      %v1878 = vld [vmem:[#allocation8 + $0x68] sm:$0xf]
      %v1879 = vld [vmem:[#allocation8 + $0x6c] sm:$0xf]
      %v1880 = vld [vmem:[#allocation8 + $0x70] sm:$0xf]
      %v1881 = vld [vmem:[#allocation8 + $0x74] sm:$0xf]
      %v1882 = vld [vmem:[#allocation8 + $0x78] sm:$0xf]
      %v1883 = vld [vmem:[#allocation8 + $0x7c] sm:$0xf]
      %v1884 = vld [vmem:[#allocation8 + $0x80] sm:$0xf]
      %v1885 = vld [vmem:[#allocation8 + $0x84] sm:$0xf]
      %v1886 = vld [vmem:[#allocation8 + $0x88] sm:$0xf]
      %v1887 = vld [vmem:[#allocation8 + $0x8c] sm:$0xf]
      %v1904 = vunpack.c.l.b16 %v1836
      %v1905 = vunpack.c.h.b16 %v1836
      %v1906 = vunpack.c.l.b16 %v1837
      %v1907 = vunpack.c.l.b16 %v1838
      %v1908 = vunpack.c.h.b16 %v1838
      %v1909 = vunpack.c.l.b16 %v1839
      %v1910 = vunpack.c.l.b16 %v1840
      %v1911 = vunpack.c.h.b16 %v1840
      %v1912 = vunpack.c.l.b16 %v1841
      %v1913 = vunpack.c.l.b16 %v1842
      %v1914 = vunpack.c.h.b16 %v1842
      %v1915 = vunpack.c.l.b16 %v1843
      %v1916 = vunpack.c.l.b16 %v1844
      %v1917 = vunpack.c.h.b16 %v1844
      %v1918 = vunpack.c.l.b16 %v1845
      %v1919 = vunpack.c.l.b16 %v1846
      %v1920 = vunpack.c.h.b16 %v1846
      %v1921 = vunpack.c.l.b16 %v1847
      %v1922 = vunpack.c.l.b16 %v1848
      %v1923 = vunpack.c.h.b16 %v1848
      %v1924 = vunpack.c.l.b16 %v1849
      %v1925 = vunpack.c.l.b16 %v1850
      %v1926 = vunpack.c.h.b16 %v1850
      %v1927 = vunpack.c.l.b16 %v1851
      %v1928 = vpack.c.b16 %v1907, %v1904
      %v1929 = vpack.c.b16 %v1908, %v1905
      %v1930 = vpack.c.b16 %v1909, %v1906
      %v1931 = vpack.c.b16 %v1913, %v1910
      %v1932 = vpack.c.b16 %v1914, %v1911
      %v1933 = vpack.c.b16 %v1915, %v1912
      %v1934 = vpack.c.b16 %v1919, %v1916
      %v1935 = vpack.c.b16 %v1920, %v1917
      %v1936 = vpack.c.b16 %v1921, %v1918
      %v1937 = vpack.c.b16 %v1925, %v1922
      %v1938 = vpack.c.b16 %v1926, %v1923
      %v1939 = vpack.c.b16 %v1927, %v1924
      %v1984 = vunpack.c.l.b16 %v1852
      %v1985 = vunpack.c.l.b16 %v1853
      %v1986 = vunpack.c.l.b16 %v1854
      %v1987 = vunpack.c.l.b16 %v1855
      %v1988 = vunpack.c.l.b16 %v1856
      %v1989 = vunpack.c.l.b16 %v1857
      %v1990 = vunpack.c.l.b16 %v1858
      %v1991 = vunpack.c.l.b16 %v1859
      %v1992 = vunpack.c.l.b16 %v1860
      %v1993 = vunpack.c.l.b16 %v1861
      %v1994 = vunpack.c.l.b16 %v1862
      %v1995 = vunpack.c.l.b16 %v1863
      %v1996 = vunpack.c.l.b16 %v1864
      %v1997 = vunpack.c.l.b16 %v1865
      %v1998 = vunpack.c.l.b16 %v1866
      %v1999 = vunpack.c.l.b16 %v1867
      %v2000 = vunpack.c.l.b16 %v1868
      %v2001 = vunpack.c.l.b16 %v1869
      %v2002 = vunpack.c.l.b16 %v1870
      %v2003 = vunpack.c.l.b16 %v1871
      %v2004 = vunpack.c.l.b16 %v1872
      %v2005 = vunpack.c.l.b16 %v1873
      %v2006 = vunpack.c.l.b16 %v1874
      %v2007 = vunpack.c.l.b16 %v1875
      %v2008 = vunpack.c.l.b16 %v1876
      %v2009 = vunpack.c.l.b16 %v1877
      %v2010 = vunpack.c.l.b16 %v1878
      %v2011 = vunpack.c.l.b16 %v1879
      %v2012 = vunpack.c.l.b16 %v1880
      %v2013 = vunpack.c.l.b16 %v1881
      %v2014 = vunpack.c.l.b16 %v1882
      %v2015 = vunpack.c.l.b16 %v1883
      %v2016 = vunpack.c.l.b16 %v1884
      %v2017 = vunpack.c.l.b16 %v1885
      %v2018 = vunpack.c.l.b16 %v1886
      %v2019 = vunpack.c.l.b16 %v1887
      %v2020 = vpack.c.b16 %v1985, %v1984
      %v2021 = vpack.c.b16 %v1987, %v1986
      %v2022 = vpack.c.b16 %v1989, %v1988
      %v2023 = vpack.c.b16 %v1991, %v1990
      %v2024 = vpack.c.b16 %v1993, %v1992
      %v2025 = vpack.c.b16 %v1995, %v1994
      %v2026 = vpack.c.b16 %v1997, %v1996
      %v2027 = vpack.c.b16 %v1999, %v1998
      %v2028 = vpack.c.b16 %v2001, %v2000
      %v2029 = vpack.c.b16 %v2003, %v2002
      %v2030 = vpack.c.b16 %v2005, %v2004
      %v2031 = vpack.c.b16 %v2007, %v2006
      %v2032 = vpack.c.b16 %v2009, %v2008
      %v2033 = vpack.c.b16 %v2011, %v2010
      %v2034 = vpack.c.b16 %v2013, %v2012
      %v2035 = vpack.c.b16 %v2015, %v2014
      %v2036 = vpack.c.b16 %v2017, %v2016
      %v2037 = vpack.c.b16 %v2019, %v2018
      %v2057 = vsel %vm1495, %v1930, 0
      %v2060 = vsel %vm1495, %v1933, 0
      %v2063 = vsel %vm1495, %v1936, 0
      %v2066 = vsel %vm1495, %v1939, 0
      %2068 = vmatprep.subr.bf16.mxu0 0
      %2069 = vmatpush1.bf16.msra.mxu0 %v2027
      %2070 = vmatprep.subr.bf16.mxu0 0
      %2071 = vmatpush1.bf16.msra.mxu0 %v2026
      %2072 = vmatprep.subr.bf16.mxu0 0
      %2073 = vmatpush1.bf16.msra.mxu0 %v2025
      %2074 = vmatprep.subr.bf16.mxu0 0
      %2075 = vmatpush1.bf16.msra.mxu0 %v2024
      %2076 = vmatprep.subr.bf16.mxu0 0
      %2077 = vmatpush1.bf16.msra.mxu0 %v2023
      %2078 = vmatprep.subr.bf16.mxu0 0
      %2079 = vmatpush1.bf16.msra.mxu0 %v2022
      %2080 = vmatprep.subr.bf16.mxu0 0
      %2081 = vmatpush1.bf16.msra.mxu0 %v2021
      %2082 = vmatprep.subr.bf16.mxu0 0
      %2083 = vmatpush1.bf16.msra.mxu0 %v2020
      %2084 = vmatprep.subr.bf16.mxu0 0
      %2085 = vmatpush2.bf16.msra.mxu0 %v2035
      %2086 = vmatprep.subr.bf16.mxu0 0
      %2087 = vmatpush2.bf16.msra.mxu0 %v2034
      %2088 = vmatprep.subr.bf16.mxu0 0
      %2089 = vmatpush2.bf16.msra.mxu0 %v2033
      %2090 = vmatprep.subr.bf16.mxu0 0
      %2091 = vmatpush2.bf16.msra.mxu0 %v2032
      %2092 = vmatprep.subr.bf16.mxu0 0
      %2093 = vmatpush2.bf16.msra.mxu0 %v2031
      %2094 = vmatprep.subr.bf16.mxu0 0
      %2095 = vmatpush2.bf16.msra.mxu0 %v2030
      %2096 = vmatprep.subr.bf16.mxu0 0
      %2097 = vmatpush2.bf16.msra.mxu0 %v2029
      %2098 = vmatprep.subr.bf16.mxu0 0
      %2099 = vmatpush2.bf16.msra.mxu0 %v2028
      %2100 = vmatprep.mubr.bf16.mxu0 %v1929
      %2101 = vmatmul.mubr.bf16.gmra.mxu0 %v1928
      %v2102 = vpop.f32.mrf.mxu0
      %v2103 = vadd.f32 0.0, %v2102
      %v2104 = vpop.f32.mrf.mxu0
      %v2105 = vpop.f32.mrf.mxu0
      %v2106 = vadd.f32 0.0, %v2105
      %v2107 = vpop.f32.mrf.mxu0
      %2108 = vmatprep.mubr.bf16.mxu0 %v1932
      %2109 = vmatmul.mubr.bf16.gmra.mxu0 %v1931
      %v2110 = vpop.f32.mrf.mxu0
      %v2111 = vadd.f32 0.0, %v2110
      %v2112 = vpop.f32.mrf.mxu0
      %v2113 = vpop.f32.mrf.mxu0
      %v2114 = vadd.f32 0.0, %v2113
      %v2115 = vpop.f32.mrf.mxu0
      %2116 = vmatprep.mubr.bf16.mxu0 %v1935
      %2117 = vmatmul.mubr.bf16.gmra.mxu0 %v1934
      %v2118 = vpop.f32.mrf.mxu0
      %v2119 = vadd.f32 0.0, %v2118
      %v2120 = vpop.f32.mrf.mxu0
      %v2121 = vpop.f32.mrf.mxu0
      %v2122 = vadd.f32 0.0, %v2121
      %v2123 = vpop.f32.mrf.mxu0
      %2124 = vmatprep.mubr.bf16.mxu0 %v1938
      %2125 = vmatmul.mubr.bf16.gmra.mxu0 %v1937
      %v2126 = vpop.f32.mrf.mxu0
      %v2127 = vadd.f32 0.0, %v2126
      %v2128 = vpop.f32.mrf.mxu0
      %v2129 = vpop.f32.mrf.mxu0
      %v2130 = vadd.f32 0.0, %v2129
      %v2131 = vpop.f32.mrf.mxu0
      %2132 = vdwg.mxu0
      %2133 = vmatprep.subr.bf16.mxu0 0
      %2134 = vmatpush1.bf16.msra.mxu0 0
      %2135 = vmatprep.subr.bf16.mxu0 0
      %2136 = vmatpush1.bf16.msra.mxu0 0
      %2137 = vmatprep.subr.bf16.mxu0 0
      %2138 = vmatpush1.bf16.msra.mxu0 0
      %2139 = vmatprep.subr.bf16.mxu0 0
      %2140 = vmatpush1.bf16.msra.mxu0 0
      %2141 = vmatprep.subr.bf16.mxu0 0
      %2142 = vmatpush1.bf16.msra.mxu0 0
      %2143 = vmatprep.subr.bf16.mxu0 0
      %2144 = vmatpush1.bf16.msra.mxu0 0
      %2145 = vmatprep.subr.bf16.mxu0 0
      %2146 = vmatpush1.bf16.msra.mxu0 %v2037
      %2147 = vmatprep.subr.bf16.mxu0 0
      %2148 = vmatpush1.bf16.msra.mxu0 %v2036
      %2149 = vmatprep.subr.bf16.mxu0 0
      %2150 = vmatpush2.bf16.msra.mxu0 0
      %2151 = vmatprep.subr.bf16.mxu0 0
      %2152 = vmatpush2.bf16.msra.mxu0 0
      %2153 = vmatprep.subr.bf16.mxu0 0
      %2154 = vmatpush2.bf16.msra.mxu0 0
      %2155 = vmatprep.subr.bf16.mxu0 0
      %2156 = vmatpush2.bf16.msra.mxu0 0
      %2157 = vmatprep.subr.bf16.mxu0 0
      %2158 = vmatpush2.bf16.msra.mxu0 0
      %2159 = vmatprep.subr.bf16.mxu0 0
      %2160 = vmatpush2.bf16.msra.mxu0 0
      %2161 = vmatprep.subr.bf16.mxu0 0
      %2162 = vmatpush2.bf16.msra.mxu0 0
      %2163 = vmatprep.subr.bf16.mxu0 0
      %2164 = vmatpush2.bf16.msra.mxu0 0
      %2165 = vmatprep.mubr.bf16.mxu0 0
      %2166 = vmatmul.mubr.bf16.gmra.mxu0 %v2057
      %v2167 = vpop.f32.mrf.mxu0
      %v2168 = vadd.f32 %v2103, %v2167
      %v2169 = vpop.f32.mrf.mxu0
      %v2170 = vpop.f32.mrf.mxu0
      %v2171 = vadd.f32 %v2106, %v2170
      %v2172 = vpop.f32.mrf.mxu0
      %2173 = vmatprep.mubr.bf16.mxu0 0
      %2174 = vmatmul.mubr.bf16.gmra.mxu0 %v2060
      %v2175 = vpop.f32.mrf.mxu0
      %v2176 = vadd.f32 %v2111, %v2175
      %v2177 = vpop.f32.mrf.mxu0
      %v2178 = vpop.f32.mrf.mxu0
      %v2179 = vadd.f32 %v2114, %v2178
      %v2180 = vpop.f32.mrf.mxu0
      %2181 = vmatprep.mubr.bf16.mxu0 0
      %2182 = vmatmul.mubr.bf16.gmra.mxu0 %v2063
      %v2183 = vpop.f32.mrf.mxu0
      %v2184 = vadd.f32 %v2119, %v2183
      %v2185 = vpop.f32.mrf.mxu0
      %v2186 = vpop.f32.mrf.mxu0
      %v2187 = vadd.f32 %v2122, %v2186
      %v2188 = vpop.f32.mrf.mxu0
      %2189 = vmatprep.mubr.bf16.mxu0 0
      %2190 = vmatmul.mubr.bf16.gmra.mxu0 %v2066
      %v2191 = vpop.f32.mrf.mxu0
      %v2192 = vadd.f32 %v2127, %v2191
      %v2193 = vpop.f32.mrf.mxu0
      %v2194 = vpop.f32.mrf.mxu0
      %v2195 = vadd.f32 %v2130, %v2194
      %v2196 = vpop.f32.mrf.mxu0
      %2197 = vdwg.mxu0
      %v2198 = vpack.c.bf16 %v2171, %v2168
      %v2199 = vpack.c.bf16 %v2179, %v2176
      %v2200 = vpack.c.bf16 %v2187, %v2184
      %v2201 = vpack.c.bf16 %v2195, %v2192
      %v2202 = vld [vmem:[%s8] sm:$0xf]
      %v2203 = vld [vmem:[%s8 + $0x4] sm:$0xf]
      %v2204 = vld [vmem:[%s8 + $0x8] sm:$0xf]
      %v2205 = vld [vmem:[%s8 + $0xc] sm:$0xf]
      %v2206 = vld [vmem:[%s8 + $0x10] sm:$0xf]
      %v2207 = vld [vmem:[%s8 + $0x14] sm:$0xf]
      %v2208 = vld [vmem:[%s8 + $0x18] sm:$0xf]
      %v2209 = vld [vmem:[%s8 + $0x1c] sm:$0xf]
      %v2210 = vld [vmem:[%s7] sm:$0xff]
      %v2211 = vld [vmem:[%s7 + $0x8] sm:$0xff]
      %v2212 = vld [vmem:[%s7 + $0x10] sm:$0xff]
      %v2213 = vld [vmem:[%s7 + $0x18] sm:$0xff]
      %v2214 = vld [vmem:[%s7 + $0x20] sm:$0xff]
      %v2215 = vld [vmem:[%s7 + $0x28] sm:$0xff]
      %v2216 = vld [vmem:[%s7 + $0x30] sm:$0xff]
      %v2217 = vld [vmem:[%s7 + $0x38] sm:$0xff]
      %2219 = vset.pattern.permute.xlu0 0
      %2220 = vperm.xlu0 %2219, %v2210
      %v2221 = vpop.permute.xlu0 %2220
      %2224 = vset.pattern.permute.xlu0 0
      %2225 = vperm.xlu0 %2224, %v2211
      %v2226 = vpop.permute.xlu0 %2225
      %2229 = vset.pattern.permute.xlu0 0
      %2230 = vperm.xlu0 %2229, %v2212
      %v2231 = vpop.permute.xlu0 %2230
      %2234 = vset.pattern.permute.xlu0 0
      %2235 = vperm.xlu0 %2234, %v2213
      %v2236 = vpop.permute.xlu0 %2235
      %2239 = vset.pattern.permute.xlu0 0
      %2240 = vperm.xlu0 %2239, %v2214
      %v2241 = vpop.permute.xlu0 %2240
      %2244 = vset.pattern.permute.xlu0 0
      %2245 = vperm.xlu0 %2244, %v2215
      %v2246 = vpop.permute.xlu0 %2245
      %2249 = vset.pattern.permute.xlu0 0
      %2250 = vperm.xlu0 %2249, %v2216
      %v2251 = vpop.permute.xlu0 %2250
      %2254 = vset.pattern.permute.xlu0 0
      %2255 = vperm.xlu0 %2254, %v2217
      %v2256 = vpop.permute.xlu0 %2255
      %v2266 = vunpack.c.l.b16 %v2202
      %v2267 = vunpack.c.l.b16 %v2203
      %v2268 = vunpack.c.l.b16 %v2204
      %v2269 = vunpack.c.l.b16 %v2205
      %v2270 = vunpack.c.l.b16 %v2206
      %v2271 = vunpack.c.l.b16 %v2207
      %v2272 = vunpack.c.l.b16 %v2208
      %v2273 = vunpack.c.l.b16 %v2209
      %v2274 = vpack.c.b16 %v2267, %v2266
      %v2275 = vpack.c.b16 %v2269, %v2268
      %v2276 = vpack.c.b16 %v2271, %v2270
      %v2277 = vpack.c.b16 %v2273, %v2272
      %vm2282 = vcmask 523264
      %v2284 = vsel %vm2282, %v2198, 0
      %v2287 = vsel %vm2282, %v2199, 0
      %v2290 = vsel %vm2282, %v2200, 0
      %v2293 = vsel %vm2282, %v2201, 0
      %2295 = vmatprep.subr.bf16.mxu0 0
      %2296 = vmatpush1.bf16.msra.mxu0 0
      %2297 = vmatprep.subr.bf16.mxu0 0
      %2298 = vmatpush1.bf16.msra.mxu0 0
      %2299 = vmatprep.subr.bf16.mxu0 0
      %2300 = vmatpush1.bf16.msra.mxu0 0
      %2301 = vmatprep.subr.bf16.mxu0 0
      %2302 = vmatpush1.bf16.msra.mxu0 0
      %2303 = vmatprep.subr.bf16.mxu0 0
      %2304 = vmatpush1.bf16.msra.mxu0 %v2277
      %2305 = vmatprep.subr.bf16.mxu0 0
      %2306 = vmatpush1.bf16.msra.mxu0 %v2276
      %2307 = vmatprep.subr.bf16.mxu0 0
      %2308 = vmatpush1.bf16.msra.mxu0 %v2275
      %2309 = vmatprep.subr.bf16.mxu0 0
      %2310 = vmatpush1.bf16.msra.mxu0 %v2274
      %2311 = vmatprep.subr.bf16.mxu0 0
      %2312 = vmatpush2.bf16.msra.mxu0 0
      %2313 = vmatprep.subr.bf16.mxu0 0
      %2314 = vmatpush2.bf16.msra.mxu0 0
      %2315 = vmatprep.subr.bf16.mxu0 0
      %2316 = vmatpush2.bf16.msra.mxu0 0
      %2317 = vmatprep.subr.bf16.mxu0 0
      %2318 = vmatpush2.bf16.msra.mxu0 0
      %2319 = vmatprep.subr.bf16.mxu0 0
      %2320 = vmatpush2.bf16.msra.mxu0 0
      %2321 = vmatprep.subr.bf16.mxu0 0
      %2322 = vmatpush2.bf16.msra.mxu0 0
      %2323 = vmatprep.subr.bf16.mxu0 0
      %2324 = vmatpush2.bf16.msra.mxu0 0
      %2325 = vmatprep.subr.bf16.mxu0 0
      %2326 = vmatpush2.bf16.msra.mxu0 0
      %2327 = vmatprep.mubr.bf16.mxu0 0
      %2328 = vmatmul.mubr.bf16.gmra.mxu0 %v2284
      %v2329 = vpop.f32.mrf.mxu0
      %v2330 = vadd.f32 %v2221, %v2329
      %v2331 = vpop.f32.mrf.mxu0
      %v2332 = vpop.f32.mrf.mxu0
      %v2333 = vadd.f32 %v2226, %v2332
      %v2334 = vpop.f32.mrf.mxu0
      %2335 = vmatprep.mubr.bf16.mxu0 0
      %2336 = vmatmul.mubr.bf16.gmra.mxu0 %v2287
      %v2337 = vpop.f32.mrf.mxu0
      %v2338 = vadd.f32 %v2231, %v2337
      %v2339 = vpop.f32.mrf.mxu0
      %v2340 = vpop.f32.mrf.mxu0
      %v2341 = vadd.f32 %v2236, %v2340
      %v2342 = vpop.f32.mrf.mxu0
      %2343 = vmatprep.mubr.bf16.mxu0 0
      %2344 = vmatmul.mubr.bf16.gmra.mxu0 %v2290
      %v2345 = vpop.f32.mrf.mxu0
      %v2346 = vadd.f32 %v2241, %v2345
      %v2347 = vpop.f32.mrf.mxu0
      %v2348 = vpop.f32.mrf.mxu0
      %v2349 = vadd.f32 %v2246, %v2348
      %v2350 = vpop.f32.mrf.mxu0
      %2351 = vmatprep.mubr.bf16.mxu0 0
      %2352 = vmatmul.mubr.bf16.gmra.mxu0 %v2293
      %v2353 = vpop.f32.mrf.mxu0
      %v2354 = vadd.f32 %v2251, %v2353
      %v2355 = vpop.f32.mrf.mxu0
      %v2356 = vpop.f32.mrf.mxu0
      %v2357 = vadd.f32 %v2256, %v2356
      %v2358 = vpop.f32.mrf.mxu0
      %2359 = vdwg.mxu0
      %v2360 = vmul.f32 %v2330, 0.5
      %v2361 = vmul.f32 %v2333, 0.5
      %v2362 = vmul.f32 %v2338, 0.5
      %v2363 = vmul.f32 %v2341, 0.5
      %v2364 = vmul.f32 %v2346, 0.5
      %v2365 = vmul.f32 %v2349, 0.5
      %v2366 = vmul.f32 %v2354, 0.5
      %v2367 = vmul.f32 %v2357, 0.5
      %v2368 = vmul.f32 %v2330, 0.70710677
      %v2369 = vmul.f32 %v2333, 0.70710677
      %v2370 = vmul.f32 %v2338, 0.70710677
      %v2371 = vmul.f32 %v2341, 0.70710677
      %v2372 = vmul.f32 %v2346, 0.70710677
      %v2373 = vmul.f32 %v2349, 0.70710677
      %v2374 = vmul.f32 %v2354, 0.70710677
      %v2375 = vmul.f32 %v2357, 0.70710677
      %v2376 = verf.f32.pop %v2368
      %v2377 = verf.f32.pop %v2369
      %v2378 = verf.f32.pop %v2370
      %v2379 = verf.f32.pop %v2371
      %v2380 = verf.f32.pop %v2372
      %v2381 = verf.f32.pop %v2373
      %v2382 = verf.f32.pop %v2374
      %v2383 = verf.f32.pop %v2375
      %v2384 = vadd.f32 %v2376, 1.0
      %v2385 = vadd.f32 %v2377, 1.0
      %v2386 = vadd.f32 %v2378, 1.0
      %v2387 = vadd.f32 %v2379, 1.0
      %v2388 = vadd.f32 %v2380, 1.0
      %v2389 = vadd.f32 %v2381, 1.0
      %v2390 = vadd.f32 %v2382, 1.0
      %v2391 = vadd.f32 %v2383, 1.0
      %v2392 = vmul.f32 %v2360, %v2384
      %v2393 = vmul.f32 %v2361, %v2385
      %v2394 = vmul.f32 %v2362, %v2386
      %v2395 = vmul.f32 %v2363, %v2387
      %v2396 = vmul.f32 %v2364, %v2388
      %v2397 = vmul.f32 %v2365, %v2389
      %v2398 = vmul.f32 %v2366, %v2390
      %v2399 = vmul.f32 %v2367, %v2391
      %v2400 = vpack.c.bf16 %v2393, %v2392
      %v2401 = vpack.c.bf16 %v2395, %v2394
      %v2402 = vpack.c.bf16 %v2397, %v2396
      %v2403 = vpack.c.bf16 %v2399, %v2398
      %vm2404 = vcmask 207872
      %2405 = vst.msk [vmem:[#allocation4] sm:$0xf] %vm2404, 0
      %2406 = vst.msk [vmem:[#allocation4 + $0x4] sm:$0xf] %vm2404, 0
      %2407 = vst.msk [vmem:[#allocation4 + $0x8] sm:$0xf] %vm2404, 0
      %2408 = vst.msk [vmem:[#allocation4 + $0xc] sm:$0xf] %vm2404, 0
      %2409 = vst.msk [vmem:[#allocation4 + $0x10] sm:$0xf] %vm2404, 0
      %2410 = vst.msk [vmem:[#allocation4 + $0x14] sm:$0xf] %vm2404, 0
      %2411 = vst.msk [vmem:[#allocation4 + $0x18] sm:$0xf] %vm2404, 0
      %2412 = vst.msk [vmem:[#allocation4 + $0x1c] sm:$0xf] %vm2404, 0
      %v2417 = vunpack.c.l.b16 %v2400
      %v2418 = vunpack.c.h.b16 %v2400
      %v2419 = vunpack.c.l.b16 %v2401
      %v2420 = vunpack.c.h.b16 %v2401
      %v2421 = vunpack.c.l.b16 %v2402
      %v2422 = vunpack.c.h.b16 %v2402
      %v2423 = vunpack.c.l.b16 %v2403
      %v2424 = vunpack.c.h.b16 %v2403
      %v2425 = vpack.c.b16 %v2417, %v2417
      %v2426 = vpack.c.b16 %v2418, %v2418
      %v2427 = vpack.c.b16 %v2419, %v2419
      %v2428 = vpack.c.b16 %v2420, %v2420
      %v2429 = vpack.c.b16 %v2421, %v2421
      %v2430 = vpack.c.b16 %v2422, %v2422
      %v2431 = vpack.c.b16 %v2423, %v2423
      %v2432 = vpack.c.b16 %v2424, %v2424
      %2433 = vrot.lane.b32.xlu0 %v2425, 5
      %v2434 = vpop.permute.xlu0 %2433
      %2435 = vrot.lane.b32.xlu0 %v2426, 5
      %v2436 = vpop.permute.xlu0 %2435
      %2437 = vrot.lane.b32.xlu0 %v2427, 5
      %v2438 = vpop.permute.xlu0 %2437
      %2439 = vrot.lane.b32.xlu0 %v2428, 5
      %v2440 = vpop.permute.xlu0 %2439
      %2441 = vrot.lane.b32.xlu0 %v2429, 5
      %v2442 = vpop.permute.xlu0 %2441
      %2443 = vrot.lane.b32.xlu0 %v2430, 5
      %v2444 = vpop.permute.xlu0 %2443
      %2445 = vrot.lane.b32.xlu0 %v2431, 5
      %v2446 = vpop.permute.xlu0 %2445
      %2447 = vrot.lane.b32.xlu0 %v2432, 5
      %v2448 = vpop.permute.xlu0 %2447
      %vm2457 = vcmask 166952
      %2458 = vst.msk [vmem:[#allocation4] sm:$0xf] %vm2457, %v2434
      %2459 = vst.msk [vmem:[#allocation4 + $0x4] sm:$0xf] %vm2457, %v2436
      %2460 = vst.msk [vmem:[#allocation4 + $0x8] sm:$0xf] %vm2457, %v2438
      %2461 = vst.msk [vmem:[#allocation4 + $0xc] sm:$0xf] %vm2457, %v2440
      %2462 = vst.msk [vmem:[#allocation4 + $0x10] sm:$0xf] %vm2457, %v2442
      %2463 = vst.msk [vmem:[#allocation4 + $0x14] sm:$0xf] %vm2457, %v2444
      %2464 = vst.msk [vmem:[#allocation4 + $0x18] sm:$0xf] %vm2457, %v2446
      %2465 = vst.msk [vmem:[#allocation4 + $0x1c] sm:$0xf] %vm2457, %v2448
      %v2466 = vld [vmem:[#allocation4] sm:$0xf]
      %v2467 = vld [vmem:[#allocation4 + $0x4] sm:$0xf]
      %v2468 = vld [vmem:[#allocation4 + $0x8] sm:$0xf]
      %v2469 = vld [vmem:[#allocation4 + $0xc] sm:$0xf]
      %v2470 = vld [vmem:[#allocation4 + $0x10] sm:$0xf]
      %v2471 = vld [vmem:[#allocation4 + $0x14] sm:$0xf]
      %v2472 = vld [vmem:[#allocation4 + $0x18] sm:$0xf]
      %v2473 = vld [vmem:[#allocation4 + $0x1c] sm:$0xf]
      %v2474 = vand.u32 %v528, 3
      %vm2475 = vcmp.ge.s32.totalorder %v2474, 1
      %vm2476 = vcmp.le.s32.totalorder %v2474, 2
      %vm2477 = vmpackc.low %vm2475, %vm2475
      %v2478 = vsel %vm2477, %v2466, 0
      %v2479 = vsel %vm2477, %v2467, 0
      %v2480 = vsel %vm2477, %v2468, 0
      %v2481 = vsel %vm2477, %v2469, 0
      %v2482 = vsel %vm2477, %v2470, 0
      %v2483 = vsel %vm2477, %v2471, 0
      %v2484 = vsel %vm2477, %v2472, 0
      %v2485 = vsel %vm2477, %v2473, 0
      %vm2486 = vcmask 125952
      %2487 = vst.msk [vmem:[#allocation9] sm:$0xf] %vm2486, %v2478
      %2488 = vst.msk [vmem:[#allocation9 + $0x4] sm:$0xf] %vm2486, %v2479
      %2489 = vst.msk [vmem:[#allocation9 + $0x8] sm:$0xf] %vm2486, %v2480
      %2490 = vst.msk [vmem:[#allocation9 + $0xc] sm:$0xf] %vm2486, %v2481
      %2491 = vst.msk [vmem:[#allocation9 + $0x10] sm:$0xf] %vm2486, %v2482
      %2492 = vst.msk [vmem:[#allocation9 + $0x14] sm:$0xf] %vm2486, %v2483
      %2493 = vst.msk [vmem:[#allocation9 + $0x18] sm:$0xf] %vm2486, %v2484
      %2494 = vst.msk [vmem:[#allocation9 + $0x1c] sm:$0xf] %vm2486, %v2485
      %2503 = vrot.lane.b32.xlu0 %v2466, 127
      %v2504 = vpop.permute.xlu0 %2503
      %2505 = vrot.lane.b32.xlu0 %v2467, 127
      %v2506 = vpop.permute.xlu0 %2505
      %2507 = vrot.lane.b32.xlu0 %v2468, 127
      %v2508 = vpop.permute.xlu0 %2507
      %2509 = vrot.lane.b32.xlu0 %v2469, 127
      %v2510 = vpop.permute.xlu0 %2509
      %2511 = vrot.lane.b32.xlu0 %v2470, 127
      %v2512 = vpop.permute.xlu0 %2511
      %2513 = vrot.lane.b32.xlu0 %v2471, 127
      %v2514 = vpop.permute.xlu0 %2513
      %2515 = vrot.lane.b32.xlu0 %v2472, 127
      %v2516 = vpop.permute.xlu0 %2515
      %2517 = vrot.lane.b32.xlu0 %v2473, 127
      %v2518 = vpop.permute.xlu0 %2517
      %2527 = vst.msk [vmem:[#allocation9 + $0x20] sm:$0xf] %vm2486, %v2504
      %2528 = vst.msk [vmem:[#allocation9 + $0x24] sm:$0xf] %vm2486, %v2506
      %2529 = vst.msk [vmem:[#allocation9 + $0x28] sm:$0xf] %vm2486, %v2508
      %2530 = vst.msk [vmem:[#allocation9 + $0x2c] sm:$0xf] %vm2486, %v2510
      %2531 = vst.msk [vmem:[#allocation9 + $0x30] sm:$0xf] %vm2486, %v2512
      %2532 = vst.msk [vmem:[#allocation9 + $0x34] sm:$0xf] %vm2486, %v2514
      %2533 = vst.msk [vmem:[#allocation9 + $0x38] sm:$0xf] %vm2486, %v2516
      %2534 = vst.msk [vmem:[#allocation9 + $0x3c] sm:$0xf] %vm2486, %v2518
      %vm2535 = vmpackc.low %vm2476, %vm2476
      %v2536 = vsel %vm2535, 65537, 0
      %2537 = vrot.lane.b32.xlu0 %v2536, 2
      %v2538 = vpop.permute.xlu0 %2537
      %vm2539 = vcmp.ne.s16.totalorder %v2538, 0
      %v2540 = vsel %vm2539, %v2466, 0
      %v2541 = vsel %vm2539, %v2467, 0
      %v2542 = vsel %vm2539, %v2468, 0
      %v2543 = vsel %vm2539, %v2469, 0
      %v2544 = vsel %vm2539, %v2470, 0
      %v2545 = vsel %vm2539, %v2471, 0
      %v2546 = vsel %vm2539, %v2472, 0
      %v2547 = vsel %vm2539, %v2473, 0
      %2556 = vrot.lane.b32.xlu0 %v2540, 126
      %v2557 = vpop.permute.xlu0 %2556
      %2558 = vrot.lane.b32.xlu0 %v2541, 126
      %v2559 = vpop.permute.xlu0 %2558
      %2560 = vrot.lane.b32.xlu0 %v2542, 126
      %v2561 = vpop.permute.xlu0 %2560
      %2562 = vrot.lane.b32.xlu0 %v2543, 126
      %v2563 = vpop.permute.xlu0 %2562
      %2564 = vrot.lane.b32.xlu0 %v2544, 126
      %v2565 = vpop.permute.xlu0 %2564
      %2566 = vrot.lane.b32.xlu0 %v2545, 126
      %v2567 = vpop.permute.xlu0 %2566
      %2568 = vrot.lane.b32.xlu0 %v2546, 126
      %v2569 = vpop.permute.xlu0 %2568
      %2570 = vrot.lane.b32.xlu0 %v2547, 126
      %v2571 = vpop.permute.xlu0 %2570
      %2580 = vst.msk [vmem:[#allocation9 + $0x40] sm:$0xf] %vm2486, %v2557
      %2581 = vst.msk [vmem:[#allocation9 + $0x44] sm:$0xf] %vm2486, %v2559
      %2582 = vst.msk [vmem:[#allocation9 + $0x48] sm:$0xf] %vm2486, %v2561
      %2583 = vst.msk [vmem:[#allocation9 + $0x4c] sm:$0xf] %vm2486, %v2563
      %2584 = vst.msk [vmem:[#allocation9 + $0x50] sm:$0xf] %vm2486, %v2565
      %2585 = vst.msk [vmem:[#allocation9 + $0x54] sm:$0xf] %vm2486, %v2567
      %2586 = vst.msk [vmem:[#allocation9 + $0x58] sm:$0xf] %vm2486, %v2569
      %2587 = vst.msk [vmem:[#allocation9 + $0x5c] sm:$0xf] %vm2486, %v2571
      %v2588 = vsel %vm2477, 65537, 0
      %2589 = vrot.lane.b32.xlu0 %v2588, 4
      %v2590 = vpop.permute.xlu0 %2589
      %vm2591 = vcmp.ne.s16.totalorder %v2590, 0
      %v2592 = vsel %vm2591, %v2466, 0
      %v2593 = vsel %vm2591, %v2467, 0
      %v2594 = vsel %vm2591, %v2468, 0
      %v2595 = vsel %vm2591, %v2469, 0
      %v2596 = vsel %vm2591, %v2470, 0
      %v2597 = vsel %vm2591, %v2471, 0
      %v2598 = vsel %vm2591, %v2472, 0
      %v2599 = vsel %vm2591, %v2473, 0
      %2608 = vrot.lane.b32.xlu0 %v2592, 124
      %v2609 = vpop.permute.xlu0 %2608
      %2610 = vrot.lane.b32.xlu0 %v2593, 124
      %v2611 = vpop.permute.xlu0 %2610
      %2612 = vrot.lane.b32.xlu0 %v2594, 124
      %v2613 = vpop.permute.xlu0 %2612
      %2614 = vrot.lane.b32.xlu0 %v2595, 124
      %v2615 = vpop.permute.xlu0 %2614
      %2616 = vrot.lane.b32.xlu0 %v2596, 124
      %v2617 = vpop.permute.xlu0 %2616
      %2618 = vrot.lane.b32.xlu0 %v2597, 124
      %v2619 = vpop.permute.xlu0 %2618
      %2620 = vrot.lane.b32.xlu0 %v2598, 124
      %v2621 = vpop.permute.xlu0 %2620
      %2622 = vrot.lane.b32.xlu0 %v2599, 124
      %v2623 = vpop.permute.xlu0 %2622
      %2632 = vst.msk [vmem:[#allocation9 + $0x60] sm:$0xf] %vm2486, %v2609
      %2633 = vst.msk [vmem:[#allocation9 + $0x64] sm:$0xf] %vm2486, %v2611
      %2634 = vst.msk [vmem:[#allocation9 + $0x68] sm:$0xf] %vm2486, %v2613
      %2635 = vst.msk [vmem:[#allocation9 + $0x6c] sm:$0xf] %vm2486, %v2615
      %2636 = vst.msk [vmem:[#allocation9 + $0x70] sm:$0xf] %vm2486, %v2617
      %2637 = vst.msk [vmem:[#allocation9 + $0x74] sm:$0xf] %vm2486, %v2619
      %2638 = vst.msk [vmem:[#allocation9 + $0x78] sm:$0xf] %vm2486, %v2621
      %2639 = vst.msk [vmem:[#allocation9 + $0x7c] sm:$0xf] %vm2486, %v2623
      %2640 = vrot.lane.b32.xlu0 %v2466, 123
      %v2641 = vpop.permute.xlu0 %2640
      %2642 = vrot.lane.b32.xlu0 %v2467, 123
      %v2643 = vpop.permute.xlu0 %2642
      %2644 = vrot.lane.b32.xlu0 %v2468, 123
      %v2645 = vpop.permute.xlu0 %2644
      %2646 = vrot.lane.b32.xlu0 %v2469, 123
      %v2647 = vpop.permute.xlu0 %2646
      %2648 = vrot.lane.b32.xlu0 %v2470, 123
      %v2649 = vpop.permute.xlu0 %2648
      %2650 = vrot.lane.b32.xlu0 %v2471, 123
      %v2651 = vpop.permute.xlu0 %2650
      %2652 = vrot.lane.b32.xlu0 %v2472, 123
      %v2653 = vpop.permute.xlu0 %2652
      %2654 = vrot.lane.b32.xlu0 %v2473, 123
      %v2655 = vpop.permute.xlu0 %2654
      %2664 = vst.msk [vmem:[#allocation9 + $0x80] sm:$0xf] %vm2486, %v2641
      %2665 = vst.msk [vmem:[#allocation9 + $0x84] sm:$0xf] %vm2486, %v2643
      %2666 = vst.msk [vmem:[#allocation9 + $0x88] sm:$0xf] %vm2486, %v2645
      %2667 = vst.msk [vmem:[#allocation9 + $0x8c] sm:$0xf] %vm2486, %v2647
      %2668 = vst.msk [vmem:[#allocation9 + $0x90] sm:$0xf] %vm2486, %v2649
      %2669 = vst.msk [vmem:[#allocation9 + $0x94] sm:$0xf] %vm2486, %v2651
      %2670 = vst.msk [vmem:[#allocation9 + $0x98] sm:$0xf] %vm2486, %v2653
      %2671 = vst.msk [vmem:[#allocation9 + $0x9c] sm:$0xf] %vm2486, %v2655
      %2672 = vrot.lane.b32.xlu0 %v2536, 6
      %v2673 = vpop.permute.xlu0 %2672
      %vm2674 = vcmp.ne.s16.totalorder %v2673, 0
      %v2675 = vsel %vm2674, %v2466, 0
      %v2676 = vsel %vm2674, %v2467, 0
      %v2677 = vsel %vm2674, %v2468, 0
      %v2678 = vsel %vm2674, %v2469, 0
      %v2679 = vsel %vm2674, %v2470, 0
      %v2680 = vsel %vm2674, %v2471, 0
      %v2681 = vsel %vm2674, %v2472, 0
      %v2682 = vsel %vm2674, %v2473, 0
      %2691 = vrot.lane.b32.xlu0 %v2675, 122
      %v2692 = vpop.permute.xlu0 %2691
      %2693 = vrot.lane.b32.xlu0 %v2676, 122
      %v2694 = vpop.permute.xlu0 %2693
      %2695 = vrot.lane.b32.xlu0 %v2677, 122
      %v2696 = vpop.permute.xlu0 %2695
      %2697 = vrot.lane.b32.xlu0 %v2678, 122
      %v2698 = vpop.permute.xlu0 %2697
      %2699 = vrot.lane.b32.xlu0 %v2679, 122
      %v2700 = vpop.permute.xlu0 %2699
      %2701 = vrot.lane.b32.xlu0 %v2680, 122
      %v2702 = vpop.permute.xlu0 %2701
      %2703 = vrot.lane.b32.xlu0 %v2681, 122
      %v2704 = vpop.permute.xlu0 %2703
      %2705 = vrot.lane.b32.xlu0 %v2682, 122
      %v2706 = vpop.permute.xlu0 %2705
      %2715 = vst.msk [vmem:[#allocation9 + $0xa0] sm:$0xf] %vm2486, %v2692
      %2716 = vst.msk [vmem:[#allocation9 + $0xa4] sm:$0xf] %vm2486, %v2694
      %2717 = vst.msk [vmem:[#allocation9 + $0xa8] sm:$0xf] %vm2486, %v2696
      %2718 = vst.msk [vmem:[#allocation9 + $0xac] sm:$0xf] %vm2486, %v2698
      %2719 = vst.msk [vmem:[#allocation9 + $0xb0] sm:$0xf] %vm2486, %v2700
      %2720 = vst.msk [vmem:[#allocation9 + $0xb4] sm:$0xf] %vm2486, %v2702
      %2721 = vst.msk [vmem:[#allocation9 + $0xb8] sm:$0xf] %vm2486, %v2704
      %2722 = vst.msk [vmem:[#allocation9 + $0xbc] sm:$0xf] %vm2486, %v2706
      %2723 = vrot.lane.b32.xlu0 %v2588, 8
      %v2724 = vpop.permute.xlu0 %2723
      %vm2725 = vcmp.ne.s16.totalorder %v2724, 0
      %v2726 = vsel %vm2725, %v2466, 0
      %v2727 = vsel %vm2725, %v2467, 0
      %v2728 = vsel %vm2725, %v2468, 0
      %v2729 = vsel %vm2725, %v2469, 0
      %v2730 = vsel %vm2725, %v2470, 0
      %v2731 = vsel %vm2725, %v2471, 0
      %v2732 = vsel %vm2725, %v2472, 0
      %v2733 = vsel %vm2725, %v2473, 0
      %2742 = vrot.lane.b32.xlu0 %v2726, 120
      %v2743 = vpop.permute.xlu0 %2742
      %2744 = vrot.lane.b32.xlu0 %v2727, 120
      %v2745 = vpop.permute.xlu0 %2744
      %2746 = vrot.lane.b32.xlu0 %v2728, 120
      %v2747 = vpop.permute.xlu0 %2746
      %2748 = vrot.lane.b32.xlu0 %v2729, 120
      %v2749 = vpop.permute.xlu0 %2748
      %2750 = vrot.lane.b32.xlu0 %v2730, 120
      %v2751 = vpop.permute.xlu0 %2750
      %2752 = vrot.lane.b32.xlu0 %v2731, 120
      %v2753 = vpop.permute.xlu0 %2752
      %2754 = vrot.lane.b32.xlu0 %v2732, 120
      %v2755 = vpop.permute.xlu0 %2754
      %2756 = vrot.lane.b32.xlu0 %v2733, 120
      %v2757 = vpop.permute.xlu0 %2756
      %2766 = vst.msk [vmem:[#allocation9 + $0xc0] sm:$0xf] %vm2486, %v2743
      %2767 = vst.msk [vmem:[#allocation9 + $0xc4] sm:$0xf] %vm2486, %v2745
      %2768 = vst.msk [vmem:[#allocation9 + $0xc8] sm:$0xf] %vm2486, %v2747
      %2769 = vst.msk [vmem:[#allocation9 + $0xcc] sm:$0xf] %vm2486, %v2749
      %2770 = vst.msk [vmem:[#allocation9 + $0xd0] sm:$0xf] %vm2486, %v2751
      %2771 = vst.msk [vmem:[#allocation9 + $0xd4] sm:$0xf] %vm2486, %v2753
      %2772 = vst.msk [vmem:[#allocation9 + $0xd8] sm:$0xf] %vm2486, %v2755
      %2773 = vst.msk [vmem:[#allocation9 + $0xdc] sm:$0xf] %vm2486, %v2757
      %2774 = vrot.lane.b32.xlu0 %v2466, 119
      %v2775 = vpop.permute.xlu0 %2774
      %2776 = vrot.lane.b32.xlu0 %v2467, 119
      %v2777 = vpop.permute.xlu0 %2776
      %2778 = vrot.lane.b32.xlu0 %v2468, 119
      %v2779 = vpop.permute.xlu0 %2778
      %2780 = vrot.lane.b32.xlu0 %v2469, 119
      %v2781 = vpop.permute.xlu0 %2780
      %2782 = vrot.lane.b32.xlu0 %v2470, 119
      %v2783 = vpop.permute.xlu0 %2782
      %2784 = vrot.lane.b32.xlu0 %v2471, 119
      %v2785 = vpop.permute.xlu0 %2784
      %2786 = vrot.lane.b32.xlu0 %v2472, 119
      %v2787 = vpop.permute.xlu0 %2786
      %2788 = vrot.lane.b32.xlu0 %v2473, 119
      %v2789 = vpop.permute.xlu0 %2788
      %2798 = vst.msk [vmem:[#allocation9 + $0xe0] sm:$0xf] %vm2486, %v2775
      %2799 = vst.msk [vmem:[#allocation9 + $0xe4] sm:$0xf] %vm2486, %v2777
      %2800 = vst.msk [vmem:[#allocation9 + $0xe8] sm:$0xf] %vm2486, %v2779
      %2801 = vst.msk [vmem:[#allocation9 + $0xec] sm:$0xf] %vm2486, %v2781
      %2802 = vst.msk [vmem:[#allocation9 + $0xf0] sm:$0xf] %vm2486, %v2783
      %2803 = vst.msk [vmem:[#allocation9 + $0xf4] sm:$0xf] %vm2486, %v2785
      %2804 = vst.msk [vmem:[#allocation9 + $0xf8] sm:$0xf] %vm2486, %v2787
      %2805 = vst.msk [vmem:[#allocation9 + $0xfc] sm:$0xf] %vm2486, %v2789
      %2806 = vrot.lane.b32.xlu0 %v2536, 10
      %v2807 = vpop.permute.xlu0 %2806
      %vm2808 = vcmp.ne.s16.totalorder %v2807, 0
      %v2809 = vsel %vm2808, %v2466, 0
      %v2810 = vsel %vm2808, %v2467, 0
      %v2811 = vsel %vm2808, %v2468, 0
      %v2812 = vsel %vm2808, %v2469, 0
      %v2813 = vsel %vm2808, %v2470, 0
      %v2814 = vsel %vm2808, %v2471, 0
      %v2815 = vsel %vm2808, %v2472, 0
      %v2816 = vsel %vm2808, %v2473, 0
      %2825 = vrot.lane.b32.xlu0 %v2809, 118
      %v2826 = vpop.permute.xlu0 %2825
      %2827 = vrot.lane.b32.xlu0 %v2810, 118
      %v2828 = vpop.permute.xlu0 %2827
      %2829 = vrot.lane.b32.xlu0 %v2811, 118
      %v2830 = vpop.permute.xlu0 %2829
      %2831 = vrot.lane.b32.xlu0 %v2812, 118
      %v2832 = vpop.permute.xlu0 %2831
      %2833 = vrot.lane.b32.xlu0 %v2813, 118
      %v2834 = vpop.permute.xlu0 %2833
      %2835 = vrot.lane.b32.xlu0 %v2814, 118
      %v2836 = vpop.permute.xlu0 %2835
      %2837 = vrot.lane.b32.xlu0 %v2815, 118
      %v2838 = vpop.permute.xlu0 %2837
      %2839 = vrot.lane.b32.xlu0 %v2816, 118
      %v2840 = vpop.permute.xlu0 %2839
      %2849 = vst.msk [vmem:[#allocation9 + $0x100] sm:$0xf] %vm2486, %v2826
      %2850 = vst.msk [vmem:[#allocation9 + $0x104] sm:$0xf] %vm2486, %v2828
      %2851 = vst.msk [vmem:[#allocation9 + $0x108] sm:$0xf] %vm2486, %v2830
      %2852 = vst.msk [vmem:[#allocation9 + $0x10c] sm:$0xf] %vm2486, %v2832
      %2853 = vst.msk [vmem:[#allocation9 + $0x110] sm:$0xf] %vm2486, %v2834
      %2854 = vst.msk [vmem:[#allocation9 + $0x114] sm:$0xf] %vm2486, %v2836
      %2855 = vst.msk [vmem:[#allocation9 + $0x118] sm:$0xf] %vm2486, %v2838
      %2856 = vst.msk [vmem:[#allocation9 + $0x11c] sm:$0xf] %vm2486, %v2840
      %v2857 = vld [vmem:[%s9] sm:$0xff]
      %v2858 = vld [vmem:[%s9 + $0x8] sm:$0xff]
      %v2859 = vld [vmem:[%s9 + $0x10] sm:$0xf]
      %v2860 = vld [vmem:[%s9 + $0x14] sm:$0xff]
      %v2861 = vld [vmem:[%s9 + $0x1c] sm:$0xff]
      %v2862 = vld [vmem:[%s9 + $0x24] sm:$0xf]
      %v2863 = vld [vmem:[%s9 + $0x28] sm:$0xff]
      %v2864 = vld [vmem:[%s9 + $0x30] sm:$0xff]
      %v2865 = vld [vmem:[%s9 + $0x38] sm:$0xf]
      %v2866 = vld [vmem:[%s9 + $0x3c] sm:$0xff]
      %v2867 = vld [vmem:[%s9 + $0x44] sm:$0xff]
      %v2868 = vld [vmem:[%s9 + $0x4c] sm:$0xf]
      %v2869 = vld [vmem:[%s9 + $0x50] sm:$0xff]
      %v2870 = vld [vmem:[%s9 + $0x58] sm:$0xff]
      %v2871 = vld [vmem:[%s9 + $0x60] sm:$0xf]
      %v2872 = vld [vmem:[%s9 + $0x64] sm:$0xff]
      %v2873 = vld [vmem:[%s9 + $0x6c] sm:$0xff]
      %v2874 = vld [vmem:[%s9 + $0x74] sm:$0xf]
      %v2875 = vld [vmem:[%s9 + $0x78] sm:$0xff]
      %v2876 = vld [vmem:[%s9 + $0x80] sm:$0xff]
      %v2877 = vld [vmem:[%s9 + $0x88] sm:$0xf]
      %v2878 = vld [vmem:[%s9 + $0x8c] sm:$0xff]
      %v2879 = vld [vmem:[%s9 + $0x94] sm:$0xff]
      %v2880 = vld [vmem:[%s9 + $0x9c] sm:$0xf]
      %v2881 = vld [vmem:[#allocation9] sm:$0xf]
      %v2882 = vld [vmem:[#allocation9 + $0x4] sm:$0xf]
      %v2883 = vld [vmem:[#allocation9 + $0x8] sm:$0xf]
      %v2884 = vld [vmem:[#allocation9 + $0xc] sm:$0xf]
      %v2885 = vld [vmem:[#allocation9 + $0x10] sm:$0xf]
      %v2886 = vld [vmem:[#allocation9 + $0x14] sm:$0xf]
      %v2887 = vld [vmem:[#allocation9 + $0x18] sm:$0xf]
      %v2888 = vld [vmem:[#allocation9 + $0x1c] sm:$0xf]
      %v2889 = vld [vmem:[#allocation9 + $0x20] sm:$0xf]
      %v2890 = vld [vmem:[#allocation9 + $0x24] sm:$0xf]
      %v2891 = vld [vmem:[#allocation9 + $0x28] sm:$0xf]
      %v2892 = vld [vmem:[#allocation9 + $0x2c] sm:$0xf]
      %v2893 = vld [vmem:[#allocation9 + $0x30] sm:$0xf]
      %v2894 = vld [vmem:[#allocation9 + $0x34] sm:$0xf]
      %v2895 = vld [vmem:[#allocation9 + $0x38] sm:$0xf]
      %v2896 = vld [vmem:[#allocation9 + $0x3c] sm:$0xf]
      %v2897 = vld [vmem:[#allocation9 + $0x40] sm:$0xf]
      %v2898 = vld [vmem:[#allocation9 + $0x44] sm:$0xf]
      %v2899 = vld [vmem:[#allocation9 + $0x48] sm:$0xf]
      %v2900 = vld [vmem:[#allocation9 + $0x4c] sm:$0xf]
      %v2901 = vld [vmem:[#allocation9 + $0x50] sm:$0xf]
      %v2902 = vld [vmem:[#allocation9 + $0x54] sm:$0xf]
      %v2903 = vld [vmem:[#allocation9 + $0x58] sm:$0xf]
      %v2904 = vld [vmem:[#allocation9 + $0x5c] sm:$0xf]
      %v2905 = vld [vmem:[#allocation9 + $0x60] sm:$0xf]
      %v2906 = vld [vmem:[#allocation9 + $0x64] sm:$0xf]
      %v2907 = vld [vmem:[#allocation9 + $0x68] sm:$0xf]
      %v2908 = vld [vmem:[#allocation9 + $0x6c] sm:$0xf]
      %v2909 = vld [vmem:[#allocation9 + $0x70] sm:$0xf]
      %v2910 = vld [vmem:[#allocation9 + $0x74] sm:$0xf]
      %v2911 = vld [vmem:[#allocation9 + $0x78] sm:$0xf]
      %v2912 = vld [vmem:[#allocation9 + $0x7c] sm:$0xf]
      %v2913 = vld [vmem:[#allocation9 + $0x80] sm:$0xf]
      %v2914 = vld [vmem:[#allocation9 + $0x84] sm:$0xf]
      %v2915 = vld [vmem:[#allocation9 + $0x88] sm:$0xf]
      %v2916 = vld [vmem:[#allocation9 + $0x8c] sm:$0xf]
      %v2917 = vld [vmem:[#allocation9 + $0x90] sm:$0xf]
      %v2918 = vld [vmem:[#allocation9 + $0x94] sm:$0xf]
      %v2919 = vld [vmem:[#allocation9 + $0x98] sm:$0xf]
      %v2920 = vld [vmem:[#allocation9 + $0x9c] sm:$0xf]
      %v2921 = vld [vmem:[#allocation9 + $0xa0] sm:$0xf]
      %v2922 = vld [vmem:[#allocation9 + $0xa4] sm:$0xf]
      %v2923 = vld [vmem:[#allocation9 + $0xa8] sm:$0xf]
      %v2924 = vld [vmem:[#allocation9 + $0xac] sm:$0xf]
      %v2925 = vld [vmem:[#allocation9 + $0xb0] sm:$0xf]
      %v2926 = vld [vmem:[#allocation9 + $0xb4] sm:$0xf]
      %v2927 = vld [vmem:[#allocation9 + $0xb8] sm:$0xf]
      %v2928 = vld [vmem:[#allocation9 + $0xbc] sm:$0xf]
      %v2929 = vld [vmem:[#allocation9 + $0xc0] sm:$0xf]
      %v2930 = vld [vmem:[#allocation9 + $0xc4] sm:$0xf]
      %v2931 = vld [vmem:[#allocation9 + $0xc8] sm:$0xf]
      %v2932 = vld [vmem:[#allocation9 + $0xcc] sm:$0xf]
      %v2933 = vld [vmem:[#allocation9 + $0xd0] sm:$0xf]
      %v2934 = vld [vmem:[#allocation9 + $0xd4] sm:$0xf]
      %v2935 = vld [vmem:[#allocation9 + $0xd8] sm:$0xf]
      %v2936 = vld [vmem:[#allocation9 + $0xdc] sm:$0xf]
      %v2937 = vld [vmem:[#allocation9 + $0xe0] sm:$0xf]
      %v2938 = vld [vmem:[#allocation9 + $0xe4] sm:$0xf]
      %v2939 = vld [vmem:[#allocation9 + $0xe8] sm:$0xf]
      %v2940 = vld [vmem:[#allocation9 + $0xec] sm:$0xf]
      %v2941 = vld [vmem:[#allocation9 + $0xf0] sm:$0xf]
      %v2942 = vld [vmem:[#allocation9 + $0xf4] sm:$0xf]
      %v2943 = vld [vmem:[#allocation9 + $0xf8] sm:$0xf]
      %v2944 = vld [vmem:[#allocation9 + $0xfc] sm:$0xf]
      %v2945 = vld [vmem:[#allocation9 + $0x100] sm:$0xf]
      %v2946 = vld [vmem:[#allocation9 + $0x104] sm:$0xf]
      %v2947 = vld [vmem:[#allocation9 + $0x108] sm:$0xf]
      %v2948 = vld [vmem:[#allocation9 + $0x10c] sm:$0xf]
      %v2949 = vld [vmem:[#allocation9 + $0x110] sm:$0xf]
      %v2950 = vld [vmem:[#allocation9 + $0x114] sm:$0xf]
      %v2951 = vld [vmem:[#allocation9 + $0x118] sm:$0xf]
      %v2952 = vld [vmem:[#allocation9 + $0x11c] sm:$0xf]
      %v2953 = vld [vmem:[%s10] sm:$0xff]
      %v2954 = vld [vmem:[%s10 + $0x8] sm:$0xff]
      %v2955 = vld [vmem:[%s10 + $0x10] sm:$0xff]
      %v2956 = vld [vmem:[%s10 + $0x18] sm:$0xff]
      %v2957 = vld [vmem:[%s10 + $0x20] sm:$0xff]
      %v2958 = vld [vmem:[%s10 + $0x28] sm:$0xff]
      %v2959 = vld [vmem:[%s10 + $0x30] sm:$0xff]
      %v2960 = vld [vmem:[%s10 + $0x38] sm:$0xff]
      %2962 = vset.pattern.permute.xlu0 0
      %2963 = vperm.xlu0 %2962, %v2953
      %v2964 = vpop.permute.xlu0 %2963
      %2967 = vset.pattern.permute.xlu0 0
      %2968 = vperm.xlu0 %2967, %v2954
      %v2969 = vpop.permute.xlu0 %2968
      %2972 = vset.pattern.permute.xlu0 0
      %2973 = vperm.xlu0 %2972, %v2955
      %v2974 = vpop.permute.xlu0 %2973
      %2977 = vset.pattern.permute.xlu0 0
      %2978 = vperm.xlu0 %2977, %v2956
      %v2979 = vpop.permute.xlu0 %2978
      %2982 = vset.pattern.permute.xlu0 0
      %2983 = vperm.xlu0 %2982, %v2957
      %v2984 = vpop.permute.xlu0 %2983
      %2987 = vset.pattern.permute.xlu0 0
      %2988 = vperm.xlu0 %2987, %v2958
      %v2989 = vpop.permute.xlu0 %2988
      %2992 = vset.pattern.permute.xlu0 0
      %2993 = vperm.xlu0 %2992, %v2959
      %v2994 = vpop.permute.xlu0 %2993
      %2997 = vset.pattern.permute.xlu0 0
      %2998 = vperm.xlu0 %2997, %v2960
      %v2999 = vpop.permute.xlu0 %2998
      %v3025 = vunpack.c.l.b16 %v2857
      %v3026 = vunpack.c.h.b16 %v2857
      %v3027 = vunpack.c.l.b16 %v2858
      %v3028 = vunpack.c.h.b16 %v2858
      %v3029 = vunpack.c.l.b16 %v2859
      %v3030 = vunpack.c.l.b16 %v2860
      %v3031 = vunpack.c.h.b16 %v2860
      %v3032 = vunpack.c.l.b16 %v2861
      %v3033 = vunpack.c.h.b16 %v2861
      %v3034 = vunpack.c.l.b16 %v2862
      %v3035 = vunpack.c.l.b16 %v2863
      %v3036 = vunpack.c.h.b16 %v2863
      %v3037 = vunpack.c.l.b16 %v2864
      %v3038 = vunpack.c.h.b16 %v2864
      %v3039 = vunpack.c.l.b16 %v2865
      %v3040 = vunpack.c.l.b16 %v2866
      %v3041 = vunpack.c.h.b16 %v2866
      %v3042 = vunpack.c.l.b16 %v2867
      %v3043 = vunpack.c.h.b16 %v2867
      %v3044 = vunpack.c.l.b16 %v2868
      %v3045 = vunpack.c.l.b16 %v2869
      %v3046 = vunpack.c.h.b16 %v2869
      %v3047 = vunpack.c.l.b16 %v2870
      %v3048 = vunpack.c.h.b16 %v2870
      %v3049 = vunpack.c.l.b16 %v2871
      %v3050 = vunpack.c.l.b16 %v2872
      %v3051 = vunpack.c.h.b16 %v2872
      %v3052 = vunpack.c.l.b16 %v2873
      %v3053 = vunpack.c.h.b16 %v2873
      %v3054 = vunpack.c.l.b16 %v2874
      %v3055 = vunpack.c.l.b16 %v2875
      %v3056 = vunpack.c.h.b16 %v2875
      %v3057 = vunpack.c.l.b16 %v2876
      %v3058 = vunpack.c.h.b16 %v2876
      %v3059 = vunpack.c.l.b16 %v2877
      %v3060 = vunpack.c.l.b16 %v2878
      %v3061 = vunpack.c.h.b16 %v2878
      %v3062 = vunpack.c.l.b16 %v2879
      %v3063 = vunpack.c.h.b16 %v2879
      %v3064 = vunpack.c.l.b16 %v2880
      %v3065 = vpack.c.b16 %v3030, %v3025
      %v3066 = vpack.c.b16 %v3031, %v3026
      %v3067 = vpack.c.b16 %v3032, %v3027
      %v3068 = vpack.c.b16 %v3033, %v3028
      %v3069 = vpack.c.b16 %v3034, %v3029
      %v3070 = vpack.c.b16 %v3040, %v3035
      %v3071 = vpack.c.b16 %v3041, %v3036
      %v3072 = vpack.c.b16 %v3042, %v3037
      %v3073 = vpack.c.b16 %v3043, %v3038
      %v3074 = vpack.c.b16 %v3044, %v3039
      %v3075 = vpack.c.b16 %v3050, %v3045
      %v3076 = vpack.c.b16 %v3051, %v3046
      %v3077 = vpack.c.b16 %v3052, %v3047
      %v3078 = vpack.c.b16 %v3053, %v3048
      %v3079 = vpack.c.b16 %v3054, %v3049
      %v3080 = vpack.c.b16 %v3060, %v3055
      %v3081 = vpack.c.b16 %v3061, %v3056
      %v3082 = vpack.c.b16 %v3062, %v3057
      %v3083 = vpack.c.b16 %v3063, %v3058
      %v3084 = vpack.c.b16 %v3064, %v3059
      %v3173 = vunpack.c.l.b16 %v2881
      %v3174 = vunpack.c.l.b16 %v2882
      %v3175 = vunpack.c.l.b16 %v2883
      %v3176 = vunpack.c.l.b16 %v2884
      %v3177 = vunpack.c.l.b16 %v2885
      %v3178 = vunpack.c.l.b16 %v2886
      %v3179 = vunpack.c.l.b16 %v2887
      %v3180 = vunpack.c.l.b16 %v2888
      %v3181 = vunpack.c.l.b16 %v2889
      %v3182 = vunpack.c.l.b16 %v2890
      %v3183 = vunpack.c.l.b16 %v2891
      %v3184 = vunpack.c.l.b16 %v2892
      %v3185 = vunpack.c.l.b16 %v2893
      %v3186 = vunpack.c.l.b16 %v2894
      %v3187 = vunpack.c.l.b16 %v2895
      %v3188 = vunpack.c.l.b16 %v2896
      %v3189 = vunpack.c.l.b16 %v2897
      %v3190 = vunpack.c.l.b16 %v2898
      %v3191 = vunpack.c.l.b16 %v2899
      %v3192 = vunpack.c.l.b16 %v2900
      %v3193 = vunpack.c.l.b16 %v2901
      %v3194 = vunpack.c.l.b16 %v2902
      %v3195 = vunpack.c.l.b16 %v2903
      %v3196 = vunpack.c.l.b16 %v2904
      %v3197 = vunpack.c.l.b16 %v2905
      %v3198 = vunpack.c.l.b16 %v2906
      %v3199 = vunpack.c.l.b16 %v2907
      %v3200 = vunpack.c.l.b16 %v2908
      %v3201 = vunpack.c.l.b16 %v2909
      %v3202 = vunpack.c.l.b16 %v2910
      %v3203 = vunpack.c.l.b16 %v2911
      %v3204 = vunpack.c.l.b16 %v2912
      %v3205 = vunpack.c.l.b16 %v2913
      %v3206 = vunpack.c.l.b16 %v2914
      %v3207 = vunpack.c.l.b16 %v2915
      %v3208 = vunpack.c.l.b16 %v2916
      %v3209 = vunpack.c.l.b16 %v2917
      %v3210 = vunpack.c.l.b16 %v2918
      %v3211 = vunpack.c.l.b16 %v2919
      %v3212 = vunpack.c.l.b16 %v2920
      %v3213 = vunpack.c.l.b16 %v2921
      %v3214 = vunpack.c.l.b16 %v2922
      %v3215 = vunpack.c.l.b16 %v2923
      %v3216 = vunpack.c.l.b16 %v2924
      %v3217 = vunpack.c.l.b16 %v2925
      %v3218 = vunpack.c.l.b16 %v2926
      %v3219 = vunpack.c.l.b16 %v2927
      %v3220 = vunpack.c.l.b16 %v2928
      %v3221 = vunpack.c.l.b16 %v2929
      %v3222 = vunpack.c.l.b16 %v2930
      %v3223 = vunpack.c.l.b16 %v2931
      %v3224 = vunpack.c.l.b16 %v2932
      %v3225 = vunpack.c.l.b16 %v2933
      %v3226 = vunpack.c.l.b16 %v2934
      %v3227 = vunpack.c.l.b16 %v2935
      %v3228 = vunpack.c.l.b16 %v2936
      %v3229 = vunpack.c.l.b16 %v2937
      %v3230 = vunpack.c.l.b16 %v2938
      %v3231 = vunpack.c.l.b16 %v2939
      %v3232 = vunpack.c.l.b16 %v2940
      %v3233 = vunpack.c.l.b16 %v2941
      %v3234 = vunpack.c.l.b16 %v2942
      %v3235 = vunpack.c.l.b16 %v2943
      %v3236 = vunpack.c.l.b16 %v2944
      %v3237 = vunpack.c.l.b16 %v2945
      %v3238 = vunpack.c.l.b16 %v2946
      %v3239 = vunpack.c.l.b16 %v2947
      %v3240 = vunpack.c.l.b16 %v2948
      %v3241 = vunpack.c.l.b16 %v2949
      %v3242 = vunpack.c.l.b16 %v2950
      %v3243 = vunpack.c.l.b16 %v2951
      %v3244 = vunpack.c.l.b16 %v2952
      %v3245 = vpack.c.b16 %v3174, %v3173
      %v3246 = vpack.c.b16 %v3176, %v3175
      %v3247 = vpack.c.b16 %v3178, %v3177
      %v3248 = vpack.c.b16 %v3180, %v3179
      %v3249 = vpack.c.b16 %v3182, %v3181
      %v3250 = vpack.c.b16 %v3184, %v3183
      %v3251 = vpack.c.b16 %v3186, %v3185
      %v3252 = vpack.c.b16 %v3188, %v3187
      %v3253 = vpack.c.b16 %v3190, %v3189
      %v3254 = vpack.c.b16 %v3192, %v3191
      %v3255 = vpack.c.b16 %v3194, %v3193
      %v3256 = vpack.c.b16 %v3196, %v3195
      %v3257 = vpack.c.b16 %v3198, %v3197
      %v3258 = vpack.c.b16 %v3200, %v3199
      %v3259 = vpack.c.b16 %v3202, %v3201
      %v3260 = vpack.c.b16 %v3204, %v3203
      %v3261 = vpack.c.b16 %v3206, %v3205
      %v3262 = vpack.c.b16 %v3208, %v3207
      %v3263 = vpack.c.b16 %v3210, %v3209
      %v3264 = vpack.c.b16 %v3212, %v3211
      %v3265 = vpack.c.b16 %v3214, %v3213
      %v3266 = vpack.c.b16 %v3216, %v3215
      %v3267 = vpack.c.b16 %v3218, %v3217
      %v3268 = vpack.c.b16 %v3220, %v3219
      %v3269 = vpack.c.b16 %v3222, %v3221
      %v3270 = vpack.c.b16 %v3224, %v3223
      %v3271 = vpack.c.b16 %v3226, %v3225
      %v3272 = vpack.c.b16 %v3228, %v3227
      %v3273 = vpack.c.b16 %v3230, %v3229
      %v3274 = vpack.c.b16 %v3232, %v3231
      %v3275 = vpack.c.b16 %v3234, %v3233
      %v3276 = vpack.c.b16 %v3236, %v3235
      %v3277 = vpack.c.b16 %v3238, %v3237
      %v3278 = vpack.c.b16 %v3240, %v3239
      %v3279 = vpack.c.b16 %v3242, %v3241
      %v3280 = vpack.c.b16 %v3244, %v3243
      %v3318 = vsel %vm2282, %v3069, 0
      %v3321 = vsel %vm2282, %v3074, 0
      %v3324 = vsel %vm2282, %v3079, 0
      %v3327 = vsel %vm2282, %v3084, 0
      %3329 = vmatprep.subr.bf16.mxu0 0
      %3330 = vmatpush1.bf16.msra.mxu0 %v3252
      %3331 = vmatprep.subr.bf16.mxu0 0
      %3332 = vmatpush1.bf16.msra.mxu0 %v3251
      %3333 = vmatprep.subr.bf16.mxu0 0
      %3334 = vmatpush1.bf16.msra.mxu0 %v3250
      %3335 = vmatprep.subr.bf16.mxu0 0
      %3336 = vmatpush1.bf16.msra.mxu0 %v3249
      %3337 = vmatprep.subr.bf16.mxu0 0
      %3338 = vmatpush1.bf16.msra.mxu0 %v3248
      %3339 = vmatprep.subr.bf16.mxu0 0
      %3340 = vmatpush1.bf16.msra.mxu0 %v3247
      %3341 = vmatprep.subr.bf16.mxu0 0
      %3342 = vmatpush1.bf16.msra.mxu0 %v3246
      %3343 = vmatprep.subr.bf16.mxu0 0
      %3344 = vmatpush1.bf16.msra.mxu0 %v3245
      %3345 = vmatprep.subr.bf16.mxu0 0
      %3346 = vmatpush2.bf16.msra.mxu0 %v3260
      %3347 = vmatprep.subr.bf16.mxu0 0
      %3348 = vmatpush2.bf16.msra.mxu0 %v3259
      %3349 = vmatprep.subr.bf16.mxu0 0
      %3350 = vmatpush2.bf16.msra.mxu0 %v3258
      %3351 = vmatprep.subr.bf16.mxu0 0
      %3352 = vmatpush2.bf16.msra.mxu0 %v3257
      %3353 = vmatprep.subr.bf16.mxu0 0
      %3354 = vmatpush2.bf16.msra.mxu0 %v3256
      %3355 = vmatprep.subr.bf16.mxu0 0
      %3356 = vmatpush2.bf16.msra.mxu0 %v3255
      %3357 = vmatprep.subr.bf16.mxu0 0
      %3358 = vmatpush2.bf16.msra.mxu0 %v3254
      %3359 = vmatprep.subr.bf16.mxu0 0
      %3360 = vmatpush2.bf16.msra.mxu0 %v3253
      %3361 = vmatprep.mubr.bf16.mxu0 %v3066
      %3362 = vmatmul.mubr.bf16.gmra.mxu0 %v3065
      %v3363 = vpop.f32.mrf.mxu0
      %v3364 = vadd.f32 %v2964, %v3363
      %v3365 = vpop.f32.mrf.mxu0
      %v3366 = vpop.f32.mrf.mxu0
      %v3367 = vadd.f32 %v2969, %v3366
      %v3368 = vpop.f32.mrf.mxu0
      %3369 = vmatprep.mubr.bf16.mxu0 %v3071
      %3370 = vmatmul.mubr.bf16.gmra.mxu0 %v3070
      %v3371 = vpop.f32.mrf.mxu0
      %v3372 = vadd.f32 %v2974, %v3371
      %v3373 = vpop.f32.mrf.mxu0
      %v3374 = vpop.f32.mrf.mxu0
      %v3375 = vadd.f32 %v2979, %v3374
      %v3376 = vpop.f32.mrf.mxu0
      %3377 = vmatprep.mubr.bf16.mxu0 %v3076
      %3378 = vmatmul.mubr.bf16.gmra.mxu0 %v3075
      %v3379 = vpop.f32.mrf.mxu0
      %v3380 = vadd.f32 %v2984, %v3379
      %v3381 = vpop.f32.mrf.mxu0
      %v3382 = vpop.f32.mrf.mxu0
      %v3383 = vadd.f32 %v2989, %v3382
      %v3384 = vpop.f32.mrf.mxu0
      %3385 = vmatprep.mubr.bf16.mxu0 %v3081
      %3386 = vmatmul.mubr.bf16.gmra.mxu0 %v3080
      %v3387 = vpop.f32.mrf.mxu0
      %v3388 = vadd.f32 %v2994, %v3387
      %v3389 = vpop.f32.mrf.mxu0
      %v3390 = vpop.f32.mrf.mxu0
      %v3391 = vadd.f32 %v2999, %v3390
      %v3392 = vpop.f32.mrf.mxu0
      %3393 = vdwg.mxu0
      %3394 = vmatprep.subr.bf16.mxu0 0
      %3395 = vmatpush1.bf16.msra.mxu0 %v3268
      %3396 = vmatprep.subr.bf16.mxu0 0
      %3397 = vmatpush1.bf16.msra.mxu0 %v3267
      %3398 = vmatprep.subr.bf16.mxu0 0
      %3399 = vmatpush1.bf16.msra.mxu0 %v3266
      %3400 = vmatprep.subr.bf16.mxu0 0
      %3401 = vmatpush1.bf16.msra.mxu0 %v3265
      %3402 = vmatprep.subr.bf16.mxu0 0
      %3403 = vmatpush1.bf16.msra.mxu0 %v3264
      %3404 = vmatprep.subr.bf16.mxu0 0
      %3405 = vmatpush1.bf16.msra.mxu0 %v3263
      %3406 = vmatprep.subr.bf16.mxu0 0
      %3407 = vmatpush1.bf16.msra.mxu0 %v3262
      %3408 = vmatprep.subr.bf16.mxu0 0
      %3409 = vmatpush1.bf16.msra.mxu0 %v3261
      %3410 = vmatprep.subr.bf16.mxu0 0
      %3411 = vmatpush2.bf16.msra.mxu0 %v3276
      %3412 = vmatprep.subr.bf16.mxu0 0
      %3413 = vmatpush2.bf16.msra.mxu0 %v3275
      %3414 = vmatprep.subr.bf16.mxu0 0
      %3415 = vmatpush2.bf16.msra.mxu0 %v3274
      %3416 = vmatprep.subr.bf16.mxu0 0
      %3417 = vmatpush2.bf16.msra.mxu0 %v3273
      %3418 = vmatprep.subr.bf16.mxu0 0
      %3419 = vmatpush2.bf16.msra.mxu0 %v3272
      %3420 = vmatprep.subr.bf16.mxu0 0
      %3421 = vmatpush2.bf16.msra.mxu0 %v3271
      %3422 = vmatprep.subr.bf16.mxu0 0
      %3423 = vmatpush2.bf16.msra.mxu0 %v3270
      %3424 = vmatprep.subr.bf16.mxu0 0
      %3425 = vmatpush2.bf16.msra.mxu0 %v3269
      %3426 = vmatprep.mubr.bf16.mxu0 %v3068
      %3427 = vmatmul.mubr.bf16.gmra.mxu0 %v3067
      %v3428 = vpop.f32.mrf.mxu0
      %v3429 = vadd.f32 %v3364, %v3428
      %v3430 = vpop.f32.mrf.mxu0
      %v3431 = vpop.f32.mrf.mxu0
      %v3432 = vadd.f32 %v3367, %v3431
      %v3433 = vpop.f32.mrf.mxu0
      %3434 = vmatprep.mubr.bf16.mxu0 %v3073
      %3435 = vmatmul.mubr.bf16.gmra.mxu0 %v3072
      %v3436 = vpop.f32.mrf.mxu0
      %v3437 = vadd.f32 %v3372, %v3436
      %v3438 = vpop.f32.mrf.mxu0
      %v3439 = vpop.f32.mrf.mxu0
      %v3440 = vadd.f32 %v3375, %v3439
      %v3441 = vpop.f32.mrf.mxu0
      %3442 = vmatprep.mubr.bf16.mxu0 %v3078
      %3443 = vmatmul.mubr.bf16.gmra.mxu0 %v3077
      %v3444 = vpop.f32.mrf.mxu0
      %v3445 = vadd.f32 %v3380, %v3444
      %v3446 = vpop.f32.mrf.mxu0
      %v3447 = vpop.f32.mrf.mxu0
      %v3448 = vadd.f32 %v3383, %v3447
      %v3449 = vpop.f32.mrf.mxu0
      %3450 = vmatprep.mubr.bf16.mxu0 %v3083
      %3451 = vmatmul.mubr.bf16.gmra.mxu0 %v3082
      %v3452 = vpop.f32.mrf.mxu0
      %v3453 = vadd.f32 %v3388, %v3452
      %v3454 = vpop.f32.mrf.mxu0
      %v3455 = vpop.f32.mrf.mxu0
      %v3456 = vadd.f32 %v3391, %v3455
      %v3457 = vpop.f32.mrf.mxu0
      %3458 = vdwg.mxu0
      %3459 = vmatprep.subr.bf16.mxu0 0
      %3460 = vmatpush1.bf16.msra.mxu0 0
      %3461 = vmatprep.subr.bf16.mxu0 0
      %3462 = vmatpush1.bf16.msra.mxu0 0
      %3463 = vmatprep.subr.bf16.mxu0 0
      %3464 = vmatpush1.bf16.msra.mxu0 0
      %3465 = vmatprep.subr.bf16.mxu0 0
      %3466 = vmatpush1.bf16.msra.mxu0 0
      %3467 = vmatprep.subr.bf16.mxu0 0
      %3468 = vmatpush1.bf16.msra.mxu0 %v3280
      %3469 = vmatprep.subr.bf16.mxu0 0
      %3470 = vmatpush1.bf16.msra.mxu0 %v3279
      %3471 = vmatprep.subr.bf16.mxu0 0
      %3472 = vmatpush1.bf16.msra.mxu0 %v3278
      %3473 = vmatprep.subr.bf16.mxu0 0
      %3474 = vmatpush1.bf16.msra.mxu0 %v3277
      %3475 = vmatprep.subr.bf16.mxu0 0
      %3476 = vmatpush2.bf16.msra.mxu0 0
      %3477 = vmatprep.subr.bf16.mxu0 0
      %3478 = vmatpush2.bf16.msra.mxu0 0
      %3479 = vmatprep.subr.bf16.mxu0 0
      %3480 = vmatpush2.bf16.msra.mxu0 0
      %3481 = vmatprep.subr.bf16.mxu0 0
      %3482 = vmatpush2.bf16.msra.mxu0 0
      %3483 = vmatprep.subr.bf16.mxu0 0
      %3484 = vmatpush2.bf16.msra.mxu0 0
      %3485 = vmatprep.subr.bf16.mxu0 0
      %3486 = vmatpush2.bf16.msra.mxu0 0
      %3487 = vmatprep.subr.bf16.mxu0 0
      %3488 = vmatpush2.bf16.msra.mxu0 0
      %3489 = vmatprep.subr.bf16.mxu0 0
      %3490 = vmatpush2.bf16.msra.mxu0 0
      %3491 = vmatprep.mubr.bf16.mxu0 0
      %3492 = vmatmul.mubr.bf16.gmra.mxu0 %v3318
      %v3493 = vpop.f32.mrf.mxu0
      %v3494 = vadd.f32 %v3429, %v3493
      %v3495 = vpop.f32.mrf.mxu0
      %v3496 = vpop.f32.mrf.mxu0
      %v3497 = vadd.f32 %v3432, %v3496
      %v3498 = vpop.f32.mrf.mxu0
      %3499 = vmatprep.mubr.bf16.mxu0 0
      %3500 = vmatmul.mubr.bf16.gmra.mxu0 %v3321
      %v3501 = vpop.f32.mrf.mxu0
      %v3502 = vadd.f32 %v3437, %v3501
      %v3503 = vpop.f32.mrf.mxu0
      %v3504 = vpop.f32.mrf.mxu0
      %v3505 = vadd.f32 %v3440, %v3504
      %v3506 = vpop.f32.mrf.mxu0
      %3507 = vmatprep.mubr.bf16.mxu0 0
      %3508 = vmatmul.mubr.bf16.gmra.mxu0 %v3324
      %v3509 = vpop.f32.mrf.mxu0
      %v3510 = vadd.f32 %v3445, %v3509
      %v3511 = vpop.f32.mrf.mxu0
      %v3512 = vpop.f32.mrf.mxu0
      %v3513 = vadd.f32 %v3448, %v3512
      %v3514 = vpop.f32.mrf.mxu0
      %3515 = vmatprep.mubr.bf16.mxu0 0
      %3516 = vmatmul.mubr.bf16.gmra.mxu0 %v3327
      %v3517 = vpop.f32.mrf.mxu0
      %v3518 = vadd.f32 %v3453, %v3517
      %v3519 = vpop.f32.mrf.mxu0
      %v3520 = vpop.f32.mrf.mxu0
      %v3521 = vadd.f32 %v3456, %v3520
      %v3522 = vpop.f32.mrf.mxu0
      %3523 = vdwg.mxu0
      %v3524 = vmul.f32 %v3494, 0.5
      %v3525 = vmul.f32 %v3497, 0.5
      %v3526 = vmul.f32 %v3502, 0.5
      %v3527 = vmul.f32 %v3505, 0.5
      %v3528 = vmul.f32 %v3510, 0.5
      %v3529 = vmul.f32 %v3513, 0.5
      %v3530 = vmul.f32 %v3518, 0.5
      %v3531 = vmul.f32 %v3521, 0.5
      %v3532 = vmul.f32 %v3494, 0.70710677
      %v3533 = vmul.f32 %v3497, 0.70710677
      %v3534 = vmul.f32 %v3502, 0.70710677
      %v3535 = vmul.f32 %v3505, 0.70710677
      %v3536 = vmul.f32 %v3510, 0.70710677
      %v3537 = vmul.f32 %v3513, 0.70710677
      %v3538 = vmul.f32 %v3518, 0.70710677
      %v3539 = vmul.f32 %v3521, 0.70710677
      %v3540 = verf.f32.pop %v3532
      %v3541 = verf.f32.pop %v3533
      %v3542 = verf.f32.pop %v3534
      %v3543 = verf.f32.pop %v3535
      %v3544 = verf.f32.pop %v3536
      %v3545 = verf.f32.pop %v3537
      %v3546 = verf.f32.pop %v3538
      %v3547 = verf.f32.pop %v3539
      %v3548 = vadd.f32 %v3540, 1.0
      %v3549 = vadd.f32 %v3541, 1.0
      %v3550 = vadd.f32 %v3542, 1.0
      %v3551 = vadd.f32 %v3543, 1.0
      %v3552 = vadd.f32 %v3544, 1.0
      %v3553 = vadd.f32 %v3545, 1.0
      %v3554 = vadd.f32 %v3546, 1.0
      %v3555 = vadd.f32 %v3547, 1.0
      %v3556 = vmul.f32 %v3524, %v3548
      %v3557 = vmul.f32 %v3525, %v3549
      %v3558 = vmul.f32 %v3526, %v3550
      %v3559 = vmul.f32 %v3527, %v3551
      %v3560 = vmul.f32 %v3528, %v3552
      %v3561 = vmul.f32 %v3529, %v3553
      %v3562 = vmul.f32 %v3530, %v3554
      %v3563 = vmul.f32 %v3531, %v3555
      %v3564 = vpack.c.bf16 %v3557, %v3556
      %v3565 = vpack.c.bf16 %v3559, %v3558
      %v3566 = vpack.c.bf16 %v3561, %v3560
      %v3567 = vpack.c.bf16 %v3563, %v3562
      %3568 = vst.msk [vmem:[#allocation5] sm:$0xf] %vm2404, 0
      %3569 = vst.msk [vmem:[#allocation5 + $0x4] sm:$0xf] %vm2404, 0
      %3570 = vst.msk [vmem:[#allocation5 + $0x8] sm:$0xf] %vm2404, 0
      %3571 = vst.msk [vmem:[#allocation5 + $0xc] sm:$0xf] %vm2404, 0
      %3572 = vst.msk [vmem:[#allocation5 + $0x10] sm:$0xf] %vm2404, 0
      %3573 = vst.msk [vmem:[#allocation5 + $0x14] sm:$0xf] %vm2404, 0
      %3574 = vst.msk [vmem:[#allocation5 + $0x18] sm:$0xf] %vm2404, 0
      %3575 = vst.msk [vmem:[#allocation5 + $0x1c] sm:$0xf] %vm2404, 0
      %v3580 = vunpack.c.l.b16 %v3564
      %v3581 = vunpack.c.h.b16 %v3564
      %v3582 = vunpack.c.l.b16 %v3565
      %v3583 = vunpack.c.h.b16 %v3565
      %v3584 = vunpack.c.l.b16 %v3566
      %v3585 = vunpack.c.h.b16 %v3566
      %v3586 = vunpack.c.l.b16 %v3567
      %v3587 = vunpack.c.h.b16 %v3567
      %v3588 = vpack.c.b16 %v3580, %v3580
      %v3589 = vpack.c.b16 %v3581, %v3581
      %v3590 = vpack.c.b16 %v3582, %v3582
      %v3591 = vpack.c.b16 %v3583, %v3583
      %v3592 = vpack.c.b16 %v3584, %v3584
      %v3593 = vpack.c.b16 %v3585, %v3585
      %v3594 = vpack.c.b16 %v3586, %v3586
      %v3595 = vpack.c.b16 %v3587, %v3587
      %3596 = vrot.lane.b32.xlu0 %v3588, 5
      %v3597 = vpop.permute.xlu0 %3596
      %3598 = vrot.lane.b32.xlu0 %v3589, 5
      %v3599 = vpop.permute.xlu0 %3598
      %3600 = vrot.lane.b32.xlu0 %v3590, 5
      %v3601 = vpop.permute.xlu0 %3600
      %3602 = vrot.lane.b32.xlu0 %v3591, 5
      %v3603 = vpop.permute.xlu0 %3602
      %3604 = vrot.lane.b32.xlu0 %v3592, 5
      %v3605 = vpop.permute.xlu0 %3604
      %3606 = vrot.lane.b32.xlu0 %v3593, 5
      %v3607 = vpop.permute.xlu0 %3606
      %3608 = vrot.lane.b32.xlu0 %v3594, 5
      %v3609 = vpop.permute.xlu0 %3608
      %3610 = vrot.lane.b32.xlu0 %v3595, 5
      %v3611 = vpop.permute.xlu0 %3610
      %3620 = vst.msk [vmem:[#allocation5] sm:$0xf] %vm2457, %v3597
      %3621 = vst.msk [vmem:[#allocation5 + $0x4] sm:$0xf] %vm2457, %v3599
      %3622 = vst.msk [vmem:[#allocation5 + $0x8] sm:$0xf] %vm2457, %v3601
      %3623 = vst.msk [vmem:[#allocation5 + $0xc] sm:$0xf] %vm2457, %v3603
      %3624 = vst.msk [vmem:[#allocation5 + $0x10] sm:$0xf] %vm2457, %v3605
      %3625 = vst.msk [vmem:[#allocation5 + $0x14] sm:$0xf] %vm2457, %v3607
      %3626 = vst.msk [vmem:[#allocation5 + $0x18] sm:$0xf] %vm2457, %v3609
      %3627 = vst.msk [vmem:[#allocation5 + $0x1c] sm:$0xf] %vm2457, %v3611
      %v3628 = vld [vmem:[#allocation5] sm:$0xf]
      %v3629 = vld [vmem:[#allocation5 + $0x4] sm:$0xf]
      %v3630 = vld [vmem:[#allocation5 + $0x8] sm:$0xf]
      %v3631 = vld [vmem:[#allocation5 + $0xc] sm:$0xf]
      %v3632 = vld [vmem:[#allocation5 + $0x10] sm:$0xf]
      %v3633 = vld [vmem:[#allocation5 + $0x14] sm:$0xf]
      %v3634 = vld [vmem:[#allocation5 + $0x18] sm:$0xf]
      %v3635 = vld [vmem:[#allocation5 + $0x1c] sm:$0xf]
      %v3636 = vsel %vm2477, %v3628, 0
      %v3637 = vsel %vm2477, %v3629, 0
      %v3638 = vsel %vm2477, %v3630, 0
      %v3639 = vsel %vm2477, %v3631, 0
      %v3640 = vsel %vm2477, %v3632, 0
      %v3641 = vsel %vm2477, %v3633, 0
      %v3642 = vsel %vm2477, %v3634, 0
      %v3643 = vsel %vm2477, %v3635, 0
      %3644 = vst.msk [vmem:[#allocation10] sm:$0xf] %vm2486, %v3636
      %3645 = vst.msk [vmem:[#allocation10 + $0x4] sm:$0xf] %vm2486, %v3637
      %3646 = vst.msk [vmem:[#allocation10 + $0x8] sm:$0xf] %vm2486, %v3638
      %3647 = vst.msk [vmem:[#allocation10 + $0xc] sm:$0xf] %vm2486, %v3639
      %3648 = vst.msk [vmem:[#allocation10 + $0x10] sm:$0xf] %vm2486, %v3640
      %3649 = vst.msk [vmem:[#allocation10 + $0x14] sm:$0xf] %vm2486, %v3641
      %3650 = vst.msk [vmem:[#allocation10 + $0x18] sm:$0xf] %vm2486, %v3642
      %3651 = vst.msk [vmem:[#allocation10 + $0x1c] sm:$0xf] %vm2486, %v3643
      %3660 = vrot.lane.b32.xlu0 %v3628, 127
      %v3661 = vpop.permute.xlu0 %3660
      %3662 = vrot.lane.b32.xlu0 %v3629, 127
      %v3663 = vpop.permute.xlu0 %3662
      %3664 = vrot.lane.b32.xlu0 %v3630, 127
      %v3665 = vpop.permute.xlu0 %3664
      %3666 = vrot.lane.b32.xlu0 %v3631, 127
      %v3667 = vpop.permute.xlu0 %3666
      %3668 = vrot.lane.b32.xlu0 %v3632, 127
      %v3669 = vpop.permute.xlu0 %3668
      %3670 = vrot.lane.b32.xlu0 %v3633, 127
      %v3671 = vpop.permute.xlu0 %3670
      %3672 = vrot.lane.b32.xlu0 %v3634, 127
      %v3673 = vpop.permute.xlu0 %3672
      %3674 = vrot.lane.b32.xlu0 %v3635, 127
      %v3675 = vpop.permute.xlu0 %3674
      %3684 = vst.msk [vmem:[#allocation10 + $0x20] sm:$0xf] %vm2486, %v3661
      %3685 = vst.msk [vmem:[#allocation10 + $0x24] sm:$0xf] %vm2486, %v3663
      %3686 = vst.msk [vmem:[#allocation10 + $0x28] sm:$0xf] %vm2486, %v3665
      %3687 = vst.msk [vmem:[#allocation10 + $0x2c] sm:$0xf] %vm2486, %v3667
      %3688 = vst.msk [vmem:[#allocation10 + $0x30] sm:$0xf] %vm2486, %v3669
      %3689 = vst.msk [vmem:[#allocation10 + $0x34] sm:$0xf] %vm2486, %v3671
      %3690 = vst.msk [vmem:[#allocation10 + $0x38] sm:$0xf] %vm2486, %v3673
      %3691 = vst.msk [vmem:[#allocation10 + $0x3c] sm:$0xf] %vm2486, %v3675
      %v3692 = vsel %vm2539, %v3628, 0
      %v3693 = vsel %vm2539, %v3629, 0
      %v3694 = vsel %vm2539, %v3630, 0
      %v3695 = vsel %vm2539, %v3631, 0
      %v3696 = vsel %vm2539, %v3632, 0
      %v3697 = vsel %vm2539, %v3633, 0
      %v3698 = vsel %vm2539, %v3634, 0
      %v3699 = vsel %vm2539, %v3635, 0
      %3708 = vrot.lane.b32.xlu0 %v3692, 126
      %v3709 = vpop.permute.xlu0 %3708
      %3710 = vrot.lane.b32.xlu0 %v3693, 126
      %v3711 = vpop.permute.xlu0 %3710
      %3712 = vrot.lane.b32.xlu0 %v3694, 126
      %v3713 = vpop.permute.xlu0 %3712
      %3714 = vrot.lane.b32.xlu0 %v3695, 126
      %v3715 = vpop.permute.xlu0 %3714
      %3716 = vrot.lane.b32.xlu0 %v3696, 126
      %v3717 = vpop.permute.xlu0 %3716
      %3718 = vrot.lane.b32.xlu0 %v3697, 126
      %v3719 = vpop.permute.xlu0 %3718
      %3720 = vrot.lane.b32.xlu0 %v3698, 126
      %v3721 = vpop.permute.xlu0 %3720
      %3722 = vrot.lane.b32.xlu0 %v3699, 126
      %v3723 = vpop.permute.xlu0 %3722
      %3732 = vst.msk [vmem:[#allocation10 + $0x40] sm:$0xf] %vm2486, %v3709
      %3733 = vst.msk [vmem:[#allocation10 + $0x44] sm:$0xf] %vm2486, %v3711
      %3734 = vst.msk [vmem:[#allocation10 + $0x48] sm:$0xf] %vm2486, %v3713
      %3735 = vst.msk [vmem:[#allocation10 + $0x4c] sm:$0xf] %vm2486, %v3715
      %3736 = vst.msk [vmem:[#allocation10 + $0x50] sm:$0xf] %vm2486, %v3717
      %3737 = vst.msk [vmem:[#allocation10 + $0x54] sm:$0xf] %vm2486, %v3719
      %3738 = vst.msk [vmem:[#allocation10 + $0x58] sm:$0xf] %vm2486, %v3721
      %3739 = vst.msk [vmem:[#allocation10 + $0x5c] sm:$0xf] %vm2486, %v3723
      %v3740 = vsel %vm2591, %v3628, 0
      %v3741 = vsel %vm2591, %v3629, 0
      %v3742 = vsel %vm2591, %v3630, 0
      %v3743 = vsel %vm2591, %v3631, 0
      %v3744 = vsel %vm2591, %v3632, 0
      %v3745 = vsel %vm2591, %v3633, 0
      %v3746 = vsel %vm2591, %v3634, 0
      %v3747 = vsel %vm2591, %v3635, 0
      %3756 = vrot.lane.b32.xlu0 %v3740, 124
      %v3757 = vpop.permute.xlu0 %3756
      %3758 = vrot.lane.b32.xlu0 %v3741, 124
      %v3759 = vpop.permute.xlu0 %3758
      %3760 = vrot.lane.b32.xlu0 %v3742, 124
      %v3761 = vpop.permute.xlu0 %3760
      %3762 = vrot.lane.b32.xlu0 %v3743, 124
      %v3763 = vpop.permute.xlu0 %3762
      %3764 = vrot.lane.b32.xlu0 %v3744, 124
      %v3765 = vpop.permute.xlu0 %3764
      %3766 = vrot.lane.b32.xlu0 %v3745, 124
      %v3767 = vpop.permute.xlu0 %3766
      %3768 = vrot.lane.b32.xlu0 %v3746, 124
      %v3769 = vpop.permute.xlu0 %3768
      %3770 = vrot.lane.b32.xlu0 %v3747, 124
      %v3771 = vpop.permute.xlu0 %3770
      %3780 = vst.msk [vmem:[#allocation10 + $0x60] sm:$0xf] %vm2486, %v3757
      %3781 = vst.msk [vmem:[#allocation10 + $0x64] sm:$0xf] %vm2486, %v3759
      %3782 = vst.msk [vmem:[#allocation10 + $0x68] sm:$0xf] %vm2486, %v3761
      %3783 = vst.msk [vmem:[#allocation10 + $0x6c] sm:$0xf] %vm2486, %v3763
      %3784 = vst.msk [vmem:[#allocation10 + $0x70] sm:$0xf] %vm2486, %v3765
      %3785 = vst.msk [vmem:[#allocation10 + $0x74] sm:$0xf] %vm2486, %v3767
      %3786 = vst.msk [vmem:[#allocation10 + $0x78] sm:$0xf] %vm2486, %v3769
      %3787 = vst.msk [vmem:[#allocation10 + $0x7c] sm:$0xf] %vm2486, %v3771
      %3788 = vrot.lane.b32.xlu0 %v3628, 123
      %v3789 = vpop.permute.xlu0 %3788
      %3790 = vrot.lane.b32.xlu0 %v3629, 123
      %v3791 = vpop.permute.xlu0 %3790
      %3792 = vrot.lane.b32.xlu0 %v3630, 123
      %v3793 = vpop.permute.xlu0 %3792
      %3794 = vrot.lane.b32.xlu0 %v3631, 123
      %v3795 = vpop.permute.xlu0 %3794
      %3796 = vrot.lane.b32.xlu0 %v3632, 123
      %v3797 = vpop.permute.xlu0 %3796
      %3798 = vrot.lane.b32.xlu0 %v3633, 123
      %v3799 = vpop.permute.xlu0 %3798
      %3800 = vrot.lane.b32.xlu0 %v3634, 123
      %v3801 = vpop.permute.xlu0 %3800
      %3802 = vrot.lane.b32.xlu0 %v3635, 123
      %v3803 = vpop.permute.xlu0 %3802
      %3812 = vst.msk [vmem:[#allocation10 + $0x80] sm:$0xf] %vm2486, %v3789
      %3813 = vst.msk [vmem:[#allocation10 + $0x84] sm:$0xf] %vm2486, %v3791
      %3814 = vst.msk [vmem:[#allocation10 + $0x88] sm:$0xf] %vm2486, %v3793
      %3815 = vst.msk [vmem:[#allocation10 + $0x8c] sm:$0xf] %vm2486, %v3795
      %3816 = vst.msk [vmem:[#allocation10 + $0x90] sm:$0xf] %vm2486, %v3797
      %3817 = vst.msk [vmem:[#allocation10 + $0x94] sm:$0xf] %vm2486, %v3799
      %3818 = vst.msk [vmem:[#allocation10 + $0x98] sm:$0xf] %vm2486, %v3801
      %3819 = vst.msk [vmem:[#allocation10 + $0x9c] sm:$0xf] %vm2486, %v3803
      %v3820 = vsel %vm2674, %v3628, 0
      %v3821 = vsel %vm2674, %v3629, 0
      %v3822 = vsel %vm2674, %v3630, 0
      %v3823 = vsel %vm2674, %v3631, 0
      %v3824 = vsel %vm2674, %v3632, 0
      %v3825 = vsel %vm2674, %v3633, 0
      %v3826 = vsel %vm2674, %v3634, 0
      %v3827 = vsel %vm2674, %v3635, 0
      %3836 = vrot.lane.b32.xlu0 %v3820, 122
      %v3837 = vpop.permute.xlu0 %3836
      %3838 = vrot.lane.b32.xlu0 %v3821, 122
      %v3839 = vpop.permute.xlu0 %3838
      %3840 = vrot.lane.b32.xlu0 %v3822, 122
      %v3841 = vpop.permute.xlu0 %3840
      %3842 = vrot.lane.b32.xlu0 %v3823, 122
      %v3843 = vpop.permute.xlu0 %3842
      %3844 = vrot.lane.b32.xlu0 %v3824, 122
      %v3845 = vpop.permute.xlu0 %3844
      %3846 = vrot.lane.b32.xlu0 %v3825, 122
      %v3847 = vpop.permute.xlu0 %3846
      %3848 = vrot.lane.b32.xlu0 %v3826, 122
      %v3849 = vpop.permute.xlu0 %3848
      %3850 = vrot.lane.b32.xlu0 %v3827, 122
      %v3851 = vpop.permute.xlu0 %3850
      %3860 = vst.msk [vmem:[#allocation10 + $0xa0] sm:$0xf] %vm2486, %v3837
      %3861 = vst.msk [vmem:[#allocation10 + $0xa4] sm:$0xf] %vm2486, %v3839
      %3862 = vst.msk [vmem:[#allocation10 + $0xa8] sm:$0xf] %vm2486, %v3841
      %3863 = vst.msk [vmem:[#allocation10 + $0xac] sm:$0xf] %vm2486, %v3843
      %3864 = vst.msk [vmem:[#allocation10 + $0xb0] sm:$0xf] %vm2486, %v3845
      %3865 = vst.msk [vmem:[#allocation10 + $0xb4] sm:$0xf] %vm2486, %v3847
      %3866 = vst.msk [vmem:[#allocation10 + $0xb8] sm:$0xf] %vm2486, %v3849
      %3867 = vst.msk [vmem:[#allocation10 + $0xbc] sm:$0xf] %vm2486, %v3851
      %v3868 = vsel %vm2725, %v3628, 0
      %v3869 = vsel %vm2725, %v3629, 0
      %v3870 = vsel %vm2725, %v3630, 0
      %v3871 = vsel %vm2725, %v3631, 0
      %v3872 = vsel %vm2725, %v3632, 0
      %v3873 = vsel %vm2725, %v3633, 0
      %v3874 = vsel %vm2725, %v3634, 0
      %v3875 = vsel %vm2725, %v3635, 0
      %3884 = vrot.lane.b32.xlu0 %v3868, 120
      %v3885 = vpop.permute.xlu0 %3884
      %3886 = vrot.lane.b32.xlu0 %v3869, 120
      %v3887 = vpop.permute.xlu0 %3886
      %3888 = vrot.lane.b32.xlu0 %v3870, 120
      %v3889 = vpop.permute.xlu0 %3888
      %3890 = vrot.lane.b32.xlu0 %v3871, 120
      %v3891 = vpop.permute.xlu0 %3890
      %3892 = vrot.lane.b32.xlu0 %v3872, 120
      %v3893 = vpop.permute.xlu0 %3892
      %3894 = vrot.lane.b32.xlu0 %v3873, 120
      %v3895 = vpop.permute.xlu0 %3894
      %3896 = vrot.lane.b32.xlu0 %v3874, 120
      %v3897 = vpop.permute.xlu0 %3896
      %3898 = vrot.lane.b32.xlu0 %v3875, 120
      %v3899 = vpop.permute.xlu0 %3898
      %3908 = vst.msk [vmem:[#allocation10 + $0xc0] sm:$0xf] %vm2486, %v3885
      %3909 = vst.msk [vmem:[#allocation10 + $0xc4] sm:$0xf] %vm2486, %v3887
      %3910 = vst.msk [vmem:[#allocation10 + $0xc8] sm:$0xf] %vm2486, %v3889
      %3911 = vst.msk [vmem:[#allocation10 + $0xcc] sm:$0xf] %vm2486, %v3891
      %3912 = vst.msk [vmem:[#allocation10 + $0xd0] sm:$0xf] %vm2486, %v3893
      %3913 = vst.msk [vmem:[#allocation10 + $0xd4] sm:$0xf] %vm2486, %v3895
      %3914 = vst.msk [vmem:[#allocation10 + $0xd8] sm:$0xf] %vm2486, %v3897
      %3915 = vst.msk [vmem:[#allocation10 + $0xdc] sm:$0xf] %vm2486, %v3899
      %3916 = vrot.lane.b32.xlu0 %v3628, 119
      %v3917 = vpop.permute.xlu0 %3916
      %3918 = vrot.lane.b32.xlu0 %v3629, 119
      %v3919 = vpop.permute.xlu0 %3918
      %3920 = vrot.lane.b32.xlu0 %v3630, 119
      %v3921 = vpop.permute.xlu0 %3920
      %3922 = vrot.lane.b32.xlu0 %v3631, 119
      %v3923 = vpop.permute.xlu0 %3922
      %3924 = vrot.lane.b32.xlu0 %v3632, 119
      %v3925 = vpop.permute.xlu0 %3924
      %3926 = vrot.lane.b32.xlu0 %v3633, 119
      %v3927 = vpop.permute.xlu0 %3926
      %3928 = vrot.lane.b32.xlu0 %v3634, 119
      %v3929 = vpop.permute.xlu0 %3928
      %3930 = vrot.lane.b32.xlu0 %v3635, 119
      %v3931 = vpop.permute.xlu0 %3930
      %3940 = vst.msk [vmem:[#allocation10 + $0xe0] sm:$0xf] %vm2486, %v3917
      %3941 = vst.msk [vmem:[#allocation10 + $0xe4] sm:$0xf] %vm2486, %v3919
      %3942 = vst.msk [vmem:[#allocation10 + $0xe8] sm:$0xf] %vm2486, %v3921
      %3943 = vst.msk [vmem:[#allocation10 + $0xec] sm:$0xf] %vm2486, %v3923
      %3944 = vst.msk [vmem:[#allocation10 + $0xf0] sm:$0xf] %vm2486, %v3925
      %3945 = vst.msk [vmem:[#allocation10 + $0xf4] sm:$0xf] %vm2486, %v3927
      %3946 = vst.msk [vmem:[#allocation10 + $0xf8] sm:$0xf] %vm2486, %v3929
      %3947 = vst.msk [vmem:[#allocation10 + $0xfc] sm:$0xf] %vm2486, %v3931
      %v3948 = vsel %vm2808, %v3628, 0
      %v3949 = vsel %vm2808, %v3629, 0
      %v3950 = vsel %vm2808, %v3630, 0
      %v3951 = vsel %vm2808, %v3631, 0
      %v3952 = vsel %vm2808, %v3632, 0
      %v3953 = vsel %vm2808, %v3633, 0
      %v3954 = vsel %vm2808, %v3634, 0
      %v3955 = vsel %vm2808, %v3635, 0
      %3964 = vrot.lane.b32.xlu0 %v3948, 118
      %v3965 = vpop.permute.xlu0 %3964
      %3966 = vrot.lane.b32.xlu0 %v3949, 118
      %v3967 = vpop.permute.xlu0 %3966
      %3968 = vrot.lane.b32.xlu0 %v3950, 118
      %v3969 = vpop.permute.xlu0 %3968
      %3970 = vrot.lane.b32.xlu0 %v3951, 118
      %v3971 = vpop.permute.xlu0 %3970
      %3972 = vrot.lane.b32.xlu0 %v3952, 118
      %v3973 = vpop.permute.xlu0 %3972
      %3974 = vrot.lane.b32.xlu0 %v3953, 118
      %v3975 = vpop.permute.xlu0 %3974
      %3976 = vrot.lane.b32.xlu0 %v3954, 118
      %v3977 = vpop.permute.xlu0 %3976
      %3978 = vrot.lane.b32.xlu0 %v3955, 118
      %v3979 = vpop.permute.xlu0 %3978
      %3988 = vst.msk [vmem:[#allocation10 + $0x100] sm:$0xf] %vm2486, %v3965
      %3989 = vst.msk [vmem:[#allocation10 + $0x104] sm:$0xf] %vm2486, %v3967
      %3990 = vst.msk [vmem:[#allocation10 + $0x108] sm:$0xf] %vm2486, %v3969
      %3991 = vst.msk [vmem:[#allocation10 + $0x10c] sm:$0xf] %vm2486, %v3971
      %3992 = vst.msk [vmem:[#allocation10 + $0x110] sm:$0xf] %vm2486, %v3973
      %3993 = vst.msk [vmem:[#allocation10 + $0x114] sm:$0xf] %vm2486, %v3975
      %3994 = vst.msk [vmem:[#allocation10 + $0x118] sm:$0xf] %vm2486, %v3977
      %3995 = vst.msk [vmem:[#allocation10 + $0x11c] sm:$0xf] %vm2486, %v3979
      %v3996 = vld [vmem:[%s11] sm:$0xff]
      %v3997 = vld [vmem:[%s11 + $0x8] sm:$0xff]
      %v3998 = vld [vmem:[%s11 + $0x10] sm:$0xf]
      %v3999 = vld [vmem:[%s11 + $0x14] sm:$0xff]
      %v4000 = vld [vmem:[%s11 + $0x1c] sm:$0xff]
      %v4001 = vld [vmem:[%s11 + $0x24] sm:$0xf]
      %v4002 = vld [vmem:[%s11 + $0x28] sm:$0xff]
      %v4003 = vld [vmem:[%s11 + $0x30] sm:$0xff]
      %v4004 = vld [vmem:[%s11 + $0x38] sm:$0xf]
      %v4005 = vld [vmem:[%s11 + $0x3c] sm:$0xff]
      %v4006 = vld [vmem:[%s11 + $0x44] sm:$0xff]
      %v4007 = vld [vmem:[%s11 + $0x4c] sm:$0xf]
      %v4008 = vld [vmem:[%s11 + $0x50] sm:$0xff]
      %v4009 = vld [vmem:[%s11 + $0x58] sm:$0xff]
      %v4010 = vld [vmem:[%s11 + $0x60] sm:$0xf]
      %v4011 = vld [vmem:[%s11 + $0x64] sm:$0xff]
      %v4012 = vld [vmem:[%s11 + $0x6c] sm:$0xff]
      %v4013 = vld [vmem:[%s11 + $0x74] sm:$0xf]
      %v4014 = vld [vmem:[%s11 + $0x78] sm:$0xff]
      %v4015 = vld [vmem:[%s11 + $0x80] sm:$0xff]
      %v4016 = vld [vmem:[%s11 + $0x88] sm:$0xf]
      %v4017 = vld [vmem:[%s11 + $0x8c] sm:$0xff]
      %v4018 = vld [vmem:[%s11 + $0x94] sm:$0xff]
      %v4019 = vld [vmem:[%s11 + $0x9c] sm:$0xf]
      %v4020 = vld [vmem:[#allocation10] sm:$0xf]
      %v4021 = vld [vmem:[#allocation10 + $0x4] sm:$0xf]
      %v4022 = vld [vmem:[#allocation10 + $0x8] sm:$0xf]
      %v4023 = vld [vmem:[#allocation10 + $0xc] sm:$0xf]
      %v4024 = vld [vmem:[#allocation10 + $0x10] sm:$0xf]
      %v4025 = vld [vmem:[#allocation10 + $0x14] sm:$0xf]
      %v4026 = vld [vmem:[#allocation10 + $0x18] sm:$0xf]
      %v4027 = vld [vmem:[#allocation10 + $0x1c] sm:$0xf]
      %v4028 = vld [vmem:[#allocation10 + $0x20] sm:$0xf]
      %v4029 = vld [vmem:[#allocation10 + $0x24] sm:$0xf]
      %v4030 = vld [vmem:[#allocation10 + $0x28] sm:$0xf]
      %v4031 = vld [vmem:[#allocation10 + $0x2c] sm:$0xf]
      %v4032 = vld [vmem:[#allocation10 + $0x30] sm:$0xf]
      %v4033 = vld [vmem:[#allocation10 + $0x34] sm:$0xf]
      %v4034 = vld [vmem:[#allocation10 + $0x38] sm:$0xf]
      %v4035 = vld [vmem:[#allocation10 + $0x3c] sm:$0xf]
      %v4036 = vld [vmem:[#allocation10 + $0x40] sm:$0xf]
      %v4037 = vld [vmem:[#allocation10 + $0x44] sm:$0xf]
      %v4038 = vld [vmem:[#allocation10 + $0x48] sm:$0xf]
      %v4039 = vld [vmem:[#allocation10 + $0x4c] sm:$0xf]
      %v4040 = vld [vmem:[#allocation10 + $0x50] sm:$0xf]
      %v4041 = vld [vmem:[#allocation10 + $0x54] sm:$0xf]
      %v4042 = vld [vmem:[#allocation10 + $0x58] sm:$0xf]
      %v4043 = vld [vmem:[#allocation10 + $0x5c] sm:$0xf]
      %v4044 = vld [vmem:[#allocation10 + $0x60] sm:$0xf]
      %v4045 = vld [vmem:[#allocation10 + $0x64] sm:$0xf]
      %v4046 = vld [vmem:[#allocation10 + $0x68] sm:$0xf]
      %v4047 = vld [vmem:[#allocation10 + $0x6c] sm:$0xf]
      %v4048 = vld [vmem:[#allocation10 + $0x70] sm:$0xf]
      %v4049 = vld [vmem:[#allocation10 + $0x74] sm:$0xf]
      %v4050 = vld [vmem:[#allocation10 + $0x78] sm:$0xf]
      %v4051 = vld [vmem:[#allocation10 + $0x7c] sm:$0xf]
      %v4052 = vld [vmem:[#allocation10 + $0x80] sm:$0xf]
      %v4053 = vld [vmem:[#allocation10 + $0x84] sm:$0xf]
      %v4054 = vld [vmem:[#allocation10 + $0x88] sm:$0xf]
      %v4055 = vld [vmem:[#allocation10 + $0x8c] sm:$0xf]
      %v4056 = vld [vmem:[#allocation10 + $0x90] sm:$0xf]
      %v4057 = vld [vmem:[#allocation10 + $0x94] sm:$0xf]
      %v4058 = vld [vmem:[#allocation10 + $0x98] sm:$0xf]
      %v4059 = vld [vmem:[#allocation10 + $0x9c] sm:$0xf]
      %v4060 = vld [vmem:[#allocation10 + $0xa0] sm:$0xf]
      %v4061 = vld [vmem:[#allocation10 + $0xa4] sm:$0xf]
      %v4062 = vld [vmem:[#allocation10 + $0xa8] sm:$0xf]
      %v4063 = vld [vmem:[#allocation10 + $0xac] sm:$0xf]
      %v4064 = vld [vmem:[#allocation10 + $0xb0] sm:$0xf]
      %v4065 = vld [vmem:[#allocation10 + $0xb4] sm:$0xf]
      %v4066 = vld [vmem:[#allocation10 + $0xb8] sm:$0xf]
      %v4067 = vld [vmem:[#allocation10 + $0xbc] sm:$0xf]
      %v4068 = vld [vmem:[#allocation10 + $0xc0] sm:$0xf]
      %v4069 = vld [vmem:[#allocation10 + $0xc4] sm:$0xf]
      %v4070 = vld [vmem:[#allocation10 + $0xc8] sm:$0xf]
      %v4071 = vld [vmem:[#allocation10 + $0xcc] sm:$0xf]
      %v4072 = vld [vmem:[#allocation10 + $0xd0] sm:$0xf]
      %v4073 = vld [vmem:[#allocation10 + $0xd4] sm:$0xf]
      %v4074 = vld [vmem:[#allocation10 + $0xd8] sm:$0xf]
      %v4075 = vld [vmem:[#allocation10 + $0xdc] sm:$0xf]
      %v4076 = vld [vmem:[#allocation10 + $0xe0] sm:$0xf]
      %v4077 = vld [vmem:[#allocation10 + $0xe4] sm:$0xf]
      %v4078 = vld [vmem:[#allocation10 + $0xe8] sm:$0xf]
      %v4079 = vld [vmem:[#allocation10 + $0xec] sm:$0xf]
      %v4080 = vld [vmem:[#allocation10 + $0xf0] sm:$0xf]
      %v4081 = vld [vmem:[#allocation10 + $0xf4] sm:$0xf]
      %v4082 = vld [vmem:[#allocation10 + $0xf8] sm:$0xf]
      %v4083 = vld [vmem:[#allocation10 + $0xfc] sm:$0xf]
      %v4084 = vld [vmem:[#allocation10 + $0x100] sm:$0xf]
      %v4085 = vld [vmem:[#allocation10 + $0x104] sm:$0xf]
      %v4086 = vld [vmem:[#allocation10 + $0x108] sm:$0xf]
      %v4087 = vld [vmem:[#allocation10 + $0x10c] sm:$0xf]
      %v4088 = vld [vmem:[#allocation10 + $0x110] sm:$0xf]
      %v4089 = vld [vmem:[#allocation10 + $0x114] sm:$0xf]
      %v4090 = vld [vmem:[#allocation10 + $0x118] sm:$0xf]
      %v4091 = vld [vmem:[#allocation10 + $0x11c] sm:$0xf]
      %v4116 = vunpack.c.l.b16 %v3996
      %v4117 = vunpack.c.h.b16 %v3996
      %v4118 = vunpack.c.l.b16 %v3997
      %v4119 = vunpack.c.h.b16 %v3997
      %v4120 = vunpack.c.l.b16 %v3998
      %v4121 = vunpack.c.l.b16 %v3999
      %v4122 = vunpack.c.h.b16 %v3999
      %v4123 = vunpack.c.l.b16 %v4000
      %v4124 = vunpack.c.h.b16 %v4000
      %v4125 = vunpack.c.l.b16 %v4001
      %v4126 = vunpack.c.l.b16 %v4002
      %v4127 = vunpack.c.h.b16 %v4002
      %v4128 = vunpack.c.l.b16 %v4003
      %v4129 = vunpack.c.h.b16 %v4003
      %v4130 = vunpack.c.l.b16 %v4004
      %v4131 = vunpack.c.l.b16 %v4005
      %v4132 = vunpack.c.h.b16 %v4005
      %v4133 = vunpack.c.l.b16 %v4006
      %v4134 = vunpack.c.h.b16 %v4006
      %v4135 = vunpack.c.l.b16 %v4007
      %v4136 = vunpack.c.l.b16 %v4008
      %v4137 = vunpack.c.h.b16 %v4008
      %v4138 = vunpack.c.l.b16 %v4009
      %v4139 = vunpack.c.h.b16 %v4009
      %v4140 = vunpack.c.l.b16 %v4010
      %v4141 = vunpack.c.l.b16 %v4011
      %v4142 = vunpack.c.h.b16 %v4011
      %v4143 = vunpack.c.l.b16 %v4012
      %v4144 = vunpack.c.h.b16 %v4012
      %v4145 = vunpack.c.l.b16 %v4013
      %v4146 = vunpack.c.l.b16 %v4014
      %v4147 = vunpack.c.h.b16 %v4014
      %v4148 = vunpack.c.l.b16 %v4015
      %v4149 = vunpack.c.h.b16 %v4015
      %v4150 = vunpack.c.l.b16 %v4016
      %v4151 = vunpack.c.l.b16 %v4017
      %v4152 = vunpack.c.h.b16 %v4017
      %v4153 = vunpack.c.l.b16 %v4018
      %v4154 = vunpack.c.h.b16 %v4018
      %v4155 = vunpack.c.l.b16 %v4019
      %v4156 = vpack.c.b16 %v4121, %v4116
      %v4157 = vpack.c.b16 %v4122, %v4117
      %v4158 = vpack.c.b16 %v4123, %v4118
      %v4159 = vpack.c.b16 %v4124, %v4119
      %v4160 = vpack.c.b16 %v4125, %v4120
      %v4161 = vpack.c.b16 %v4131, %v4126
      %v4162 = vpack.c.b16 %v4132, %v4127
      %v4163 = vpack.c.b16 %v4133, %v4128
      %v4164 = vpack.c.b16 %v4134, %v4129
      %v4165 = vpack.c.b16 %v4135, %v4130
      %v4166 = vpack.c.b16 %v4141, %v4136
      %v4167 = vpack.c.b16 %v4142, %v4137
      %v4168 = vpack.c.b16 %v4143, %v4138
      %v4169 = vpack.c.b16 %v4144, %v4139
      %v4170 = vpack.c.b16 %v4145, %v4140
      %v4171 = vpack.c.b16 %v4151, %v4146
      %v4172 = vpack.c.b16 %v4152, %v4147
      %v4173 = vpack.c.b16 %v4153, %v4148
      %v4174 = vpack.c.b16 %v4154, %v4149
      %v4175 = vpack.c.b16 %v4155, %v4150
      %v4264 = vunpack.c.l.b16 %v4020
      %v4265 = vunpack.c.l.b16 %v4021
      %v4266 = vunpack.c.l.b16 %v4022
      %v4267 = vunpack.c.l.b16 %v4023
      %v4268 = vunpack.c.l.b16 %v4024
      %v4269 = vunpack.c.l.b16 %v4025
      %v4270 = vunpack.c.l.b16 %v4026
      %v4271 = vunpack.c.l.b16 %v4027
      %v4272 = vunpack.c.l.b16 %v4028
      %v4273 = vunpack.c.l.b16 %v4029
      %v4274 = vunpack.c.l.b16 %v4030
      %v4275 = vunpack.c.l.b16 %v4031
      %v4276 = vunpack.c.l.b16 %v4032
      %v4277 = vunpack.c.l.b16 %v4033
      %v4278 = vunpack.c.l.b16 %v4034
      %v4279 = vunpack.c.l.b16 %v4035
      %v4280 = vunpack.c.l.b16 %v4036
      %v4281 = vunpack.c.l.b16 %v4037
      %v4282 = vunpack.c.l.b16 %v4038
      %v4283 = vunpack.c.l.b16 %v4039
      %v4284 = vunpack.c.l.b16 %v4040
      %v4285 = vunpack.c.l.b16 %v4041
      %v4286 = vunpack.c.l.b16 %v4042
      %v4287 = vunpack.c.l.b16 %v4043
      %v4288 = vunpack.c.l.b16 %v4044
      %v4289 = vunpack.c.l.b16 %v4045
      %v4290 = vunpack.c.l.b16 %v4046
      %v4291 = vunpack.c.l.b16 %v4047
      %v4292 = vunpack.c.l.b16 %v4048
      %v4293 = vunpack.c.l.b16 %v4049
      %v4294 = vunpack.c.l.b16 %v4050
      %v4295 = vunpack.c.l.b16 %v4051
      %v4296 = vunpack.c.l.b16 %v4052
      %v4297 = vunpack.c.l.b16 %v4053
      %v4298 = vunpack.c.l.b16 %v4054
      %v4299 = vunpack.c.l.b16 %v4055
      %v4300 = vunpack.c.l.b16 %v4056
      %v4301 = vunpack.c.l.b16 %v4057
      %v4302 = vunpack.c.l.b16 %v4058
      %v4303 = vunpack.c.l.b16 %v4059
      %v4304 = vunpack.c.l.b16 %v4060
      %v4305 = vunpack.c.l.b16 %v4061
      %v4306 = vunpack.c.l.b16 %v4062
      %v4307 = vunpack.c.l.b16 %v4063
      %v4308 = vunpack.c.l.b16 %v4064
      %v4309 = vunpack.c.l.b16 %v4065
      %v4310 = vunpack.c.l.b16 %v4066
      %v4311 = vunpack.c.l.b16 %v4067
      %v4312 = vunpack.c.l.b16 %v4068
      %v4313 = vunpack.c.l.b16 %v4069
      %v4314 = vunpack.c.l.b16 %v4070
      %v4315 = vunpack.c.l.b16 %v4071
      %v4316 = vunpack.c.l.b16 %v4072
      %v4317 = vunpack.c.l.b16 %v4073
      %v4318 = vunpack.c.l.b16 %v4074
      %v4319 = vunpack.c.l.b16 %v4075
      %v4320 = vunpack.c.l.b16 %v4076
      %v4321 = vunpack.c.l.b16 %v4077
      %v4322 = vunpack.c.l.b16 %v4078
      %v4323 = vunpack.c.l.b16 %v4079
      %v4324 = vunpack.c.l.b16 %v4080
      %v4325 = vunpack.c.l.b16 %v4081
      %v4326 = vunpack.c.l.b16 %v4082
      %v4327 = vunpack.c.l.b16 %v4083
      %v4328 = vunpack.c.l.b16 %v4084
      %v4329 = vunpack.c.l.b16 %v4085
      %v4330 = vunpack.c.l.b16 %v4086
      %v4331 = vunpack.c.l.b16 %v4087
      %v4332 = vunpack.c.l.b16 %v4088
      %v4333 = vunpack.c.l.b16 %v4089
      %v4334 = vunpack.c.l.b16 %v4090
      %v4335 = vunpack.c.l.b16 %v4091
      %v4336 = vpack.c.b16 %v4265, %v4264
      %v4337 = vpack.c.b16 %v4267, %v4266
      %v4338 = vpack.c.b16 %v4269, %v4268
      %v4339 = vpack.c.b16 %v4271, %v4270
      %v4340 = vpack.c.b16 %v4273, %v4272
      %v4341 = vpack.c.b16 %v4275, %v4274
      %v4342 = vpack.c.b16 %v4277, %v4276
      %v4343 = vpack.c.b16 %v4279, %v4278
      %v4344 = vpack.c.b16 %v4281, %v4280
      %v4345 = vpack.c.b16 %v4283, %v4282
      %v4346 = vpack.c.b16 %v4285, %v4284
      %v4347 = vpack.c.b16 %v4287, %v4286
      %v4348 = vpack.c.b16 %v4289, %v4288
      %v4349 = vpack.c.b16 %v4291, %v4290
      %v4350 = vpack.c.b16 %v4293, %v4292
      %v4351 = vpack.c.b16 %v4295, %v4294
      %v4352 = vpack.c.b16 %v4297, %v4296
      %v4353 = vpack.c.b16 %v4299, %v4298
      %v4354 = vpack.c.b16 %v4301, %v4300
      %v4355 = vpack.c.b16 %v4303, %v4302
      %v4356 = vpack.c.b16 %v4305, %v4304
      %v4357 = vpack.c.b16 %v4307, %v4306
      %v4358 = vpack.c.b16 %v4309, %v4308
      %v4359 = vpack.c.b16 %v4311, %v4310
      %v4360 = vpack.c.b16 %v4313, %v4312
      %v4361 = vpack.c.b16 %v4315, %v4314
      %v4362 = vpack.c.b16 %v4317, %v4316
      %v4363 = vpack.c.b16 %v4319, %v4318
      %v4364 = vpack.c.b16 %v4321, %v4320
      %v4365 = vpack.c.b16 %v4323, %v4322
      %v4366 = vpack.c.b16 %v4325, %v4324
      %v4367 = vpack.c.b16 %v4327, %v4326
      %v4368 = vpack.c.b16 %v4329, %v4328
      %v4369 = vpack.c.b16 %v4331, %v4330
      %v4370 = vpack.c.b16 %v4333, %v4332
      %v4371 = vpack.c.b16 %v4335, %v4334
      %v4409 = vsel %vm2282, %v4160, 0
      %v4412 = vsel %vm2282, %v4165, 0
      %v4415 = vsel %vm2282, %v4170, 0
      %v4418 = vsel %vm2282, %v4175, 0
      %4420 = vmatprep.subr.bf16.mxu0 0
      %4421 = vmatpush1.bf16.msra.mxu0 %v4343
      %4422 = vmatprep.subr.bf16.mxu0 0
      %4423 = vmatpush1.bf16.msra.mxu0 %v4342
      %4424 = vmatprep.subr.bf16.mxu0 0
      %4425 = vmatpush1.bf16.msra.mxu0 %v4341
      %4426 = vmatprep.subr.bf16.mxu0 0
      %4427 = vmatpush1.bf16.msra.mxu0 %v4340
      %4428 = vmatprep.subr.bf16.mxu0 0
      %4429 = vmatpush1.bf16.msra.mxu0 %v4339
      %4430 = vmatprep.subr.bf16.mxu0 0
      %4431 = vmatpush1.bf16.msra.mxu0 %v4338
      %4432 = vmatprep.subr.bf16.mxu0 0
      %4433 = vmatpush1.bf16.msra.mxu0 %v4337
      %4434 = vmatprep.subr.bf16.mxu0 0
      %4435 = vmatpush1.bf16.msra.mxu0 %v4336
      %4436 = vmatprep.subr.bf16.mxu0 0
      %4437 = vmatpush2.bf16.msra.mxu0 %v4351
      %4438 = vmatprep.subr.bf16.mxu0 0
      %4439 = vmatpush2.bf16.msra.mxu0 %v4350
      %4440 = vmatprep.subr.bf16.mxu0 0
      %4441 = vmatpush2.bf16.msra.mxu0 %v4349
      %4442 = vmatprep.subr.bf16.mxu0 0
      %4443 = vmatpush2.bf16.msra.mxu0 %v4348
      %4444 = vmatprep.subr.bf16.mxu0 0
      %4445 = vmatpush2.bf16.msra.mxu0 %v4347
      %4446 = vmatprep.subr.bf16.mxu0 0
      %4447 = vmatpush2.bf16.msra.mxu0 %v4346
      %4448 = vmatprep.subr.bf16.mxu0 0
      %4449 = vmatpush2.bf16.msra.mxu0 %v4345
      %4450 = vmatprep.subr.bf16.mxu0 0
      %4451 = vmatpush2.bf16.msra.mxu0 %v4344
      %4452 = vmatprep.mubr.bf16.mxu0 %v4157
      %4453 = vmatmul.mubr.bf16.gmra.mxu0 %v4156
      %v4454 = vpop.f32.mrf.mxu0
      %v4455 = vadd.f32 0.0, %v4454
      %v4456 = vpop.f32.mrf.mxu0
      %v4457 = vpop.f32.mrf.mxu0
      %v4458 = vadd.f32 0.0, %v4457
      %v4459 = vpop.f32.mrf.mxu0
      %4460 = vmatprep.mubr.bf16.mxu0 %v4162
      %4461 = vmatmul.mubr.bf16.gmra.mxu0 %v4161
      %v4462 = vpop.f32.mrf.mxu0
      %v4463 = vadd.f32 0.0, %v4462
      %v4464 = vpop.f32.mrf.mxu0
      %v4465 = vpop.f32.mrf.mxu0
      %v4466 = vadd.f32 0.0, %v4465
      %v4467 = vpop.f32.mrf.mxu0
      %4468 = vmatprep.mubr.bf16.mxu0 %v4167
      %4469 = vmatmul.mubr.bf16.gmra.mxu0 %v4166
      %v4470 = vpop.f32.mrf.mxu0
      %v4471 = vadd.f32 0.0, %v4470
      %v4472 = vpop.f32.mrf.mxu0
      %v4473 = vpop.f32.mrf.mxu0
      %v4474 = vadd.f32 0.0, %v4473
      %v4475 = vpop.f32.mrf.mxu0
      %4476 = vmatprep.mubr.bf16.mxu0 %v4172
      %4477 = vmatmul.mubr.bf16.gmra.mxu0 %v4171
      %v4478 = vpop.f32.mrf.mxu0
      %v4479 = vadd.f32 0.0, %v4478
      %v4480 = vpop.f32.mrf.mxu0
      %v4481 = vpop.f32.mrf.mxu0
      %v4482 = vadd.f32 0.0, %v4481
      %v4483 = vpop.f32.mrf.mxu0
      %4484 = vdwg.mxu0
      %4485 = vmatprep.subr.bf16.mxu0 0
      %4486 = vmatpush1.bf16.msra.mxu0 %v4359
      %4487 = vmatprep.subr.bf16.mxu0 0
      %4488 = vmatpush1.bf16.msra.mxu0 %v4358
      %4489 = vmatprep.subr.bf16.mxu0 0
      %4490 = vmatpush1.bf16.msra.mxu0 %v4357
      %4491 = vmatprep.subr.bf16.mxu0 0
      %4492 = vmatpush1.bf16.msra.mxu0 %v4356
      %4493 = vmatprep.subr.bf16.mxu0 0
      %4494 = vmatpush1.bf16.msra.mxu0 %v4355
      %4495 = vmatprep.subr.bf16.mxu0 0
      %4496 = vmatpush1.bf16.msra.mxu0 %v4354
      %4497 = vmatprep.subr.bf16.mxu0 0
      %4498 = vmatpush1.bf16.msra.mxu0 %v4353
      %4499 = vmatprep.subr.bf16.mxu0 0
      %4500 = vmatpush1.bf16.msra.mxu0 %v4352
      %4501 = vmatprep.subr.bf16.mxu0 0
      %4502 = vmatpush2.bf16.msra.mxu0 %v4367
      %4503 = vmatprep.subr.bf16.mxu0 0
      %4504 = vmatpush2.bf16.msra.mxu0 %v4366
      %4505 = vmatprep.subr.bf16.mxu0 0
      %4506 = vmatpush2.bf16.msra.mxu0 %v4365
      %4507 = vmatprep.subr.bf16.mxu0 0
      %4508 = vmatpush2.bf16.msra.mxu0 %v4364
      %4509 = vmatprep.subr.bf16.mxu0 0
      %4510 = vmatpush2.bf16.msra.mxu0 %v4363
      %4511 = vmatprep.subr.bf16.mxu0 0
      %4512 = vmatpush2.bf16.msra.mxu0 %v4362
      %4513 = vmatprep.subr.bf16.mxu0 0
      %4514 = vmatpush2.bf16.msra.mxu0 %v4361
      %4515 = vmatprep.subr.bf16.mxu0 0
      %4516 = vmatpush2.bf16.msra.mxu0 %v4360
      %4517 = vmatprep.mubr.bf16.mxu0 %v4159
      %4518 = vmatmul.mubr.bf16.gmra.mxu0 %v4158
      %v4519 = vpop.f32.mrf.mxu0
      %v4520 = vadd.f32 %v4455, %v4519
      %v4521 = vpop.f32.mrf.mxu0
      %v4522 = vpop.f32.mrf.mxu0
      %v4523 = vadd.f32 %v4458, %v4522
      %v4524 = vpop.f32.mrf.mxu0
      %4525 = vmatprep.mubr.bf16.mxu0 %v4164
      %4526 = vmatmul.mubr.bf16.gmra.mxu0 %v4163
      %v4527 = vpop.f32.mrf.mxu0
      %v4528 = vadd.f32 %v4463, %v4527
      %v4529 = vpop.f32.mrf.mxu0
      %v4530 = vpop.f32.mrf.mxu0
      %v4531 = vadd.f32 %v4466, %v4530
      %v4532 = vpop.f32.mrf.mxu0
      %4533 = vmatprep.mubr.bf16.mxu0 %v4169
      %4534 = vmatmul.mubr.bf16.gmra.mxu0 %v4168
      %v4535 = vpop.f32.mrf.mxu0
      %v4536 = vadd.f32 %v4471, %v4535
      %v4537 = vpop.f32.mrf.mxu0
      %v4538 = vpop.f32.mrf.mxu0
      %v4539 = vadd.f32 %v4474, %v4538
      %v4540 = vpop.f32.mrf.mxu0
      %4541 = vmatprep.mubr.bf16.mxu0 %v4174
      %4542 = vmatmul.mubr.bf16.gmra.mxu0 %v4173
      %v4543 = vpop.f32.mrf.mxu0
      %v4544 = vadd.f32 %v4479, %v4543
      %v4545 = vpop.f32.mrf.mxu0
      %v4546 = vpop.f32.mrf.mxu0
      %v4547 = vadd.f32 %v4482, %v4546
      %v4548 = vpop.f32.mrf.mxu0
      %4549 = vdwg.mxu0
      %4550 = vmatprep.subr.bf16.mxu0 0
      %4551 = vmatpush1.bf16.msra.mxu0 0
      %4552 = vmatprep.subr.bf16.mxu0 0
      %4553 = vmatpush1.bf16.msra.mxu0 0
      %4554 = vmatprep.subr.bf16.mxu0 0
      %4555 = vmatpush1.bf16.msra.mxu0 0
      %4556 = vmatprep.subr.bf16.mxu0 0
      %4557 = vmatpush1.bf16.msra.mxu0 0
      %4558 = vmatprep.subr.bf16.mxu0 0
      %4559 = vmatpush1.bf16.msra.mxu0 %v4371
      %4560 = vmatprep.subr.bf16.mxu0 0
      %4561 = vmatpush1.bf16.msra.mxu0 %v4370
      %4562 = vmatprep.subr.bf16.mxu0 0
      %4563 = vmatpush1.bf16.msra.mxu0 %v4369
      %4564 = vmatprep.subr.bf16.mxu0 0
      %4565 = vmatpush1.bf16.msra.mxu0 %v4368
      %4566 = vmatprep.subr.bf16.mxu0 0
      %4567 = vmatpush2.bf16.msra.mxu0 0
      %4568 = vmatprep.subr.bf16.mxu0 0
      %4569 = vmatpush2.bf16.msra.mxu0 0
      %4570 = vmatprep.subr.bf16.mxu0 0
      %4571 = vmatpush2.bf16.msra.mxu0 0
      %4572 = vmatprep.subr.bf16.mxu0 0
      %4573 = vmatpush2.bf16.msra.mxu0 0
      %4574 = vmatprep.subr.bf16.mxu0 0
      %4575 = vmatpush2.bf16.msra.mxu0 0
      %4576 = vmatprep.subr.bf16.mxu0 0
      %4577 = vmatpush2.bf16.msra.mxu0 0
      %4578 = vmatprep.subr.bf16.mxu0 0
      %4579 = vmatpush2.bf16.msra.mxu0 0
      %4580 = vmatprep.subr.bf16.mxu0 0
      %4581 = vmatpush2.bf16.msra.mxu0 0
      %4582 = vmatprep.mubr.bf16.mxu0 0
      %4583 = vmatmul.mubr.bf16.gmra.mxu0 %v4409
      %v4584 = vpop.f32.mrf.mxu0
      %v4585 = vadd.f32 %v4520, %v4584
      %v4586 = vpop.f32.mrf.mxu0
      %v4587 = vpop.f32.mrf.mxu0
      %v4588 = vadd.f32 %v4523, %v4587
      %v4589 = vpop.f32.mrf.mxu0
      %4590 = vmatprep.mubr.bf16.mxu0 0
      %4591 = vmatmul.mubr.bf16.gmra.mxu0 %v4412
      %v4592 = vpop.f32.mrf.mxu0
      %v4593 = vadd.f32 %v4528, %v4592
      %v4594 = vpop.f32.mrf.mxu0
      %v4595 = vpop.f32.mrf.mxu0
      %v4596 = vadd.f32 %v4531, %v4595
      %v4597 = vpop.f32.mrf.mxu0
      %4598 = vmatprep.mubr.bf16.mxu0 0
      %4599 = vmatmul.mubr.bf16.gmra.mxu0 %v4415
      %v4600 = vpop.f32.mrf.mxu0
      %v4601 = vadd.f32 %v4536, %v4600
      %v4602 = vpop.f32.mrf.mxu0
      %v4603 = vpop.f32.mrf.mxu0
      %v4604 = vadd.f32 %v4539, %v4603
      %v4605 = vpop.f32.mrf.mxu0
      %4606 = vmatprep.mubr.bf16.mxu0 0
      %4607 = vmatmul.mubr.bf16.gmra.mxu0 %v4418
      %v4608 = vpop.f32.mrf.mxu0
      %v4609 = vadd.f32 %v4544, %v4608
      %v4610 = vpop.f32.mrf.mxu0
      %v4611 = vpop.f32.mrf.mxu0
      %v4612 = vadd.f32 %v4547, %v4611
      %v4613 = vpop.f32.mrf.mxu0
      %4614 = vdwg.mxu0
      %v4615 = vpack.c.bf16 %v4588, %v4585
      %v4616 = vpack.c.bf16 %v4596, %v4593
      %v4617 = vpack.c.bf16 %v4604, %v4601
      %v4618 = vpack.c.bf16 %v4612, %v4609
      %v4619 = vld [vmem:[%s13] sm:$0xf]
      %v4620 = vld [vmem:[%s13 + $0x4] sm:$0xf]
      %v4621 = vld [vmem:[%s12] sm:$0xff]
      %v4622 = vld [vmem:[%s12 + $0x8] sm:$0xff]
      %v4623 = vld [vmem:[%s12 + $0x10] sm:$0xff]
      %v4624 = vld [vmem:[%s12 + $0x18] sm:$0xff]
      %v4625 = vld [vmem:[%s12 + $0x20] sm:$0xff]
      %v4626 = vld [vmem:[%s12 + $0x28] sm:$0xff]
      %v4627 = vld [vmem:[%s12 + $0x30] sm:$0xff]
      %v4628 = vld [vmem:[%s12 + $0x38] sm:$0xff]
      %4630 = vset.pattern.permute.xlu0 0
      %4631 = vperm.xlu0 %4630, %v4621
      %v4632 = vpop.permute.xlu0 %4631
      %4635 = vset.pattern.permute.xlu0 0
      %4636 = vperm.xlu0 %4635, %v4622
      %v4637 = vpop.permute.xlu0 %4636
      %4640 = vset.pattern.permute.xlu0 0
      %4641 = vperm.xlu0 %4640, %v4623
      %v4642 = vpop.permute.xlu0 %4641
      %4645 = vset.pattern.permute.xlu0 0
      %4646 = vperm.xlu0 %4645, %v4624
      %v4647 = vpop.permute.xlu0 %4646
      %4650 = vset.pattern.permute.xlu0 0
      %4651 = vperm.xlu0 %4650, %v4625
      %v4652 = vpop.permute.xlu0 %4651
      %4655 = vset.pattern.permute.xlu0 0
      %4656 = vperm.xlu0 %4655, %v4626
      %v4657 = vpop.permute.xlu0 %4656
      %4660 = vset.pattern.permute.xlu0 0
      %4661 = vperm.xlu0 %4660, %v4627
      %v4662 = vpop.permute.xlu0 %4661
      %4665 = vset.pattern.permute.xlu0 0
      %4666 = vperm.xlu0 %4665, %v4628
      %v4667 = vpop.permute.xlu0 %4666
      %v4671 = vunpack.c.l.b16 %v4619
      %v4672 = vunpack.c.l.b16 %v4620
      %v4673 = vpack.c.b16 %v4672, %v4671
      %vm4675 = vcmask 130048
      %v4677 = vsel %vm4675, %v4615, 0
      %v4680 = vsel %vm4675, %v4616, 0
      %v4683 = vsel %vm4675, %v4617, 0
      %v4686 = vsel %vm4675, %v4618, 0
      %4688 = vmatprep.subr.bf16.mxu0 0
      %4689 = vmatpush1.bf16.msra.mxu0 0
      %4690 = vmatprep.subr.bf16.mxu0 0
      %4691 = vmatpush1.bf16.msra.mxu0 0
      %4692 = vmatprep.subr.bf16.mxu0 0
      %4693 = vmatpush1.bf16.msra.mxu0 0
      %4694 = vmatprep.subr.bf16.mxu0 0
      %4695 = vmatpush1.bf16.msra.mxu0 0
      %4696 = vmatprep.subr.bf16.mxu0 0
      %4697 = vmatpush1.bf16.msra.mxu0 0
      %4698 = vmatprep.subr.bf16.mxu0 0
      %4699 = vmatpush1.bf16.msra.mxu0 0
      %4700 = vmatprep.subr.bf16.mxu0 0
      %4701 = vmatpush1.bf16.msra.mxu0 0
      %4702 = vmatprep.subr.bf16.mxu0 0
      %4703 = vmatpush1.bf16.msra.mxu0 %v4673
      %4704 = vmatprep.subr.bf16.mxu0 0
      %4705 = vmatpush2.bf16.msra.mxu0 0
      %4706 = vmatprep.subr.bf16.mxu0 0
      %4707 = vmatpush2.bf16.msra.mxu0 0
      %4708 = vmatprep.subr.bf16.mxu0 0
      %4709 = vmatpush2.bf16.msra.mxu0 0
      %4710 = vmatprep.subr.bf16.mxu0 0
      %4711 = vmatpush2.bf16.msra.mxu0 0
      %4712 = vmatprep.subr.bf16.mxu0 0
      %4713 = vmatpush2.bf16.msra.mxu0 0
      %4714 = vmatprep.subr.bf16.mxu0 0
      %4715 = vmatpush2.bf16.msra.mxu0 0
      %4716 = vmatprep.subr.bf16.mxu0 0
      %4717 = vmatpush2.bf16.msra.mxu0 0
      %4718 = vmatprep.subr.bf16.mxu0 0
      %4719 = vmatpush2.bf16.msra.mxu0 0
      %4720 = vmatprep.mubr.bf16.mxu0 0
      %4721 = vmatmul.mubr.bf16.gmra.mxu0 %v4677
      %v4722 = vpop.f32.mrf.mxu0
      %v4723 = vadd.f32 %v4632, %v4722
      %v4724 = vpop.f32.mrf.mxu0
      %v4725 = vpop.f32.mrf.mxu0
      %v4726 = vadd.f32 %v4637, %v4725
      %v4727 = vpop.f32.mrf.mxu0
      %4728 = vmatprep.mubr.bf16.mxu0 0
      %4729 = vmatmul.mubr.bf16.gmra.mxu0 %v4680
      %v4730 = vpop.f32.mrf.mxu0
      %v4731 = vadd.f32 %v4642, %v4730
      %v4732 = vpop.f32.mrf.mxu0
      %v4733 = vpop.f32.mrf.mxu0
      %v4734 = vadd.f32 %v4647, %v4733
      %v4735 = vpop.f32.mrf.mxu0
      %4736 = vmatprep.mubr.bf16.mxu0 0
      %4737 = vmatmul.mubr.bf16.gmra.mxu0 %v4683
      %v4738 = vpop.f32.mrf.mxu0
      %v4739 = vadd.f32 %v4652, %v4738
      %v4740 = vpop.f32.mrf.mxu0
      %v4741 = vpop.f32.mrf.mxu0
      %v4742 = vadd.f32 %v4657, %v4741
      %v4743 = vpop.f32.mrf.mxu0
      %4744 = vmatprep.mubr.bf16.mxu0 0
      %4745 = vmatmul.mubr.bf16.gmra.mxu0 %v4686
      %v4746 = vpop.f32.mrf.mxu0
      %v4747 = vadd.f32 %v4662, %v4746
      %v4748 = vpop.f32.mrf.mxu0
      %v4749 = vpop.f32.mrf.mxu0
      %v4750 = vadd.f32 %v4667, %v4749
      %v4751 = vpop.f32.mrf.mxu0
      %4752 = vdwg.mxu0
      %v4753 = vmul.f32 %v4723, 0.5
      %v4754 = vmul.f32 %v4726, 0.5
      %v4755 = vmul.f32 %v4731, 0.5
      %v4756 = vmul.f32 %v4734, 0.5
      %v4757 = vmul.f32 %v4739, 0.5
      %v4758 = vmul.f32 %v4742, 0.5
      %v4759 = vmul.f32 %v4747, 0.5
      %v4760 = vmul.f32 %v4750, 0.5
      %v4761 = vmul.f32 %v4723, 0.70710677
      %v4762 = vmul.f32 %v4726, 0.70710677
      %v4763 = vmul.f32 %v4731, 0.70710677
      %v4764 = vmul.f32 %v4734, 0.70710677
      %v4765 = vmul.f32 %v4739, 0.70710677
      %v4766 = vmul.f32 %v4742, 0.70710677
      %v4767 = vmul.f32 %v4747, 0.70710677
      %v4768 = vmul.f32 %v4750, 0.70710677
      %v4769 = verf.f32.pop %v4761
      %v4770 = verf.f32.pop %v4762
      %v4771 = verf.f32.pop %v4763
      %v4772 = verf.f32.pop %v4764
      %v4773 = verf.f32.pop %v4765
      %v4774 = verf.f32.pop %v4766
      %v4775 = verf.f32.pop %v4767
      %v4776 = verf.f32.pop %v4768
      %v4777 = vadd.f32 %v4769, 1.0
      %v4778 = vadd.f32 %v4770, 1.0
      %v4779 = vadd.f32 %v4771, 1.0
      %v4780 = vadd.f32 %v4772, 1.0
      %v4781 = vadd.f32 %v4773, 1.0
      %v4782 = vadd.f32 %v4774, 1.0
      %v4783 = vadd.f32 %v4775, 1.0
      %v4784 = vadd.f32 %v4776, 1.0
      %v4785 = vmul.f32 %v4753, %v4777
      %v4786 = vmul.f32 %v4754, %v4778
      %v4787 = vmul.f32 %v4755, %v4779
      %v4788 = vmul.f32 %v4756, %v4780
      %v4789 = vmul.f32 %v4757, %v4781
      %v4790 = vmul.f32 %v4758, %v4782
      %v4791 = vmul.f32 %v4759, %v4783
      %v4792 = vmul.f32 %v4760, %v4784
      %v4793 = vpack.c.bf16 %v4786, %v4785
      %v4794 = vpack.c.bf16 %v4788, %v4787
      %v4795 = vpack.c.bf16 %v4790, %v4789
      %v4796 = vpack.c.bf16 %v4792, %v4791
      %v4797 = vld [vmem:[%s15] sm:$0xff]
      %v4798 = vld [vmem:[%s15 + $0x8] sm:$0xff]
      %v4799 = vld [vmem:[%s15 + $0x10] sm:$0xff]
      %v4800 = vld [vmem:[%s15 + $0x18] sm:$0xff]
      %v4801 = vld [vmem:[%s14] sm:$0xf]
      %v4802 = vld [vmem:[%s14 + $0x4] sm:$0xf]
      %v4803 = vld [vmem:[%s14 + $0x8] sm:$0xf]
      %v4804 = vld [vmem:[%s14 + $0xc] sm:$0xf]
      %v4809 = vunpack.c.l.b16 %v4801
      %v4810 = vunpack.c.l.b16 %v4802
      %v4811 = vunpack.c.l.b16 %v4803
      %v4812 = vunpack.c.l.b16 %v4804
      %v4813 = vpack.c.b16 %v4810, %v4809
      %v4814 = vpack.c.b16 %v4812, %v4811
      %v4816 = vsel %vm2282, %v4813, 0
      %v4819 = vsel %vm2282, %v4814, 0
      %4821 = vmatprep.subr.bf16.mxu0 0
      %4822 = vmatpush1.bf16.msra.mxu0 0
      %4823 = vmatprep.subr.bf16.mxu0 0
      %4824 = vmatpush1.bf16.msra.mxu0 0
      %4825 = vmatprep.subr.bf16.mxu0 0
      %4826 = vmatpush1.bf16.msra.mxu0 0
      %4827 = vmatprep.subr.bf16.mxu0 0
      %4828 = vmatpush1.bf16.msra.mxu0 0
      %4829 = vmatprep.subr.bf16.mxu0 0
      %4830 = vmatpush1.bf16.msra.mxu0 %v4796
      %4831 = vmatprep.subr.bf16.mxu0 0
      %4832 = vmatpush1.bf16.msra.mxu0 %v4795
      %4833 = vmatprep.subr.bf16.mxu0 0
      %4834 = vmatpush1.bf16.msra.mxu0 %v4794
      %4835 = vmatprep.subr.bf16.mxu0 0
      %4836 = vmatpush1.bf16.msra.mxu0 %v4793
      %4837 = vmatprep.subr.bf16.mxu0 0
      %4838 = vmatpush2.bf16.msra.mxu0 0
      %4839 = vmatprep.subr.bf16.mxu0 0
      %4840 = vmatpush2.bf16.msra.mxu0 0
      %4841 = vmatprep.subr.bf16.mxu0 0
      %4842 = vmatpush2.bf16.msra.mxu0 0
      %4843 = vmatprep.subr.bf16.mxu0 0
      %4844 = vmatpush2.bf16.msra.mxu0 0
      %4845 = vmatprep.subr.bf16.mxu0 0
      %4846 = vmatpush2.bf16.msra.mxu0 0
      %4847 = vmatprep.subr.bf16.mxu0 0
      %4848 = vmatpush2.bf16.msra.mxu0 0
      %4849 = vmatprep.subr.bf16.mxu0 0
      %4850 = vmatpush2.bf16.msra.mxu0 0
      %4851 = vmatprep.subr.bf16.mxu0 0
      %4852 = vmatpush2.bf16.msra.mxu0 0
      %4853 = vmatprep.mubr.bf16.mxu0 0
      %4854 = vmatmul.mubr.bf16.gmra.mxu0 %v4816
      %v4855 = vpop.f32.mrf.mxu0
      %v4856 = vadd.f32 0.0, %v4855
      %v4857 = vpop.f32.mrf.mxu0
      %v4858 = vpop.f32.mrf.mxu0
      %v4859 = vadd.f32 0.0, %v4858
      %v4860 = vpop.f32.mrf.mxu0
      %4861 = vmatprep.mubr.bf16.mxu0 0
      %4862 = vmatmul.mubr.bf16.gmra.mxu0 %v4819
      %v4863 = vpop.f32.mrf.mxu0
      %v4864 = vadd.f32 0.0, %v4863
      %v4865 = vpop.f32.mrf.mxu0
      %v4866 = vpop.f32.mrf.mxu0
      %v4867 = vadd.f32 0.0, %v4866
      %v4868 = vpop.f32.mrf.mxu0
      %4869 = vdwg.mxu0
      %v4870 = vadd.f32 %v4797, %v4856
      %v4871 = vadd.f32 %v4798, %v4859
      %v4872 = vadd.f32 %v4799, %v4864
      %v4873 = vadd.f32 %v4800, %v4867
      %s4874 = scalar_lea.vmem %s14, 16
      %v4875 = vld [vmem:[%s4874] sm:$0xf]
      %v4876 = vld [vmem:[%s4874 + $0x4] sm:$0xf]
      %v4877 = vld [vmem:[%s4874 + $0x8] sm:$0xf]
      %v4878 = vld [vmem:[%s4874 + $0xc] sm:$0xf]
      %v4883 = vunpack.c.l.b16 %v4875
      %v4884 = vunpack.c.l.b16 %v4876
      %v4885 = vunpack.c.l.b16 %v4877
      %v4886 = vunpack.c.l.b16 %v4878
      %v4887 = vpack.c.b16 %v4884, %v4883
      %v4888 = vpack.c.b16 %v4886, %v4885
      %4893 = vrot.lane.b32.xlu0 %v4793, 127
      %v4894 = vpop.permute.xlu0 %4893
      %4895 = vrot.lane.b32.xlu0 %v4794, 127
      %v4896 = vpop.permute.xlu0 %4895
      %4897 = vrot.lane.b32.xlu0 %v4795, 127
      %v4898 = vpop.permute.xlu0 %4897
      %4899 = vrot.lane.b32.xlu0 %v4796, 127
      %v4900 = vpop.permute.xlu0 %4899
      %v4906 = vsel %vm2282, %v4887, 0
      %v4909 = vsel %vm2282, %v4888, 0
      %4911 = vmatprep.subr.bf16.mxu0 0
      %4912 = vmatpush1.bf16.msra.mxu0 0
      %4913 = vmatprep.subr.bf16.mxu0 0
      %4914 = vmatpush1.bf16.msra.mxu0 0
      %4915 = vmatprep.subr.bf16.mxu0 0
      %4916 = vmatpush1.bf16.msra.mxu0 0
      %4917 = vmatprep.subr.bf16.mxu0 0
      %4918 = vmatpush1.bf16.msra.mxu0 0
      %4919 = vmatprep.subr.bf16.mxu0 0
      %4920 = vmatpush1.bf16.msra.mxu0 %v4900
      %4921 = vmatprep.subr.bf16.mxu0 0
      %4922 = vmatpush1.bf16.msra.mxu0 %v4898
      %4923 = vmatprep.subr.bf16.mxu0 0
      %4924 = vmatpush1.bf16.msra.mxu0 %v4896
      %4925 = vmatprep.subr.bf16.mxu0 0
      %4926 = vmatpush1.bf16.msra.mxu0 %v4894
      %4927 = vmatprep.subr.bf16.mxu0 0
      %4928 = vmatpush2.bf16.msra.mxu0 0
      %4929 = vmatprep.subr.bf16.mxu0 0
      %4930 = vmatpush2.bf16.msra.mxu0 0
      %4931 = vmatprep.subr.bf16.mxu0 0
      %4932 = vmatpush2.bf16.msra.mxu0 0
      %4933 = vmatprep.subr.bf16.mxu0 0
      %4934 = vmatpush2.bf16.msra.mxu0 0
      %4935 = vmatprep.subr.bf16.mxu0 0
      %4936 = vmatpush2.bf16.msra.mxu0 0
      %4937 = vmatprep.subr.bf16.mxu0 0
      %4938 = vmatpush2.bf16.msra.mxu0 0
      %4939 = vmatprep.subr.bf16.mxu0 0
      %4940 = vmatpush2.bf16.msra.mxu0 0
      %4941 = vmatprep.subr.bf16.mxu0 0
      %4942 = vmatpush2.bf16.msra.mxu0 0
      %4943 = vmatprep.mubr.bf16.mxu0 0
      %4944 = vmatmul.mubr.bf16.gmra.mxu0 %v4906
      %v4945 = vpop.f32.mrf.mxu0
      %v4946 = vadd.f32 0.0, %v4945
      %v4947 = vpop.f32.mrf.mxu0
      %v4948 = vpop.f32.mrf.mxu0
      %v4949 = vadd.f32 0.0, %v4948
      %v4950 = vpop.f32.mrf.mxu0
      %4951 = vmatprep.mubr.bf16.mxu0 0
      %4952 = vmatmul.mubr.bf16.gmra.mxu0 %v4909
      %v4953 = vpop.f32.mrf.mxu0
      %v4954 = vadd.f32 0.0, %v4953
      %v4955 = vpop.f32.mrf.mxu0
      %v4956 = vpop.f32.mrf.mxu0
      %v4957 = vadd.f32 0.0, %v4956
      %v4958 = vpop.f32.mrf.mxu0
      %4959 = vdwg.mxu0
      %v4960 = vadd.f32 %v4870, %v4946
      %v4961 = vadd.f32 %v4871, %v4949
      %v4962 = vadd.f32 %v4872, %v4954
      %v4963 = vadd.f32 %v4873, %v4957
      %s4964 = scalar_lea.vmem %s14, 32
      %v4965 = vld [vmem:[%s4964] sm:$0xf]
      %v4966 = vld [vmem:[%s4964 + $0x4] sm:$0xf]
      %v4967 = vld [vmem:[%s4964 + $0x8] sm:$0xf]
      %v4968 = vld [vmem:[%s4964 + $0xc] sm:$0xf]
      %v4973 = vunpack.c.l.b16 %v4965
      %v4974 = vunpack.c.l.b16 %v4966
      %v4975 = vunpack.c.l.b16 %v4967
      %v4976 = vunpack.c.l.b16 %v4968
      %v4977 = vpack.c.b16 %v4974, %v4973
      %v4978 = vpack.c.b16 %v4976, %v4975
      %4979 = vrot.lane.b32.xlu0 %v4793, 126
      %v4980 = vpop.permute.xlu0 %4979
      %4981 = vrot.lane.b32.xlu0 %v4794, 126
      %v4982 = vpop.permute.xlu0 %4981
      %4983 = vrot.lane.b32.xlu0 %v4795, 126
      %v4984 = vpop.permute.xlu0 %4983
      %4985 = vrot.lane.b32.xlu0 %v4796, 126
      %v4986 = vpop.permute.xlu0 %4985
      %v4992 = vsel %vm2282, %v4977, 0
      %v4995 = vsel %vm2282, %v4978, 0
      %4997 = vmatprep.subr.bf16.mxu0 0
      %4998 = vmatpush1.bf16.msra.mxu0 0
      %4999 = vmatprep.subr.bf16.mxu0 0
      %5000 = vmatpush1.bf16.msra.mxu0 0
      %5001 = vmatprep.subr.bf16.mxu0 0
      %5002 = vmatpush1.bf16.msra.mxu0 0
      %5003 = vmatprep.subr.bf16.mxu0 0
      %5004 = vmatpush1.bf16.msra.mxu0 0
      %5005 = vmatprep.subr.bf16.mxu0 0
      %5006 = vmatpush1.bf16.msra.mxu0 %v4986
      %5007 = vmatprep.subr.bf16.mxu0 0
      %5008 = vmatpush1.bf16.msra.mxu0 %v4984
      %5009 = vmatprep.subr.bf16.mxu0 0
      %5010 = vmatpush1.bf16.msra.mxu0 %v4982
      %5011 = vmatprep.subr.bf16.mxu0 0
      %5012 = vmatpush1.bf16.msra.mxu0 %v4980
      %5013 = vmatprep.subr.bf16.mxu0 0
      %5014 = vmatpush2.bf16.msra.mxu0 0
      %5015 = vmatprep.subr.bf16.mxu0 0
      %5016 = vmatpush2.bf16.msra.mxu0 0
      %5017 = vmatprep.subr.bf16.mxu0 0
      %5018 = vmatpush2.bf16.msra.mxu0 0
      %5019 = vmatprep.subr.bf16.mxu0 0
      %5020 = vmatpush2.bf16.msra.mxu0 0
      %5021 = vmatprep.subr.bf16.mxu0 0
      %5022 = vmatpush2.bf16.msra.mxu0 0
      %5023 = vmatprep.subr.bf16.mxu0 0
      %5024 = vmatpush2.bf16.msra.mxu0 0
      %5025 = vmatprep.subr.bf16.mxu0 0
      %5026 = vmatpush2.bf16.msra.mxu0 0
      %5027 = vmatprep.subr.bf16.mxu0 0
      %5028 = vmatpush2.bf16.msra.mxu0 0
      %5029 = vmatprep.mubr.bf16.mxu0 0
      %5030 = vmatmul.mubr.bf16.gmra.mxu0 %v4992
      %v5031 = vpop.f32.mrf.mxu0
      %v5032 = vadd.f32 0.0, %v5031
      %v5033 = vpop.f32.mrf.mxu0
      %v5034 = vpop.f32.mrf.mxu0
      %v5035 = vadd.f32 0.0, %v5034
      %v5036 = vpop.f32.mrf.mxu0
      %5037 = vmatprep.mubr.bf16.mxu0 0
      %5038 = vmatmul.mubr.bf16.gmra.mxu0 %v4995
      %v5039 = vpop.f32.mrf.mxu0
      %v5040 = vadd.f32 0.0, %v5039
      %v5041 = vpop.f32.mrf.mxu0
      %v5042 = vpop.f32.mrf.mxu0
      %v5043 = vadd.f32 0.0, %v5042
      %v5044 = vpop.f32.mrf.mxu0
      %5045 = vdwg.mxu0
      %v5046 = vadd.f32 %v4960, %v5032
      %v5047 = vadd.f32 %v4961, %v5035
      %v5048 = vadd.f32 %v4962, %v5040
      %v5049 = vadd.f32 %v4963, %v5043
      %s5050 = scalar_lea.vmem %s14, 48
      %v5051 = vld [vmem:[%s5050] sm:$0xf]
      %v5052 = vld [vmem:[%s5050 + $0x4] sm:$0xf]
      %v5053 = vld [vmem:[%s5050 + $0x8] sm:$0xf]
      %v5054 = vld [vmem:[%s5050 + $0xc] sm:$0xf]
      %v5059 = vunpack.c.l.b16 %v5051
      %v5060 = vunpack.c.l.b16 %v5052
      %v5061 = vunpack.c.l.b16 %v5053
      %v5062 = vunpack.c.l.b16 %v5054
      %v5063 = vpack.c.b16 %v5060, %v5059
      %v5064 = vpack.c.b16 %v5062, %v5061
      %5065 = vrot.lane.b32.xlu0 %v4793, 125
      %v5066 = vpop.permute.xlu0 %5065
      %5067 = vrot.lane.b32.xlu0 %v4794, 125
      %v5068 = vpop.permute.xlu0 %5067
      %5069 = vrot.lane.b32.xlu0 %v4795, 125
      %v5070 = vpop.permute.xlu0 %5069
      %5071 = vrot.lane.b32.xlu0 %v4796, 125
      %v5072 = vpop.permute.xlu0 %5071
      %v5078 = vsel %vm2282, %v5063, 0
      %v5081 = vsel %vm2282, %v5064, 0
      %5083 = vmatprep.subr.bf16.mxu0 0
      %5084 = vmatpush1.bf16.msra.mxu0 0
      %5085 = vmatprep.subr.bf16.mxu0 0
      %5086 = vmatpush1.bf16.msra.mxu0 0
      %5087 = vmatprep.subr.bf16.mxu0 0
      %5088 = vmatpush1.bf16.msra.mxu0 0
      %5089 = vmatprep.subr.bf16.mxu0 0
      %5090 = vmatpush1.bf16.msra.mxu0 0
      %5091 = vmatprep.subr.bf16.mxu0 0
      %5092 = vmatpush1.bf16.msra.mxu0 %v5072
      %5093 = vmatprep.subr.bf16.mxu0 0
      %5094 = vmatpush1.bf16.msra.mxu0 %v5070
      %5095 = vmatprep.subr.bf16.mxu0 0
      %5096 = vmatpush1.bf16.msra.mxu0 %v5068
      %5097 = vmatprep.subr.bf16.mxu0 0
      %5098 = vmatpush1.bf16.msra.mxu0 %v5066
      %5099 = vmatprep.subr.bf16.mxu0 0
      %5100 = vmatpush2.bf16.msra.mxu0 0
      %5101 = vmatprep.subr.bf16.mxu0 0
      %5102 = vmatpush2.bf16.msra.mxu0 0
      %5103 = vmatprep.subr.bf16.mxu0 0
      %5104 = vmatpush2.bf16.msra.mxu0 0
      %5105 = vmatprep.subr.bf16.mxu0 0
      %5106 = vmatpush2.bf16.msra.mxu0 0
      %5107 = vmatprep.subr.bf16.mxu0 0
      %5108 = vmatpush2.bf16.msra.mxu0 0
      %5109 = vmatprep.subr.bf16.mxu0 0
      %5110 = vmatpush2.bf16.msra.mxu0 0
      %5111 = vmatprep.subr.bf16.mxu0 0
      %5112 = vmatpush2.bf16.msra.mxu0 0
      %5113 = vmatprep.subr.bf16.mxu0 0
      %5114 = vmatpush2.bf16.msra.mxu0 0
      %5115 = vmatprep.mubr.bf16.mxu0 0
      %5116 = vmatmul.mubr.bf16.gmra.mxu0 %v5078
      %v5117 = vpop.f32.mrf.mxu0
      %v5118 = vadd.f32 0.0, %v5117
      %v5119 = vpop.f32.mrf.mxu0
      %v5120 = vpop.f32.mrf.mxu0
      %v5121 = vadd.f32 0.0, %v5120
      %v5122 = vpop.f32.mrf.mxu0
      %5123 = vmatprep.mubr.bf16.mxu0 0
      %5124 = vmatmul.mubr.bf16.gmra.mxu0 %v5081
      %v5125 = vpop.f32.mrf.mxu0
      %v5126 = vadd.f32 0.0, %v5125
      %v5127 = vpop.f32.mrf.mxu0
      %v5128 = vpop.f32.mrf.mxu0
      %v5129 = vadd.f32 0.0, %v5128
      %v5130 = vpop.f32.mrf.mxu0
      %5131 = vdwg.mxu0
      %v5132 = vadd.f32 %v5046, %v5118
      %v5133 = vadd.f32 %v5047, %v5121
      %v5134 = vadd.f32 %v5048, %v5126
      %v5135 = vadd.f32 %v5049, %v5129
      %vm5136 = vcmask 7168
      %5137 = vst.msk [vmem:[%s521] sm:$0xff] %vm5136, %v5132
      %5138 = vst.msk [vmem:[%s521 + $0x8] sm:$0xff] %vm5136, %v5133
      %5139 = vst.msk [vmem:[%s521 + $0x10] sm:$0xff] %vm5136, %v5134
      %5140 = vst.msk [vmem:[%s521 + $0x18] sm:$0xff] %vm5136, %v5135
      %p5141 = scmp.lt.s32.totalorder %s27, 1
      %s5142 = scalar_select %p5141, %s27, 1
      %s5143 = smul.addr %s5142, 4
      %s5144 = smul.addr %s5143, 8
      %s5145 = scalar_lea.vmem %s16, %s5144
      // Predicated region
      $region85: #{encoder_forward.1} parent=83 // pred_check
        %p5146 = pneg %p386
      $region86: #{encoder_forward.1} parent=83 // pred_check_branch
        %5148 = sbr.rel (%p5146) target = $region88
      $region87: #{encoder_forward.1} parent=83 // pred_region
        _
      $region88: #{encoder_forward.1} parent=83 // pred_fallthru
        _
    $region84: #{encoder_forward.1} parent=5 // pred_fallthru
      _
    %p5149 = scmp.le.s32.totalorder 2, %s22
    // Predicated region
    $region89: #{encoder_forward.1} parent=5 // pred_check
      %p5150 = pneg %p5149
    $region90: #{encoder_forward.1} parent=5 // pred_check_branch
      %5152 = sbr.rel (%p5150) target = $region92
    $region91: #{encoder_forward.1} parent=5 // pred_region
      %s5153 = ssub.s32 %s22, 2
      // Predicated region
      $region93: #{encoder_forward.1} parent=91 // pred_check
        %p5154 = pneg %p392
      $region94: #{encoder_forward.1} parent=91 // pred_check_branch
        %5156 = sbr.rel (%p5154) target = $region96
      $region95: #{encoder_forward.1} parent=91 // pred_region
        %p5157 = scmp.lt.s32.totalorder %s28, 1
        %s5158 = scalar_select %p5157, %s28, 1
        %s5159 = smul.addr %s5158, 4
        %s5160 = smul.addr %s5159, 8
        %s5161 = scalar_lea.vmem %s16, %s5160
      $region96: #{encoder_forward.1} parent=91 // pred_fallthru
        _
    $region92: #{encoder_forward.1} parent=5 // pred_fallthru
      _
  $region6: #{encoder_forward.1} parent=0 // loop_footer
    %s26 = sadd.s32 1, %s22
  $region7: #{encoder_forward.1} parent=0 // loop_footer_branch
    %21 = sbr.rel target = $region3
  $region8: #{encoder_forward.1} parent=0 // loop_exit
    _

</llo_original>
